<compile_context>
chip_gen: v7x
topology: tpu7x:2x2x1
jax: 0.10.0
libtpu: 0.0.40
codegen_flags: <defaults>
</compile_context>

<pallas_src>
import functools

import jax
import jax.numpy as jnp
from jax.experimental import pallas as pl
from jax.experimental.pallas import tpu as pltpu

# ---------------- configuration ("args") ----------------
HIDDEN_DIM = 32        # args.hidden_dim
NUM_CLASS = 8          # args.num_class
NHEADS = 4             # args.nheads
DIM_FF = 64            # args.dim_feedforward
DEC_LAYERS = 2         # args.dec_layers
IN_CHANNELS = 2048     # fixed by nn.Linear(2048, hidden_dim)
LN_EPS = 1e-5


# ---------------- in-kernel helper ----------------
def _layer_norm(x, gamma, beta, eps):
    mu = jnp.mean(x, axis=-1, keepdims=True)
    var = jnp.mean(jnp.square(x - mu), axis=-1, keepdims=True)
    return (x - mu) * jax.lax.rsqrt(var + eps) * gamma + beta


# ---------------- the single fused kernel ----------------
def _fused_forward_kernel(x_ref, ewt_ref, eb_ref, qe_ref,
                          wq_ref, wkvT_ref, bkvT_ref, wo_ref, w1_ref, w2_ref,
                          lvecs_ref, head_ref, hbias_ref, o_ref,
                          *, n_layers, nheads, scale, eps):
    L, D = qe_ref.shape
    F = w1_ref.shape[2]
    dh = D // nheads

    # ---- embed_standart: memory kept in (D, S) layout (lane axis = spatial) ----
    mem = jnp.dot(ewt_ref[...], x_ref[...],
                  preferred_element_type=jnp.float32) + eb_ref[...]        # (D, S)

    qe = qe_ref[...].astype(jnp.float32)                                   # (L, D)
    tgt = qe

    # TODO(synk): TrimodalTransformerDecoderLayer source not provided; modeled as a
    # standard post-norm cross-attention + FFN layer (rm_self_attn_dec=True),
    # dropout = identity at inference, query_pos added to Q only.
    for l in range(n_layers):
        vec = lvecs_ref[l]                                                 # (8, F)
        bq, bo = vec[0:1, :D], vec[1:2, :D]
        b1, b2 = vec[2:3, :F], vec[3:4, :D]
        ln1g, ln1b = vec[4:5, :D], vec[5:6, :D]
        ln2g, ln2b = vec[6:7, :D], vec[7:8, :D]

        # -- multi-head cross attention (dense matmuls, no per-head einsums) --
        xq = tgt + qe                                                      # + query_pos
        q = jnp.dot(xq, wq_ref[l], preferred_element_type=jnp.float32) + bq   # (L, D)
        kvT = jnp.dot(wkvT_ref[l], mem,
                      preferred_element_type=jnp.float32) + bkvT_ref[l]    # (2D, S)
        kT = kvT[:D, :]                                                    # (D, S)
        v = kvT[D:, :].T                                                   # (S, D)

        outs = []
        for h in range(nheads):
            q_h = q[:, h * dh:(h + 1) * dh]                                # (L, dh)
            kT_h = kT[h * dh:(h + 1) * dh, :]                              # (dh, S)
            v_h = v[:, h * dh:(h + 1) * dh]                                # (S, dh)
            s = jnp.dot(q_h, kT_h, preferred_element_type=jnp.float32) * scale
            s = s - jnp.max(s, axis=-1, keepdims=True)
            p = jnp.exp(s)
            p = p / jnp.sum(p, axis=-1, keepdims=True)                     # exact softmax
            outs.append(jnp.dot(p, v_h, preferred_element_type=jnp.float32))
        o = jnp.concatenate(outs, axis=-1)                                 # (L, D)
        attn = jnp.dot(o, wo_ref[l], preferred_element_type=jnp.float32) + bo

        # -- residual + LN1, FFN, residual + LN2 --
        x1 = _layer_norm(tgt + attn, ln1g, ln1b, eps)
        f = jnp.dot(x1, w1_ref[l], preferred_element_type=jnp.float32) + b1
        f = jnp.maximum(f, 0.0)
        f = jnp.dot(f, w2_ref[l], preferred_element_type=jnp.float32) + b2
        tgt = _layer_norm(x1 + f, ln2g, ln2b, eps)

    # ---- final decoder LayerNorm + GroupFC (dup_pool[:, :, 0]) + scalar bias ----
    head = head_ref[...]                                                   # (L+2, D)
    dup_w = head[:L, :]
    ng, nb = head[L:L + 1, :], head[L + 1:L + 2, :]
    hn = _layer_norm(tgt, ng, nb, eps)
    logits = jnp.sum(hn * dup_w, axis=-1, keepdims=True) + hbias_ref[...]  # (L, 1)
    o_ref[...] = logits.astype(o_ref.dtype)


# ---------------- forward pass (one pallas_call) ----------------
def trimodal_forward(packed, x):
    bs, C, H, W = x.shape
    HW = H * W
    L, D, F, NL = NUM_CLASS, HIDDEN_DIM, DIM_FF, DEC_LAYERS
    x3 = x.reshape(bs, C, HW)          # contiguous reshape; x is never transposed

    # TODO(synk): GATN (graphEncoder) definition not provided and the adjMat fusion
    # inside the undisclosed decoder layer is unknown; adjMat is not consumed by the
    # approximated decoder, so its computation is omitted.

    kern = functools.partial(_fused_forward_kernel, n_layers=NL, nheads=NHEADS,
                             scale=1.0 / ((D // NHEADS) ** 0.5), eps=LN_EPS)
    c2 = lambda b: (0, 0)
    c3 = lambda b: (0, 0, 0)
    out = pl.pallas_call(
        kern,
        grid=(bs,),
        in_specs=[
            pl.BlockSpec((None, C, HW), lambda b: (b, 0, 0)),   # x (per batch)
            pl.BlockSpec((D, C), c2),                           # embed W^T
            pl.BlockSpec((D, 1), c2),                           # embed bias
            pl.BlockSpec((L, D), c2),                           # query_embed
            pl.BlockSpec((NL, D, D), c3),                       # Wq (stacked)
            pl.BlockSpec((NL, 2 * D, D), c3),                   # [Wk;Wv]^T
            pl.BlockSpec((NL, 2 * D, 1), c3),                   # [bk;bv]
            pl.BlockSpec((NL, D, D), c3),                       # Wo
            pl.BlockSpec((NL, D, F), c3),                       # W1
            pl.BlockSpec((NL, F, D), c3),                       # W2
            pl.BlockSpec((NL, 8, F), c3),                       # bias/LN row pack
            pl.BlockSpec((L + 2, D), c2),                       # dup_pool | norm_g | norm_b
            pl.BlockSpec((1, 1), c2),                           # dup_pool_bias
        ],
        out_specs=pl.BlockSpec((None, L, 1), lambda b: (b, 0, 0)),
        out_shape=jax.ShapeDtypeStruct((bs, L, 1), jnp.float32),
        compiler_params=pltpu.CompilerParams(
            dimension_semantics=("parallel",)),
    )(x3, packed["e_wt"], packed["e_b"], packed["qe"],
      packed["wq"], packed["wkvT"], packed["bkvT"], packed["wo"],
      packed["w1"], packed["w2"], packed["lvecs"], packed["head"],
      packed["hbias"])
    return out.reshape(bs, L)


# ---------------- parameter init (deterministic, synthetic) ----------------
def init_params(key):
    keys = jax.random.split(key, 5 + DEC_LAYERS)

    def nrm(k, shape, scale=0.02):
        return scale * jax.random.normal(k, shape, jnp.float32)

    p = {
        "embed_w": nrm(keys[0], (IN_CHANNELS, HIDDEN_DIM)),
        "embed_b": nrm(keys[1], (HIDDEN_DIM,)),
        "query_embed": nrm(keys[2], (NUM_CLASS, HIDDEN_DIM), scale=1.0),
        "dup_pool": nrm(keys[3], (NUM_CLASS, HIDDEN_DIM, 1)),
        "dup_pool_bias": nrm(keys[4], (1,)),
        "norm_g": jnp.ones((HIDDEN_DIM,), jnp.float32),
        "norm_b": jnp.zeros((HIDDEN_DIM,), jnp.float32),
    }
    layers = []
    for l in range(DEC_LAYERS):
        kk = jax.random.split(keys[5 + l], 12)
        layers.append({
            "wq": nrm(kk[0], (HIDDEN_DIM, HIDDEN_DIM)), "bq": nrm(kk[1], (HIDDEN_DIM,)),
            "wk": nrm(kk[2], (HIDDEN_DIM, HIDDEN_DIM)), "bk": nrm(kk[3], (HIDDEN_DIM,)),
            "wv": nrm(kk[4], (HIDDEN_DIM, HIDDEN_DIM)), "bv": nrm(kk[5], (HIDDEN_DIM,)),
            "wo": nrm(kk[6], (HIDDEN_DIM, HIDDEN_DIM)), "bo": nrm(kk[7], (HIDDEN_DIM,)),
            "w1": nrm(kk[8], (HIDDEN_DIM, DIM_FF)), "b1": nrm(kk[9], (DIM_FF,)),
            "w2": nrm(kk[10], (DIM_FF, HIDDEN_DIM)), "b2": nrm(kk[11], (HIDDEN_DIM,)),
            "ln1_g": jnp.ones((HIDDEN_DIM,), jnp.float32),
            "ln1_b": jnp.zeros((HIDDEN_DIM,), jnp.float32),
            "ln2_g": jnp.ones((HIDDEN_DIM,), jnp.float32),
            "ln2_b": jnp.zeros((HIDDEN_DIM,), jnp.float32),
        })
    p["layers"] = layers
    return p


# ---------------- one-time parameter packing (outside the hot path) ----------------
def pack_params(p):
    D, F = HIDDEN_DIM, DIM_FF
    ls = p["layers"]

    def padF(v):
        return jnp.pad(v, (0, F - v.shape[0]))

    wq = jnp.stack([l["wq"] for l in ls])                                    # (NL, D, D)
    wkvT = jnp.stack([jnp.concatenate([l["wk"].T, l["wv"].T], axis=0)
                      for l in ls])                                          # (NL, 2D, D)
    bkvT = jnp.stack([jnp.concatenate([l["bk"], l["bv"]]).reshape(2 * D, 1)
                      for l in ls])                                          # (NL, 2D, 1)
    wo = jnp.stack([l["wo"] for l in ls])                                    # (NL, D, D)
    w1 = jnp.stack([l["w1"] for l in ls])                                    # (NL, D, F)
    w2 = jnp.stack([l["w2"] for l in ls])                                    # (NL, F, D)
    lvecs = jnp.stack([jnp.stack([padF(l["bq"]), padF(l["bo"]), padF(l["b1"]),
                                  padF(l["b2"]), padF(l["ln1_g"]), padF(l["ln1_b"]),
                                  padF(l["ln2_g"]), padF(l["ln2_b"])])
                       for l in ls])                                         # (NL, 8, F)
    head = jnp.concatenate([p["dup_pool"][:, :, 0],
                            p["norm_g"].reshape(1, D),
                            p["norm_b"].reshape(1, D)], axis=0)              # (L+2, D)
    return {
        "e_wt": p["embed_w"].T,                      # (D, C)
        "e_b": p["embed_b"].reshape(D, 1),
        "qe": p["query_embed"],                      # (L, D)
        "wq": wq, "wkvT": wkvT, "bkvT": bkvT, "wo": wo, "w1": w1, "w2": w2,
        "lvecs": lvecs, "head": head,
        "hbias": p["dup_pool_bias"].reshape(1, 1),
    }


if __name__ == "__main__":
    key = jax.random.PRNGKey(0)
    pkey, xkey = jax.random.split(key)
    params = init_params(pkey)
    packed = jax.tree_util.tree_map(jnp.asarray, pack_params(params))

    bs, H, W = 2, 4, 4
    x = jax.random.normal(xkey, (bs, IN_CHANNELS, H, W), jnp.float32)

    logits = jax.jit(trimodal_forward)(packed, x)
    jax.block_until_ready(logits)
    assert logits.shape == (bs, NUM_CLASS), logits.shape
    assert logits.dtype == jnp.float32
    print("KERNEL_OK")
</pallas_src>

<mosaic_0001>
module attributes {stable_mosaic.version = 11 : i64} {
  func.func @_fused_forward_kernel(%arg0: i32, %arg1: memref<1x2048x16xf32, #tpu.memory_space<vmem>>, %arg2: memref<32x2048xf32, #tpu.memory_space<vmem>>, %arg3: memref<32x1xf32, #tpu.memory_space<vmem>>, %arg4: memref<8x32xf32, #tpu.memory_space<vmem>>, %arg5: memref<2x32x32xf32, #tpu.memory_space<vmem>>, %arg6: memref<2x64x32xf32, #tpu.memory_space<vmem>>, %arg7: memref<2x64x1xf32, #tpu.memory_space<vmem>>, %arg8: memref<2x32x32xf32, #tpu.memory_space<vmem>>, %arg9: memref<2x32x64xf32, #tpu.memory_space<vmem>>, %arg10: memref<2x64x32xf32, #tpu.memory_space<vmem>>, %arg11: memref<2x8x64xf32, #tpu.memory_space<vmem>>, %arg12: memref<10x32xf32, #tpu.memory_space<vmem>>, %arg13: memref<1x1xf32, #tpu.memory_space<vmem>>, %arg14: memref<1x8x1xf32, #tpu.memory_space<vmem>>) attributes {dimension_semantics = [#tpu.dimension_semantics<parallel>], iteration_bounds = array<i64: 2>, scalar_prefetch = 0 : i64, scratch_operands = 0 : i64, tpu.core_type = #tpu.core_type<tc>, window_params = [{transform_indices = @transform_0, window_bounds = array<i64: 1, 2048, 16>}, {pipeline_mode = #tpu.pipeline_mode<synchronous>, transform_indices = @transform_1, window_bounds = array<i64: 32, 2048>}, {pipeline_mode = #tpu.pipeline_mode<synchronous>, transform_indices = @transform_2, window_bounds = array<i64: 32, 1>}, {pipeline_mode = #tpu.pipeline_mode<synchronous>, transform_indices = @transform_3, window_bounds = array<i64: 8, 32>}, {pipeline_mode = #tpu.pipeline_mode<synchronous>, transform_indices = @transform_4, window_bounds = array<i64: 2, 32, 32>}, {pipeline_mode = #tpu.pipeline_mode<synchronous>, transform_indices = @transform_5, window_bounds = array<i64: 2, 64, 32>}, {pipeline_mode = #tpu.pipeline_mode<synchronous>, transform_indices = @transform_6, window_bounds = array<i64: 2, 64, 1>}, {pipeline_mode = #tpu.pipeline_mode<synchronous>, transform_indices = @transform_7, window_bounds = array<i64: 2, 32, 32>}, {pipeline_mode = #tpu.pipeline_mode<synchronous>, transform_indices = @transform_8, window_bounds = array<i64: 2, 32, 64>}, {pipeline_mode = #tpu.pipeline_mode<synchronous>, transform_indices = @transform_9, window_bounds = array<i64: 2, 64, 32>}, {pipeline_mode = #tpu.pipeline_mode<synchronous>, transform_indices = @transform_10, window_bounds = array<i64: 2, 8, 64>}, {pipeline_mode = #tpu.pipeline_mode<synchronous>, transform_indices = @transform_11, window_bounds = array<i64: 10, 32>}, {pipeline_mode = #tpu.pipeline_mode<synchronous>, transform_indices = @transform_12, window_bounds = array<i64: 1, 1>}, {transform_indices = @transform_13, window_bounds = array<i64: 1, 8, 1>}]} {
    %c0 = arith.constant 0 : index
    %c0_0 = arith.constant 0 : index
    %0 = vector.load %arg2[%c0, %c0_0] : memref<32x2048xf32, #tpu.memory_space<vmem>>, vector<32x2048xf32>
    %c0_1 = arith.constant 0 : index
    %c0_2 = arith.constant 0 : index
    %c0_3 = arith.constant 0 : index
    %1 = vector.load %arg1[%c0_1, %c0_2, %c0_3] : memref<1x2048x16xf32, #tpu.memory_space<vmem>>, vector<1x2048x16xf32>
    %2 = vector.shape_cast %1 : vector<1x2048x16xf32> to vector<2048x16xf32>
    %cst = arith.constant dense<0.000000e+00> : vector<32x16xf32>
    %3 = tpu.matmul %0, %2, %cst {dimension_numbers = #tpu.dot_dimension_numbers<[1], [0], [0], [1], [0, 0, 1, 1], [], []>} : vector<32x2048xf32>, vector<2048x16xf32>, vector<32x16xf32> -> vector<32x16xf32>
    %c0_4 = arith.constant 0 : index
    %c0_5 = arith.constant 0 : index
    %4 = vector.load %arg3[%c0_4, %c0_5] : memref<32x1xf32, #tpu.memory_space<vmem>>, vector<32x1xf32>
    %5 = vector.broadcast %4 : vector<32x1xf32> to vector<32x16xf32>
    %6 = arith.addf %3, %5 : vector<32x16xf32>
    %c0_6 = arith.constant 0 : index
    %c0_7 = arith.constant 0 : index
    %7 = vector.load %arg4[%c0_6, %c0_7] : memref<8x32xf32, #tpu.memory_space<vmem>>, vector<8x32xf32>
    %c0_8 = arith.constant 0 : index
    %c0_9 = arith.constant 0 : index
    %c0_10 = arith.constant 0 : index
    %8 = vector.load %arg11[%c0_8, %c0_9, %c0_10] : memref<2x8x64xf32, #tpu.memory_space<vmem>>, vector<1x8x64xf32>
    %9 = vector.shape_cast %8 : vector<1x8x64xf32> to vector<8x64xf32>
    %10 = vector.extract_strided_slice %9 {offsets = [0, 0], sizes = [1, 32], strides = [1, 1]} : vector<8x64xf32> to vector<1x32xf32>
    %11 = vector.extract_strided_slice %9 {offsets = [1, 0], sizes = [1, 32], strides = [1, 1]} : vector<8x64xf32> to vector<1x32xf32>
    %12 = vector.extract_strided_slice %9 {offsets = [2, 0], sizes = [1, 64], strides = [1, 1]} : vector<8x64xf32> to vector<1x64xf32>
    %13 = vector.extract_strided_slice %9 {offsets = [3, 0], sizes = [1, 32], strides = [1, 1]} : vector<8x64xf32> to vector<1x32xf32>
    %14 = vector.extract_strided_slice %9 {offsets = [4, 0], sizes = [1, 32], strides = [1, 1]} : vector<8x64xf32> to vector<1x32xf32>
    %15 = vector.extract_strided_slice %9 {offsets = [5, 0], sizes = [1, 32], strides = [1, 1]} : vector<8x64xf32> to vector<1x32xf32>
    %16 = vector.extract_strided_slice %9 {offsets = [6, 0], sizes = [1, 32], strides = [1, 1]} : vector<8x64xf32> to vector<1x32xf32>
    %17 = vector.extract_strided_slice %9 {offsets = [7, 0], sizes = [1, 32], strides = [1, 1]} : vector<8x64xf32> to vector<1x32xf32>
    %18 = arith.addf %7, %7 : vector<8x32xf32>
    %c0_11 = arith.constant 0 : index
    %c0_12 = arith.constant 0 : index
    %c0_13 = arith.constant 0 : index
    %19 = vector.load %arg5[%c0_11, %c0_12, %c0_13] : memref<2x32x32xf32, #tpu.memory_space<vmem>>, vector<1x32x32xf32>
    %20 = vector.shape_cast %19 : vector<1x32x32xf32> to vector<32x32xf32>
    %cst_14 = arith.constant dense<0.000000e+00> : vector<8x32xf32>
    %21 = tpu.matmul %18, %20, %cst_14 {dimension_numbers = #tpu.dot_dimension_numbers<[1], [0], [0], [1], [0, 0, 1, 1], [], []>} : vector<8x32xf32>, vector<32x32xf32>, vector<8x32xf32> -> vector<8x32xf32>
    %22 = vector.broadcast %10 : vector<1x32xf32> to vector<8x32xf32>
    %23 = arith.addf %21, %22 : vector<8x32xf32>
    %c0_15 = arith.constant 0 : index
    %c0_16 = arith.constant 0 : index
    %c0_17 = arith.constant 0 : index
    %24 = vector.load %arg6[%c0_15, %c0_16, %c0_17] : memref<2x64x32xf32, #tpu.memory_space<vmem>>, vector<1x64x32xf32>
    %25 = vector.shape_cast %24 : vector<1x64x32xf32> to vector<64x32xf32>
    %cst_18 = arith.constant dense<0.000000e+00> : vector<64x16xf32>
    %26 = tpu.matmul %25, %6, %cst_18 {dimension_numbers = #tpu.dot_dimension_numbers<[1], [0], [0], [1], [0, 0, 1, 1], [], []>} : vector<64x32xf32>, vector<32x16xf32>, vector<64x16xf32> -> vector<64x16xf32>
    %c0_19 = arith.constant 0 : index
    %c0_20 = arith.constant 0 : index
    %c0_21 = arith.constant 0 : index
    %27 = vector.load %arg7[%c0_19, %c0_20, %c0_21] : memref<2x64x1xf32, #tpu.memory_space<vmem>>, vector<1x64x1xf32>
    %28 = vector.shape_cast %27 : vector<1x64x1xf32> to vector<64x1xf32>
    %29 = vector.broadcast %28 : vector<64x1xf32> to vector<64x16xf32>
    %30 = arith.addf %26, %29 : vector<64x16xf32>
    %31 = vector.extract_strided_slice %30 {offsets = [0, 0], sizes = [32, 16], strides = [1, 1]} : vector<64x16xf32> to vector<32x16xf32>
    %32 = vector.extract_strided_slice %30 {offsets = [32, 0], sizes = [32, 16], strides = [1, 1]} : vector<64x16xf32> to vector<32x16xf32>
    %33 = tpu.transpose %32, [1, 0] : vector<32x16xf32> -> vector<16x32xf32>
    %34 = vector.extract_strided_slice %23 {offsets = [0, 0], sizes = [8, 8], strides = [1, 1]} : vector<8x32xf32> to vector<8x8xf32>
    %35 = vector.extract_strided_slice %31 {offsets = [0, 0], sizes = [8, 16], strides = [1, 1]} : vector<32x16xf32> to vector<8x16xf32>
    %36 = vector.extract_strided_slice %33 {offsets = [0, 0], sizes = [16, 8], strides = [1, 1]} : vector<16x32xf32> to vector<16x8xf32>
    %cst_22 = arith.constant dense<0.000000e+00> : vector<8x16xf32>
    %37 = tpu.matmul %34, %35, %cst_22 {dimension_numbers = #tpu.dot_dimension_numbers<[1], [0], [0], [1], [0, 0, 1, 1], [], []>} : vector<8x8xf32>, vector<8x16xf32>, vector<8x16xf32> -> vector<8x16xf32>
    %cst_23 = arith.constant 0.353553385 : f32
    %38 = vector.broadcast %cst_23 : f32 to vector<8x16xf32>
    %39 = arith.mulf %37, %38 : vector<8x16xf32>
    %cst_24 = arith.constant dense<0xFF800000> : vector<8xf32>
    %40 = vector.multi_reduction <maximumf>, %39, %cst_24 [1] : vector<8x16xf32> to vector<8xf32>
    %41 = vector.shape_cast %40 : vector<8xf32> to vector<8x1xf32>
    %42 = vector.broadcast %41 : vector<8x1xf32> to vector<8x16xf32>
    %43 = arith.subf %39, %42 : vector<8x16xf32>
    %44 = math.exp %43 : vector<8x16xf32>
    %cst_25 = arith.constant dense<0.000000e+00> : vector<8xf32>
    %45 = vector.multi_reduction <add>, %44, %cst_25 [1] : vector<8x16xf32> to vector<8xf32>
    %46 = vector.shape_cast %45 : vector<8xf32> to vector<8x1xf32>
    %47 = vector.broadcast %46 : vector<8x1xf32> to vector<8x16xf32>
    %48 = arith.divf %44, %47 : vector<8x16xf32>
    %cst_26 = arith.constant dense<0.000000e+00> : vector<8x8xf32>
    %49 = tpu.matmul %48, %36, %cst_26 {dimension_numbers = #tpu.dot_dimension_numbers<[1], [0], [0], [1], [0, 0, 1, 1], [], []>} : vector<8x16xf32>, vector<16x8xf32>, vector<8x8xf32> -> vector<8x8xf32>
    %50 = vector.extract_strided_slice %23 {offsets = [0, 8], sizes = [8, 8], strides = [1, 1]} : vector<8x32xf32> to vector<8x8xf32>
    %51 = vector.extract_strided_slice %31 {offsets = [8, 0], sizes = [8, 16], strides = [1, 1]} : vector<32x16xf32> to vector<8x16xf32>
    %52 = vector.extract_strided_slice %33 {offsets = [0, 8], sizes = [16, 8], strides = [1, 1]} : vector<16x32xf32> to vector<16x8xf32>
    %cst_27 = arith.constant dense<0.000000e+00> : vector<8x16xf32>
    %53 = tpu.matmul %50, %51, %cst_27 {dimension_numbers = #tpu.dot_dimension_numbers<[1], [0], [0], [1], [0, 0, 1, 1], [], []>} : vector<8x8xf32>, vector<8x16xf32>, vector<8x16xf32> -> vector<8x16xf32>
    %cst_28 = arith.constant 0.353553385 : f32
    %54 = vector.broadcast %cst_28 : f32 to vector<8x16xf32>
    %55 = arith.mulf %53, %54 : vector<8x16xf32>
    %cst_29 = arith.constant dense<0xFF800000> : vector<8xf32>
    %56 = vector.multi_reduction <maximumf>, %55, %cst_29 [1] : vector<8x16xf32> to vector<8xf32>
    %57 = vector.shape_cast %56 : vector<8xf32> to vector<8x1xf32>
    %58 = vector.broadcast %57 : vector<8x1xf32> to vector<8x16xf32>
    %59 = arith.subf %55, %58 : vector<8x16xf32>
    %60 = math.exp %59 : vector<8x16xf32>
    %cst_30 = arith.constant dense<0.000000e+00> : vector<8xf32>
    %61 = vector.multi_reduction <add>, %60, %cst_30 [1] : vector<8x16xf32> to vector<8xf32>
    %62 = vector.shape_cast %61 : vector<8xf32> to vector<8x1xf32>
    %63 = vector.broadcast %62 : vector<8x1xf32> to vector<8x16xf32>
    %64 = arith.divf %60, %63 : vector<8x16xf32>
    %cst_31 = arith.constant dense<0.000000e+00> : vector<8x8xf32>
    %65 = tpu.matmul %64, %52, %cst_31 {dimension_numbers = #tpu.dot_dimension_numbers<[1], [0], [0], [1], [0, 0, 1, 1], [], []>} : vector<8x16xf32>, vector<16x8xf32>, vector<8x8xf32> -> vector<8x8xf32>
    %66 = vector.extract_strided_slice %23 {offsets = [0, 16], sizes = [8, 8], strides = [1, 1]} : vector<8x32xf32> to vector<8x8xf32>
    %67 = vector.extract_strided_slice %31 {offsets = [16, 0], sizes = [8, 16], strides = [1, 1]} : vector<32x16xf32> to vector<8x16xf32>
    %68 = vector.extract_strided_slice %33 {offsets = [0, 16], sizes = [16, 8], strides = [1, 1]} : vector<16x32xf32> to vector<16x8xf32>
    %cst_32 = arith.constant dense<0.000000e+00> : vector<8x16xf32>
    %69 = tpu.matmul %66, %67, %cst_32 {dimension_numbers = #tpu.dot_dimension_numbers<[1], [0], [0], [1], [0, 0, 1, 1], [], []>} : vector<8x8xf32>, vector<8x16xf32>, vector<8x16xf32> -> vector<8x16xf32>
    %cst_33 = arith.constant 0.353553385 : f32
    %70 = vector.broadcast %cst_33 : f32 to vector<8x16xf32>
    %71 = arith.mulf %69, %70 : vector<8x16xf32>
    %cst_34 = arith.constant dense<0xFF800000> : vector<8xf32>
    %72 = vector.multi_reduction <maximumf>, %71, %cst_34 [1] : vector<8x16xf32> to vector<8xf32>
    %73 = vector.shape_cast %72 : vector<8xf32> to vector<8x1xf32>
    %74 = vector.broadcast %73 : vector<8x1xf32> to vector<8x16xf32>
    %75 = arith.subf %71, %74 : vector<8x16xf32>
    %76 = math.exp %75 : vector<8x16xf32>
    %cst_35 = arith.constant dense<0.000000e+00> : vector<8xf32>
    %77 = vector.multi_reduction <add>, %76, %cst_35 [1] : vector<8x16xf32> to vector<8xf32>
    %78 = vector.shape_cast %77 : vector<8xf32> to vector<8x1xf32>
    %79 = vector.broadcast %78 : vector<8x1xf32> to vector<8x16xf32>
    %80 = arith.divf %76, %79 : vector<8x16xf32>
    %cst_36 = arith.constant dense<0.000000e+00> : vector<8x8xf32>
    %81 = tpu.matmul %80, %68, %cst_36 {dimension_numbers = #tpu.dot_dimension_numbers<[1], [0], [0], [1], [0, 0, 1, 1], [], []>} : vector<8x16xf32>, vector<16x8xf32>, vector<8x8xf32> -> vector<8x8xf32>
    %82 = vector.extract_strided_slice %23 {offsets = [0, 24], sizes = [8, 8], strides = [1, 1]} : vector<8x32xf32> to vector<8x8xf32>
    %83 = vector.extract_strided_slice %31 {offsets = [24, 0], sizes = [8, 16], strides = [1, 1]} : vector<32x16xf32> to vector<8x16xf32>
    %84 = vector.extract_strided_slice %33 {offsets = [0, 24], sizes = [16, 8], strides = [1, 1]} : vector<16x32xf32> to vector<16x8xf32>
    %cst_37 = arith.constant dense<0.000000e+00> : vector<8x16xf32>
    %85 = tpu.matmul %82, %83, %cst_37 {dimension_numbers = #tpu.dot_dimension_numbers<[1], [0], [0], [1], [0, 0, 1, 1], [], []>} : vector<8x8xf32>, vector<8x16xf32>, vector<8x16xf32> -> vector<8x16xf32>
    %cst_38 = arith.constant 0.353553385 : f32
    %86 = vector.broadcast %cst_38 : f32 to vector<8x16xf32>
    %87 = arith.mulf %85, %86 : vector<8x16xf32>
    %cst_39 = arith.constant dense<0xFF800000> : vector<8xf32>
    %88 = vector.multi_reduction <maximumf>, %87, %cst_39 [1] : vector<8x16xf32> to vector<8xf32>
    %89 = vector.shape_cast %88 : vector<8xf32> to vector<8x1xf32>
    %90 = vector.broadcast %89 : vector<8x1xf32> to vector<8x16xf32>
    %91 = arith.subf %87, %90 : vector<8x16xf32>
    %92 = math.exp %91 : vector<8x16xf32>
    %cst_40 = arith.constant dense<0.000000e+00> : vector<8xf32>
    %93 = vector.multi_reduction <add>, %92, %cst_40 [1] : vector<8x16xf32> to vector<8xf32>
    %94 = vector.shape_cast %93 : vector<8xf32> to vector<8x1xf32>
    %95 = vector.broadcast %94 : vector<8x1xf32> to vector<8x16xf32>
    %96 = arith.divf %92, %95 : vector<8x16xf32>
    %cst_41 = arith.constant dense<0.000000e+00> : vector<8x8xf32>
    %97 = tpu.matmul %96, %84, %cst_41 {dimension_numbers = #tpu.dot_dimension_numbers<[1], [0], [0], [1], [0, 0, 1, 1], [], []>} : vector<8x16xf32>, vector<16x8xf32>, vector<8x8xf32> -> vector<8x8xf32>
    %98 = tpu.concatenate %49, %65, %81, %97 in 1 : vector<8x8xf32>, vector<8x8xf32>, vector<8x8xf32>, vector<8x8xf32> -> vector<8x32xf32>
    %c0_42 = arith.constant 0 : index
    %c0_43 = arith.constant 0 : index
    %c0_44 = arith.constant 0 : index
    %99 = vector.load %arg8[%c0_42, %c0_43, %c0_44] : memref<2x32x32xf32, #tpu.memory_space<vmem>>, vector<1x32x32xf32>
    %100 = vector.shape_cast %99 : vector<1x32x32xf32> to vector<32x32xf32>
    %cst_45 = arith.constant dense<0.000000e+00> : vector<8x32xf32>
    %101 = tpu.matmul %98, %100, %cst_45 {dimension_numbers = #tpu.dot_dimension_numbers<[1], [0], [0], [1], [0, 0, 1, 1], [], []>} : vector<8x32xf32>, vector<32x32xf32>, vector<8x32xf32> -> vector<8x32xf32>
    %102 = vector.broadcast %11 : vector<1x32xf32> to vector<8x32xf32>
    %103 = arith.addf %101, %102 : vector<8x32xf32>
    %104 = arith.addf %7, %103 : vector<8x32xf32>
    %cst_46 = arith.constant dense<0.000000e+00> : vector<8xf32>
    %105 = vector.multi_reduction <add>, %104, %cst_46 [1] : vector<8x32xf32> to vector<8xf32>
    %106 = vector.shape_cast %105 : vector<8xf32> to vector<8x1xf32>
    %cst_47 = arith.constant 3.200000e+01 : f32
    %107 = vector.broadcast %cst_47 : f32 to vector<8x1xf32>
    %108 = arith.divf %106, %107 : vector<8x1xf32>
    %109 = vector.broadcast %108 : vector<8x1xf32> to vector<8x32xf32>
    %110 = arith.subf %104, %109 : vector<8x32xf32>
    %111 = arith.mulf %110, %110 : vector<8x32xf32>
    %cst_48 = arith.constant dense<0.000000e+00> : vector<8xf32>
    %112 = vector.multi_reduction <add>, %111, %cst_48 [1] : vector<8x32xf32> to vector<8xf32>
    %113 = vector.shape_cast %112 : vector<8xf32> to vector<8x1xf32>
    %cst_49 = arith.constant 3.200000e+01 : f32
    %114 = vector.broadcast %cst_49 : f32 to vector<8x1xf32>
    %115 = arith.divf %113, %114 : vector<8x1xf32>
    %116 = vector.broadcast %108 : vector<8x1xf32> to vector<8x32xf32>
    %117 = arith.subf %104, %116 : vector<8x32xf32>
    %cst_50 = arith.constant 9.99999974E-6 : f32
    %118 = vector.broadcast %cst_50 : f32 to vector<8x1xf32>
    %119 = arith.addf %115, %118 : vector<8x1xf32>
    %120 = math.rsqrt %119 : vector<8x1xf32>
    %121 = vector.broadcast %120 : vector<8x1xf32> to vector<8x32xf32>
    %122 = arith.mulf %117, %121 : vector<8x32xf32>
    %123 = vector.broadcast %14 : vector<1x32xf32> to vector<8x32xf32>
    %124 = arith.mulf %122, %123 : vector<8x32xf32>
    %125 = vector.broadcast %15 : vector<1x32xf32> to vector<8x32xf32>
    %126 = arith.addf %124, %125 : vector<8x32xf32>
    %c0_51 = arith.constant 0 : index
    %c0_52 = arith.constant 0 : index
    %c0_53 = arith.constant 0 : index
    %127 = vector.load %arg9[%c0_51, %c0_52, %c0_53] : memref<2x32x64xf32, #tpu.memory_space<vmem>>, vector<1x32x64xf32>
    %128 = vector.shape_cast %127 : vector<1x32x64xf32> to vector<32x64xf32>
    %cst_54 = arith.constant dense<0.000000e+00> : vector<8x64xf32>
    %129 = tpu.matmul %126, %128, %cst_54 {dimension_numbers = #tpu.dot_dimension_numbers<[1], [0], [0], [1], [0, 0, 1, 1], [], []>} : vector<8x32xf32>, vector<32x64xf32>, vector<8x64xf32> -> vector<8x64xf32>
    %130 = vector.broadcast %12 : vector<1x64xf32> to vector<8x64xf32>
    %131 = arith.addf %129, %130 : vector<8x64xf32>
    %cst_55 = arith.constant 0.000000e+00 : f32
    %132 = vector.broadcast %cst_55 : f32 to vector<8x64xf32>
    %133 = arith.maximumf %131, %132 : vector<8x64xf32>
    %c0_56 = arith.constant 0 : index
    %c0_57 = arith.constant 0 : index
    %c0_58 = arith.constant 0 : index
    %134 = vector.load %arg10[%c0_56, %c0_57, %c0_58] : memref<2x64x32xf32, #tpu.memory_space<vmem>>, vector<1x64x32xf32>
    %135 = vector.shape_cast %134 : vector<1x64x32xf32> to vector<64x32xf32>
    %cst_59 = arith.constant dense<0.000000e+00> : vector<8x32xf32>
    %136 = tpu.matmul %133, %135, %cst_59 {dimension_numbers = #tpu.dot_dimension_numbers<[1], [0], [0], [1], [0, 0, 1, 1], [], []>} : vector<8x64xf32>, vector<64x32xf32>, vector<8x32xf32> -> vector<8x32xf32>
    %137 = vector.broadcast %13 : vector<1x32xf32> to vector<8x32xf32>
    %138 = arith.addf %136, %137 : vector<8x32xf32>
    %139 = arith.addf %126, %138 : vector<8x32xf32>
    %cst_60 = arith.constant dense<0.000000e+00> : vector<8xf32>
    %140 = vector.multi_reduction <add>, %139, %cst_60 [1] : vector<8x32xf32> to vector<8xf32>
    %141 = vector.shape_cast %140 : vector<8xf32> to vector<8x1xf32>
    %cst_61 = arith.constant 3.200000e+01 : f32
    %142 = vector.broadcast %cst_61 : f32 to vector<8x1xf32>
    %143 = arith.divf %141, %142 : vector<8x1xf32>
    %144 = vector.broadcast %143 : vector<8x1xf32> to vector<8x32xf32>
    %145 = arith.subf %139, %144 : vector<8x32xf32>
    %146 = arith.mulf %145, %145 : vector<8x32xf32>
    %cst_62 = arith.constant dense<0.000000e+00> : vector<8xf32>
    %147 = vector.multi_reduction <add>, %146, %cst_62 [1] : vector<8x32xf32> to vector<8xf32>
    %148 = vector.shape_cast %147 : vector<8xf32> to vector<8x1xf32>
    %cst_63 = arith.constant 3.200000e+01 : f32
    %149 = vector.broadcast %cst_63 : f32 to vector<8x1xf32>
    %150 = arith.divf %148, %149 : vector<8x1xf32>
    %151 = vector.broadcast %143 : vector<8x1xf32> to vector<8x32xf32>
    %152 = arith.subf %139, %151 : vector<8x32xf32>
    %cst_64 = arith.constant 9.99999974E-6 : f32
    %153 = vector.broadcast %cst_64 : f32 to vector<8x1xf32>
    %154 = arith.addf %150, %153 : vector<8x1xf32>
    %155 = math.rsqrt %154 : vector<8x1xf32>
    %156 = vector.broadcast %155 : vector<8x1xf32> to vector<8x32xf32>
    %157 = arith.mulf %152, %156 : vector<8x32xf32>
    %158 = vector.broadcast %16 : vector<1x32xf32> to vector<8x32xf32>
    %159 = arith.mulf %157, %158 : vector<8x32xf32>
    %160 = vector.broadcast %17 : vector<1x32xf32> to vector<8x32xf32>
    %161 = arith.addf %159, %160 : vector<8x32xf32>
    %c1 = arith.constant 1 : index
    %c0_65 = arith.constant 0 : index
    %c0_66 = arith.constant 0 : index
    %162 = vector.load %arg11[%c1, %c0_65, %c0_66] : memref<2x8x64xf32, #tpu.memory_space<vmem>>, vector<1x8x64xf32>
    %163 = vector.shape_cast %162 : vector<1x8x64xf32> to vector<8x64xf32>
    %164 = vector.extract_strided_slice %163 {offsets = [0, 0], sizes = [1, 32], strides = [1, 1]} : vector<8x64xf32> to vector<1x32xf32>
    %165 = vector.extract_strided_slice %163 {offsets = [1, 0], sizes = [1, 32], strides = [1, 1]} : vector<8x64xf32> to vector<1x32xf32>
    %166 = vector.extract_strided_slice %163 {offsets = [2, 0], sizes = [1, 64], strides = [1, 1]} : vector<8x64xf32> to vector<1x64xf32>
    %167 = vector.extract_strided_slice %163 {offsets = [3, 0], sizes = [1, 32], strides = [1, 1]} : vector<8x64xf32> to vector<1x32xf32>
    %168 = vector.extract_strided_slice %163 {offsets = [4, 0], sizes = [1, 32], strides = [1, 1]} : vector<8x64xf32> to vector<1x32xf32>
    %169 = vector.extract_strided_slice %163 {offsets = [5, 0], sizes = [1, 32], strides = [1, 1]} : vector<8x64xf32> to vector<1x32xf32>
    %170 = vector.extract_strided_slice %163 {offsets = [6, 0], sizes = [1, 32], strides = [1, 1]} : vector<8x64xf32> to vector<1x32xf32>
    %171 = vector.extract_strided_slice %163 {offsets = [7, 0], sizes = [1, 32], strides = [1, 1]} : vector<8x64xf32> to vector<1x32xf32>
    %172 = arith.addf %161, %7 : vector<8x32xf32>
    %c1_67 = arith.constant 1 : index
    %c0_68 = arith.constant 0 : index
    %c0_69 = arith.constant 0 : index
    %173 = vector.load %arg5[%c1_67, %c0_68, %c0_69] : memref<2x32x32xf32, #tpu.memory_space<vmem>>, vector<1x32x32xf32>
    %174 = vector.shape_cast %173 : vector<1x32x32xf32> to vector<32x32xf32>
    %cst_70 = arith.constant dense<0.000000e+00> : vector<8x32xf32>
    %175 = tpu.matmul %172, %174, %cst_70 {dimension_numbers = #tpu.dot_dimension_numbers<[1], [0], [0], [1], [0, 0, 1, 1], [], []>} : vector<8x32xf32>, vector<32x32xf32>, vector<8x32xf32> -> vector<8x32xf32>
    %176 = vector.broadcast %164 : vector<1x32xf32> to vector<8x32xf32>
    %177 = arith.addf %175, %176 : vector<8x32xf32>
    %c1_71 = arith.constant 1 : index
    %c0_72 = arith.constant 0 : index
    %c0_73 = arith.constant 0 : index
    %178 = vector.load %arg6[%c1_71, %c0_72, %c0_73] : memref<2x64x32xf32, #tpu.memory_space<vmem>>, vector<1x64x32xf32>
    %179 = vector.shape_cast %178 : vector<1x64x32xf32> to vector<64x32xf32>
    %cst_74 = arith.constant dense<0.000000e+00> : vector<64x16xf32>
    %180 = tpu.matmul %179, %6, %cst_74 {dimension_numbers = #tpu.dot_dimension_numbers<[1], [0], [0], [1], [0, 0, 1, 1], [], []>} : vector<64x32xf32>, vector<32x16xf32>, vector<64x16xf32> -> vector<64x16xf32>
    %c1_75 = arith.constant 1 : index
    %c0_76 = arith.constant 0 : index
    %c0_77 = arith.constant 0 : index
    %181 = vector.load %arg7[%c1_75, %c0_76, %c0_77] : memref<2x64x1xf32, #tpu.memory_space<vmem>>, vector<1x64x1xf32>
    %182 = vector.shape_cast %181 : vector<1x64x1xf32> to vector<64x1xf32>
    %183 = vector.broadcast %182 : vector<64x1xf32> to vector<64x16xf32>
    %184 = arith.addf %180, %183 : vector<64x16xf32>
    %185 = vector.extract_strided_slice %184 {offsets = [0, 0], sizes = [32, 16], strides = [1, 1]} : vector<64x16xf32> to vector<32x16xf32>
    %186 = vector.extract_strided_slice %184 {offsets = [32, 0], sizes = [32, 16], strides = [1, 1]} : vector<64x16xf32> to vector<32x16xf32>
    %187 = tpu.transpose %186, [1, 0] : vector<32x16xf32> -> vector<16x32xf32>
    %188 = vector.extract_strided_slice %177 {offsets = [0, 0], sizes = [8, 8], strides = [1, 1]} : vector<8x32xf32> to vector<8x8xf32>
    %189 = vector.extract_strided_slice %185 {offsets = [0, 0], sizes = [8, 16], strides = [1, 1]} : vector<32x16xf32> to vector<8x16xf32>
    %190 = vector.extract_strided_slice %187 {offsets = [0, 0], sizes = [16, 8], strides = [1, 1]} : vector<16x32xf32> to vector<16x8xf32>
    %cst_78 = arith.constant dense<0.000000e+00> : vector<8x16xf32>
    %191 = tpu.matmul %188, %189, %cst_78 {dimension_numbers = #tpu.dot_dimension_numbers<[1], [0], [0], [1], [0, 0, 1, 1], [], []>} : vector<8x8xf32>, vector<8x16xf32>, vector<8x16xf32> -> vector<8x16xf32>
    %cst_79 = arith.constant 0.353553385 : f32
    %192 = vector.broadcast %cst_79 : f32 to vector<8x16xf32>
    %193 = arith.mulf %191, %192 : vector<8x16xf32>
    %cst_80 = arith.constant dense<0xFF800000> : vector<8xf32>
    %194 = vector.multi_reduction <maximumf>, %193, %cst_80 [1] : vector<8x16xf32> to vector<8xf32>
    %195 = vector.shape_cast %194 : vector<8xf32> to vector<8x1xf32>
    %196 = vector.broadcast %195 : vector<8x1xf32> to vector<8x16xf32>
    %197 = arith.subf %193, %196 : vector<8x16xf32>
    %198 = math.exp %197 : vector<8x16xf32>
    %cst_81 = arith.constant dense<0.000000e+00> : vector<8xf32>
    %199 = vector.multi_reduction <add>, %198, %cst_81 [1] : vector<8x16xf32> to vector<8xf32>
    %200 = vector.shape_cast %199 : vector<8xf32> to vector<8x1xf32>
    %201 = vector.broadcast %200 : vector<8x1xf32> to vector<8x16xf32>
    %202 = arith.divf %198, %201 : vector<8x16xf32>
    %cst_82 = arith.constant dense<0.000000e+00> : vector<8x8xf32>
    %203 = tpu.matmul %202, %190, %cst_82 {dimension_numbers = #tpu.dot_dimension_numbers<[1], [0], [0], [1], [0, 0, 1, 1], [], []>} : vector<8x16xf32>, vector<16x8xf32>, vector<8x8xf32> -> vector<8x8xf32>
    %204 = vector.extract_strided_slice %177 {offsets = [0, 8], sizes = [8, 8], strides = [1, 1]} : vector<8x32xf32> to vector<8x8xf32>
    %205 = vector.extract_strided_slice %185 {offsets = [8, 0], sizes = [8, 16], strides = [1, 1]} : vector<32x16xf32> to vector<8x16xf32>
    %206 = vector.extract_strided_slice %187 {offsets = [0, 8], sizes = [16, 8], strides = [1, 1]} : vector<16x32xf32> to vector<16x8xf32>
    %cst_83 = arith.constant dense<0.000000e+00> : vector<8x16xf32>
    %207 = tpu.matmul %204, %205, %cst_83 {dimension_numbers = #tpu.dot_dimension_numbers<[1], [0], [0], [1], [0, 0, 1, 1], [], []>} : vector<8x8xf32>, vector<8x16xf32>, vector<8x16xf32> -> vector<8x16xf32>
    %cst_84 = arith.constant 0.353553385 : f32
    %208 = vector.broadcast %cst_84 : f32 to vector<8x16xf32>
    %209 = arith.mulf %207, %208 : vector<8x16xf32>
    %cst_85 = arith.constant dense<0xFF800000> : vector<8xf32>
    %210 = vector.multi_reduction <maximumf>, %209, %cst_85 [1] : vector<8x16xf32> to vector<8xf32>
    %211 = vector.shape_cast %210 : vector<8xf32> to vector<8x1xf32>
    %212 = vector.broadcast %211 : vector<8x1xf32> to vector<8x16xf32>
    %213 = arith.subf %209, %212 : vector<8x16xf32>
    %214 = math.exp %213 : vector<8x16xf32>
    %cst_86 = arith.constant dense<0.000000e+00> : vector<8xf32>
    %215 = vector.multi_reduction <add>, %214, %cst_86 [1] : vector<8x16xf32> to vector<8xf32>
    %216 = vector.shape_cast %215 : vector<8xf32> to vector<8x1xf32>
    %217 = vector.broadcast %216 : vector<8x1xf32> to vector<8x16xf32>
    %218 = arith.divf %214, %217 : vector<8x16xf32>
    %cst_87 = arith.constant dense<0.000000e+00> : vector<8x8xf32>
    %219 = tpu.matmul %218, %206, %cst_87 {dimension_numbers = #tpu.dot_dimension_numbers<[1], [0], [0], [1], [0, 0, 1, 1], [], []>} : vector<8x16xf32>, vector<16x8xf32>, vector<8x8xf32> -> vector<8x8xf32>
    %220 = vector.extract_strided_slice %177 {offsets = [0, 16], sizes = [8, 8], strides = [1, 1]} : vector<8x32xf32> to vector<8x8xf32>
    %221 = vector.extract_strided_slice %185 {offsets = [16, 0], sizes = [8, 16], strides = [1, 1]} : vector<32x16xf32> to vector<8x16xf32>
    %222 = vector.extract_strided_slice %187 {offsets = [0, 16], sizes = [16, 8], strides = [1, 1]} : vector<16x32xf32> to vector<16x8xf32>
    %cst_88 = arith.constant dense<0.000000e+00> : vector<8x16xf32>
    %223 = tpu.matmul %220, %221, %cst_88 {dimension_numbers = #tpu.dot_dimension_numbers<[1], [0], [0], [1], [0, 0, 1, 1], [], []>} : vector<8x8xf32>, vector<8x16xf32>, vector<8x16xf32> -> vector<8x16xf32>
    %cst_89 = arith.constant 0.353553385 : f32
    %224 = vector.broadcast %cst_89 : f32 to vector<8x16xf32>
    %225 = arith.mulf %223, %224 : vector<8x16xf32>
    %cst_90 = arith.constant dense<0xFF800000> : vector<8xf32>
    %226 = vector.multi_reduction <maximumf>, %225, %cst_90 [1] : vector<8x16xf32> to vector<8xf32>
    %227 = vector.shape_cast %226 : vector<8xf32> to vector<8x1xf32>
    %228 = vector.broadcast %227 : vector<8x1xf32> to vector<8x16xf32>
    %229 = arith.subf %225, %228 : vector<8x16xf32>
    %230 = math.exp %229 : vector<8x16xf32>
    %cst_91 = arith.constant dense<0.000000e+00> : vector<8xf32>
    %231 = vector.multi_reduction <add>, %230, %cst_91 [1] : vector<8x16xf32> to vector<8xf32>
    %232 = vector.shape_cast %231 : vector<8xf32> to vector<8x1xf32>
    %233 = vector.broadcast %232 : vector<8x1xf32> to vector<8x16xf32>
    %234 = arith.divf %230, %233 : vector<8x16xf32>
    %cst_92 = arith.constant dense<0.000000e+00> : vector<8x8xf32>
    %235 = tpu.matmul %234, %222, %cst_92 {dimension_numbers = #tpu.dot_dimension_numbers<[1], [0], [0], [1], [0, 0, 1, 1], [], []>} : vector<8x16xf32>, vector<16x8xf32>, vector<8x8xf32> -> vector<8x8xf32>
    %236 = vector.extract_strided_slice %177 {offsets = [0, 24], sizes = [8, 8], strides = [1, 1]} : vector<8x32xf32> to vector<8x8xf32>
    %237 = vector.extract_strided_slice %185 {offsets = [24, 0], sizes = [8, 16], strides = [1, 1]} : vector<32x16xf32> to vector<8x16xf32>
    %238 = vector.extract_strided_slice %187 {offsets = [0, 24], sizes = [16, 8], strides = [1, 1]} : vector<16x32xf32> to vector<16x8xf32>
    %cst_93 = arith.constant dense<0.000000e+00> : vector<8x16xf32>
    %239 = tpu.matmul %236, %237, %cst_93 {dimension_numbers = #tpu.dot_dimension_numbers<[1], [0], [0], [1], [0, 0, 1, 1], [], []>} : vector<8x8xf32>, vector<8x16xf32>, vector<8x16xf32> -> vector<8x16xf32>
    %cst_94 = arith.constant 0.353553385 : f32
    %240 = vector.broadcast %cst_94 : f32 to vector<8x16xf32>
    %241 = arith.mulf %239, %240 : vector<8x16xf32>
    %cst_95 = arith.constant dense<0xFF800000> : vector<8xf32>
    %242 = vector.multi_reduction <maximumf>, %241, %cst_95 [1] : vector<8x16xf32> to vector<8xf32>
    %243 = vector.shape_cast %242 : vector<8xf32> to vector<8x1xf32>
    %244 = vector.broadcast %243 : vector<8x1xf32> to vector<8x16xf32>
    %245 = arith.subf %241, %244 : vector<8x16xf32>
    %246 = math.exp %245 : vector<8x16xf32>
    %cst_96 = arith.constant dense<0.000000e+00> : vector<8xf32>
    %247 = vector.multi_reduction <add>, %246, %cst_96 [1] : vector<8x16xf32> to vector<8xf32>
    %248 = vector.shape_cast %247 : vector<8xf32> to vector<8x1xf32>
    %249 = vector.broadcast %248 : vector<8x1xf32> to vector<8x16xf32>
    %250 = arith.divf %246, %249 : vector<8x16xf32>
    %cst_97 = arith.constant dense<0.000000e+00> : vector<8x8xf32>
    %251 = tpu.matmul %250, %238, %cst_97 {dimension_numbers = #tpu.dot_dimension_numbers<[1], [0], [0], [1], [0, 0, 1, 1], [], []>} : vector<8x16xf32>, vector<16x8xf32>, vector<8x8xf32> -> vector<8x8xf32>
    %252 = tpu.concatenate %203, %219, %235, %251 in 1 : vector<8x8xf32>, vector<8x8xf32>, vector<8x8xf32>, vector<8x8xf32> -> vector<8x32xf32>
    %c1_98 = arith.constant 1 : index
    %c0_99 = arith.constant 0 : index
    %c0_100 = arith.constant 0 : index
    %253 = vector.load %arg8[%c1_98, %c0_99, %c0_100] : memref<2x32x32xf32, #tpu.memory_space<vmem>>, vector<1x32x32xf32>
    %254 = vector.shape_cast %253 : vector<1x32x32xf32> to vector<32x32xf32>
    %cst_101 = arith.constant dense<0.000000e+00> : vector<8x32xf32>
    %255 = tpu.matmul %252, %254, %cst_101 {dimension_numbers = #tpu.dot_dimension_numbers<[1], [0], [0], [1], [0, 0, 1, 1], [], []>} : vector<8x32xf32>, vector<32x32xf32>, vector<8x32xf32> -> vector<8x32xf32>
    %256 = vector.broadcast %165 : vector<1x32xf32> to vector<8x32xf32>
    %257 = arith.addf %255, %256 : vector<8x32xf32>
    %258 = arith.addf %161, %257 : vector<8x32xf32>
    %cst_102 = arith.constant dense<0.000000e+00> : vector<8xf32>
    %259 = vector.multi_reduction <add>, %258, %cst_102 [1] : vector<8x32xf32> to vector<8xf32>
    %260 = vector.shape_cast %259 : vector<8xf32> to vector<8x1xf32>
    %cst_103 = arith.constant 3.200000e+01 : f32
    %261 = vector.broadcast %cst_103 : f32 to vector<8x1xf32>
    %262 = arith.divf %260, %261 : vector<8x1xf32>
    %263 = vector.broadcast %262 : vector<8x1xf32> to vector<8x32xf32>
    %264 = arith.subf %258, %263 : vector<8x32xf32>
    %265 = arith.mulf %264, %264 : vector<8x32xf32>
    %cst_104 = arith.constant dense<0.000000e+00> : vector<8xf32>
    %266 = vector.multi_reduction <add>, %265, %cst_104 [1] : vector<8x32xf32> to vector<8xf32>
    %267 = vector.shape_cast %266 : vector<8xf32> to vector<8x1xf32>
    %cst_105 = arith.constant 3.200000e+01 : f32
    %268 = vector.broadcast %cst_105 : f32 to vector<8x1xf32>
    %269 = arith.divf %267, %268 : vector<8x1xf32>
    %270 = vector.broadcast %262 : vector<8x1xf32> to vector<8x32xf32>
    %271 = arith.subf %258, %270 : vector<8x32xf32>
    %cst_106 = arith.constant 9.99999974E-6 : f32
    %272 = vector.broadcast %cst_106 : f32 to vector<8x1xf32>
    %273 = arith.addf %269, %272 : vector<8x1xf32>
    %274 = math.rsqrt %273 : vector<8x1xf32>
    %275 = vector.broadcast %274 : vector<8x1xf32> to vector<8x32xf32>
    %276 = arith.mulf %271, %275 : vector<8x32xf32>
    %277 = vector.broadcast %168 : vector<1x32xf32> to vector<8x32xf32>
    %278 = arith.mulf %276, %277 : vector<8x32xf32>
    %279 = vector.broadcast %169 : vector<1x32xf32> to vector<8x32xf32>
    %280 = arith.addf %278, %279 : vector<8x32xf32>
    %c1_107 = arith.constant 1 : index
    %c0_108 = arith.constant 0 : index
    %c0_109 = arith.constant 0 : index
    %281 = vector.load %arg9[%c1_107, %c0_108, %c0_109] : memref<2x32x64xf32, #tpu.memory_space<vmem>>, vector<1x32x64xf32>
    %282 = vector.shape_cast %281 : vector<1x32x64xf32> to vector<32x64xf32>
    %cst_110 = arith.constant dense<0.000000e+00> : vector<8x64xf32>
    %283 = tpu.matmul %280, %282, %cst_110 {dimension_numbers = #tpu.dot_dimension_numbers<[1], [0], [0], [1], [0, 0, 1, 1], [], []>} : vector<8x32xf32>, vector<32x64xf32>, vector<8x64xf32> -> vector<8x64xf32>
    %284 = vector.broadcast %166 : vector<1x64xf32> to vector<8x64xf32>
    %285 = arith.addf %283, %284 : vector<8x64xf32>
    %cst_111 = arith.constant 0.000000e+00 : f32
    %286 = vector.broadcast %cst_111 : f32 to vector<8x64xf32>
    %287 = arith.maximumf %285, %286 : vector<8x64xf32>
    %c1_112 = arith.constant 1 : index
    %c0_113 = arith.constant 0 : index
    %c0_114 = arith.constant 0 : index
    %288 = vector.load %arg10[%c1_112, %c0_113, %c0_114] : memref<2x64x32xf32, #tpu.memory_space<vmem>>, vector<1x64x32xf32>
    %289 = vector.shape_cast %288 : vector<1x64x32xf32> to vector<64x32xf32>
    %cst_115 = arith.constant dense<0.000000e+00> : vector<8x32xf32>
    %290 = tpu.matmul %287, %289, %cst_115 {dimension_numbers = #tpu.dot_dimension_numbers<[1], [0], [0], [1], [0, 0, 1, 1], [], []>} : vector<8x64xf32>, vector<64x32xf32>, vector<8x32xf32> -> vector<8x32xf32>
    %291 = vector.broadcast %167 : vector<1x32xf32> to vector<8x32xf32>
    %292 = arith.addf %290, %291 : vector<8x32xf32>
    %293 = arith.addf %280, %292 : vector<8x32xf32>
    %cst_116 = arith.constant dense<0.000000e+00> : vector<8xf32>
    %294 = vector.multi_reduction <add>, %293, %cst_116 [1] : vector<8x32xf32> to vector<8xf32>
    %295 = vector.shape_cast %294 : vector<8xf32> to vector<8x1xf32>
    %cst_117 = arith.constant 3.200000e+01 : f32
    %296 = vector.broadcast %cst_117 : f32 to vector<8x1xf32>
    %297 = arith.divf %295, %296 : vector<8x1xf32>
    %298 = vector.broadcast %297 : vector<8x1xf32> to vector<8x32xf32>
    %299 = arith.subf %293, %298 : vector<8x32xf32>
    %300 = arith.mulf %299, %299 : vector<8x32xf32>
    %cst_118 = arith.constant dense<0.000000e+00> : vector<8xf32>
    %301 = vector.multi_reduction <add>, %300, %cst_118 [1] : vector<8x32xf32> to vector<8xf32>
    %302 = vector.shape_cast %301 : vector<8xf32> to vector<8x1xf32>
    %cst_119 = arith.constant 3.200000e+01 : f32
    %303 = vector.broadcast %cst_119 : f32 to vector<8x1xf32>
    %304 = arith.divf %302, %303 : vector<8x1xf32>
    %305 = vector.broadcast %297 : vector<8x1xf32> to vector<8x32xf32>
    %306 = arith.subf %293, %305 : vector<8x32xf32>
    %cst_120 = arith.constant 9.99999974E-6 : f32
    %307 = vector.broadcast %cst_120 : f32 to vector<8x1xf32>
    %308 = arith.addf %304, %307 : vector<8x1xf32>
    %309 = math.rsqrt %308 : vector<8x1xf32>
    %310 = vector.broadcast %309 : vector<8x1xf32> to vector<8x32xf32>
    %311 = arith.mulf %306, %310 : vector<8x32xf32>
    %312 = vector.broadcast %170 : vector<1x32xf32> to vector<8x32xf32>
    %313 = arith.mulf %311, %312 : vector<8x32xf32>
    %314 = vector.broadcast %171 : vector<1x32xf32> to vector<8x32xf32>
    %315 = arith.addf %313, %314 : vector<8x32xf32>
    %c0_121 = arith.constant 0 : index
    %c0_122 = arith.constant 0 : index
    %316 = vector.load %arg12[%c0_121, %c0_122] : memref<10x32xf32, #tpu.memory_space<vmem>>, vector<10x32xf32>
    %317 = vector.extract_strided_slice %316 {offsets = [0, 0], sizes = [8, 32], strides = [1, 1]} : vector<10x32xf32> to vector<8x32xf32>
    %318 = vector.extract_strided_slice %316 {offsets = [8, 0], sizes = [1, 32], strides = [1, 1]} : vector<10x32xf32> to vector<1x32xf32>
    %319 = vector.extract_strided_slice %316 {offsets = [9, 0], sizes = [1, 32], strides = [1, 1]} : vector<10x32xf32> to vector<1x32xf32>
    %cst_123 = arith.constant dense<0.000000e+00> : vector<8xf32>
    %320 = vector.multi_reduction <add>, %315, %cst_123 [1] : vector<8x32xf32> to vector<8xf32>
    %321 = vector.shape_cast %320 : vector<8xf32> to vector<8x1xf32>
    %cst_124 = arith.constant 3.200000e+01 : f32
    %322 = vector.broadcast %cst_124 : f32 to vector<8x1xf32>
    %323 = arith.divf %321, %322 : vector<8x1xf32>
    %324 = vector.broadcast %323 : vector<8x1xf32> to vector<8x32xf32>
    %325 = arith.subf %315, %324 : vector<8x32xf32>
    %326 = arith.mulf %325, %325 : vector<8x32xf32>
    %cst_125 = arith.constant dense<0.000000e+00> : vector<8xf32>
    %327 = vector.multi_reduction <add>, %326, %cst_125 [1] : vector<8x32xf32> to vector<8xf32>
    %328 = vector.shape_cast %327 : vector<8xf32> to vector<8x1xf32>
    %cst_126 = arith.constant 3.200000e+01 : f32
    %329 = vector.broadcast %cst_126 : f32 to vector<8x1xf32>
    %330 = arith.divf %328, %329 : vector<8x1xf32>
    %331 = vector.broadcast %323 : vector<8x1xf32> to vector<8x32xf32>
    %332 = arith.subf %315, %331 : vector<8x32xf32>
    %cst_127 = arith.constant 9.99999974E-6 : f32
    %333 = vector.broadcast %cst_127 : f32 to vector<8x1xf32>
    %334 = arith.addf %330, %333 : vector<8x1xf32>
    %335 = math.rsqrt %334 : vector<8x1xf32>
    %336 = vector.broadcast %335 : vector<8x1xf32> to vector<8x32xf32>
    %337 = arith.mulf %332, %336 : vector<8x32xf32>
    %338 = vector.broadcast %318 : vector<1x32xf32> to vector<8x32xf32>
    %339 = arith.mulf %337, %338 : vector<8x32xf32>
    %340 = vector.broadcast %319 : vector<1x32xf32> to vector<8x32xf32>
    %341 = arith.addf %339, %340 : vector<8x32xf32>
    %342 = arith.mulf %341, %317 : vector<8x32xf32>
    %cst_128 = arith.constant dense<0.000000e+00> : vector<8xf32>
    %343 = vector.multi_reduction <add>, %342, %cst_128 [1] : vector<8x32xf32> to vector<8xf32>
    %344 = vector.shape_cast %343 : vector<8xf32> to vector<8x1xf32>
    %c0_129 = arith.constant 0 : index
    %c0_130 = arith.constant 0 : index
    %345 = vector.load %arg13[%c0_129, %c0_130] : memref<1x1xf32, #tpu.memory_space<vmem>>, vector<1x1xf32>
    %346 = vector.broadcast %345 : vector<1x1xf32> to vector<8x1xf32>
    %347 = arith.addf %344, %346 : vector<8x1xf32>
    %c0_131 = arith.constant 0 : index
    %c0_132 = arith.constant 0 : index
    %c0_133 = arith.constant 0 : index
    %348 = vector.load %arg14[%c0_131, %c0_132, %c0_133] : memref<1x8x1xf32, #tpu.memory_space<vmem>>, vector<1x8x1xf32>
    %349 = vector.shape_cast %348 : vector<1x8x1xf32> to vector<8x1xf32>
    %350 = vector.shape_cast %347 : vector<8x1xf32> to vector<1x8x1xf32>
    tpu.vector_store %arg14[%c0_131, %c0_132, %c0_133], %350 {strides = array<i32>} : memref<1x8x1xf32, #tpu.memory_space<vmem>>, vector<1x8x1xf32>,
    return
  }
  func.func @transform_0(%arg0: i32) -> (i32, i32, i32) {
    %c0_i32 = arith.constant 0 : i32
    %c0_i32_0 = arith.constant 0 : i32
    %c0_i32_1 = arith.constant 0 : i32
    return %arg0, %c0_i32, %c0_i32_0 : i32, i32, i32
  }
  func.func @transform_1(%arg0: i32) -> (i32, i32) {
    %c0_i32 = arith.constant 0 : i32
    %c0_i32_0 = arith.constant 0 : i32
    %c0_i32_1 = arith.constant 0 : i32
    return %c0_i32, %c0_i32_0 : i32, i32
  }
  func.func @transform_2(%arg0: i32) -> (i32, i32) {
    %c0_i32 = arith.constant 0 : i32
    %c0_i32_0 = arith.constant 0 : i32
    %c0_i32_1 = arith.constant 0 : i32
    return %c0_i32, %c0_i32_0 : i32, i32
  }
  func.func @transform_3(%arg0: i32) -> (i32, i32) {
    %c0_i32 = arith.constant 0 : i32
    %c0_i32_0 = arith.constant 0 : i32
    %c0_i32_1 = arith.constant 0 : i32
    return %c0_i32, %c0_i32_0 : i32, i32
  }
  func.func @transform_4(%arg0: i32) -> (i32, i32, i32) {
    %c0_i32 = arith.constant 0 : i32
    %c0_i32_0 = arith.constant 0 : i32
    %c0_i32_1 = arith.constant 0 : i32
    %c0_i32_2 = arith.constant 0 : i32
    return %c0_i32, %c0_i32_0, %c0_i32_1 : i32, i32, i32
  }
  func.func @transform_5(%arg0: i32) -> (i32, i32, i32) {
    %c0_i32 = arith.constant 0 : i32
    %c0_i32_0 = arith.constant 0 : i32
    %c0_i32_1 = arith.constant 0 : i32
    %c0_i32_2 = arith.constant 0 : i32
    return %c0_i32, %c0_i32_0, %c0_i32_1 : i32, i32, i32
  }
  func.func @transform_6(%arg0: i32) -> (i32, i32, i32) {
    %c0_i32 = arith.constant 0 : i32
    %c0_i32_0 = arith.constant 0 : i32
    %c0_i32_1 = arith.constant 0 : i32
    %c0_i32_2 = arith.constant 0 : i32
    return %c0_i32, %c0_i32_0, %c0_i32_1 : i32, i32, i32
  }
  func.func @transform_7(%arg0: i32) -> (i32, i32, i32) {
    %c0_i32 = arith.constant 0 : i32
    %c0_i32_0 = arith.constant 0 : i32
    %c0_i32_1 = arith.constant 0 : i32
    %c0_i32_2 = arith.constant 0 : i32
    return %c0_i32, %c0_i32_0, %c0_i32_1 : i32, i32, i32
  }
  func.func @transform_8(%arg0: i32) -> (i32, i32, i32) {
    %c0_i32 = arith.constant 0 : i32
    %c0_i32_0 = arith.constant 0 : i32
    %c0_i32_1 = arith.constant 0 : i32
    %c0_i32_2 = arith.constant 0 : i32
    return %c0_i32, %c0_i32_0, %c0_i32_1 : i32, i32, i32
  }
  func.func @transform_9(%arg0: i32) -> (i32, i32, i32) {
    %c0_i32 = arith.constant 0 : i32
    %c0_i32_0 = arith.constant 0 : i32
    %c0_i32_1 = arith.constant 0 : i32
    %c0_i32_2 = arith.constant 0 : i32
    return %c0_i32, %c0_i32_0, %c0_i32_1 : i32, i32, i32
  }
  func.func @transform_10(%arg0: i32) -> (i32, i32, i32) {
    %c0_i32 = arith.constant 0 : i32
    %c0_i32_0 = arith.constant 0 : i32
    %c0_i32_1 = arith.constant 0 : i32
    %c0_i32_2 = arith.constant 0 : i32
    return %c0_i32, %c0_i32_0, %c0_i32_1 : i32, i32, i32
  }
  func.func @transform_11(%arg0: i32) -> (i32, i32) {
    %c0_i32 = arith.constant 0 : i32
    %c0_i32_0 = arith.constant 0 : i32
    %c0_i32_1 = arith.constant 0 : i32
    return %c0_i32, %c0_i32_0 : i32, i32
  }
  func.func @transform_12(%arg0: i32) -> (i32, i32) {
    %c0_i32 = arith.constant 0 : i32
    %c0_i32_0 = arith.constant 0 : i32
    %c0_i32_1 = arith.constant 0 : i32
    return %c0_i32, %c0_i32_0 : i32, i32
  }
  func.func @transform_13(%arg0: i32) -> (i32, i32, i32) {
    %c0_i32 = arith.constant 0 : i32
    %c0_i32_0 = arith.constant 0 : i32
    %c0_i32_1 = arith.constant 0 : i32
    return %arg0, %c0_i32, %c0_i32_0 : i32, i32, i32
  }
}

</mosaic_0001>

<llo_original>
// kernel: trimodal_forward.1
$region0: #{trimodal_forward.1}
  #allocation0 [shape = 'u32[]', space=smem, size = 0x4, offset = 0x4, fixed_abs, tag = 'smem constant byte address 0x4 - core index']
  #allocation1 [shape = 'u32[144,128]{1,0:T(1,128)}', space=vmem, size = 0x12000, scoped, tag = 'internal scratch']
  #allocation2 [shape = 'f32[1,1]{1,0:T(1,128)S(1)}', space=vmem, size = 0x200, scoped, tag = 'scoped memory for trimodal_forward.1']
  %s0 = inlined_call_operand.vmem [shape: f32[2,2048,16], index: 0, kind: input, shape index: {}]
  %s1 = inlined_call_operand.vmem [shape: f32[32,2048], index: 1, kind: input, shape index: {}]
  %s2 = inlined_call_operand.vmem [shape: f32[32,1], index: 2, kind: input, shape index: {}]
  %s3 = inlined_call_operand.vmem [shape: f32[8,32], index: 3, kind: input, shape index: {}]
  %s4 = inlined_call_operand.vmem [shape: f32[2,32,32], index: 4, kind: input, shape index: {}]
  %s5 = inlined_call_operand.vmem [shape: f32[2,64,32], index: 5, kind: input, shape index: {}]
  %s6 = inlined_call_operand.vmem [shape: f32[2,64,1], index: 6, kind: input, shape index: {}]
  %s7 = inlined_call_operand.vmem [shape: f32[2,32,32], index: 7, kind: input, shape index: {}]
  %s8 = inlined_call_operand.vmem [shape: f32[2,32,64], index: 8, kind: input, shape index: {}]
  %s9 = inlined_call_operand.vmem [shape: f32[2,64,32], index: 9, kind: input, shape index: {}]
  %s10 = inlined_call_operand.vmem [shape: f32[2,8,64], index: 10, kind: input, shape index: {}]
  %s11 = inlined_call_operand.vmem [shape: f32[10,32], index: 11, kind: input, shape index: {}]
  %s12 = inlined_call_operand.<no memory space> [shape: f32[1,1], index: 12, kind: input, shape index: {}]
  %s13 = inlined_call_operand.vmem [shape: f32[2,8,1], index: 13, kind: output, shape index: {}]
  %s14 = sld [smem:[#allocation0]]
  $region85: #{trimodal_forward.1} parent=0
    _
  %s16 = ssub.s32 1, %s14
  %s17 = scalar_select 0, %s16, %s14
  %v18 = vstv %s12
  %19 = vst [vmem:[#allocation2] sm:$0x1] %v18
  loop: start=0, step=1, limit=4
  $region2: #{trimodal_forward.1} parent=0 // loop_pre_header
    _
  $region3: #{trimodal_forward.1} parent=0 // loop_header
    %s21 = sphi 0, %s25
    %p22 = scmp.ge.s32.totalorder %s21, 4
    %s31 = sphi 0, %s33
    %s34 = sphi 0, %s31
    %s35 = sphi 0, %s34
    %s51 = sphi 0, %s35
    %s55 = sphi 0, %s55
    %s57 = sphi 0, %s55
    %s58 = sphi 0, %s57
    %s72 = sphi 0, %s58
    %s76 = sphi 0, %s76
    %s78 = sphi 0, %s76
    %s79 = sphi 0, %s78
    %s93 = sphi 0, %s79
    %s97 = sphi 0, %s97
    %s99 = sphi 0, %s97
    %s100 = sphi 0, %s99
    %s114 = sphi 0, %s100
    %s118 = sphi 0, %s118
    %s120 = sphi 0, %s118
    %s121 = sphi 0, %s120
    %s135 = sphi 0, %s121
    %s139 = sphi 0, %s139
    %s141 = sphi 0, %s139
    %s142 = sphi 0, %s141
    %s156 = sphi 0, %s142
    %s160 = sphi 0, %s160
    %s162 = sphi 0, %s160
    %s163 = sphi 0, %s162
    %s177 = sphi 0, %s163
    %s181 = sphi 0, %s181
    %s183 = sphi 0, %s181
    %s184 = sphi 0, %s183
    %s198 = sphi 0, %s184
    %s202 = sphi 0, %s202
    %s204 = sphi 0, %s202
    %s205 = sphi 0, %s204
    %s219 = sphi 0, %s205
    %s223 = sphi 0, %s223
    %s225 = sphi 0, %s223
    %s226 = sphi 0, %s225
    %s240 = sphi 0, %s226
    %s244 = sphi 0, %s244
    %s246 = sphi 0, %s244
    %s247 = sphi 0, %s246
    %s261 = sphi 0, %s247
    %s265 = sphi 0, %s265
    %s267 = sphi 0, %s265
    %s268 = sphi 0, %s267
    %s282 = sphi 0, %s268
    %s286 = sphi 0, %s286
    %s288 = sphi 0, %s286
    %s289 = sphi 0, %s288
    %s303 = sphi 0, %s289
    %s309 = sphi 0, %s311
    %s312 = sphi 0, %s309
    %s313 = sphi 0, %s312
    %s329 = sphi 0, %s313
  $region4: #{trimodal_forward.1} parent=0 // loop_header_branch
    %24 = sbr.rel (%p22) target = $region8
  $region5: #{trimodal_forward.1} parent=0 // loop_body
    %s26 = ssub.s32 %s21, 1
    %s27 = ssub.s32 %s21, 2
    %s28 = sadd.s32 %s21, 1
    %s29 = ssub.s32 %s21, %s28
    %p30 = scmp.eq.s32.totalorder %s29, 0
    %s32 = sadd.s32 %s31, 1
    %s33 = scalar_select %p30, %s31, %s32
    %p36 = pneg %p30
    %p37 = scmp.eq.s32.totalorder %s21, 1
    %p38 = por %p36, %p37
    %p39 = scmp.ne.s32.totalorder %s31, %s34
    %p40 = scmp.eq.s32.totalorder %s21, 0
    %p41 = por %p39, %p40
    %p42 = scmp.ne.s32.totalorder %s31, %s34
    %p43 = scmp.eq.s32.totalorder %s26, 1
    %p44 = por %p42, %p43
    %p45 = scmp.ne.s32.totalorder %s34, %s35
    %p46 = scmp.eq.s32.totalorder %s26, 0
    %p47 = por %p45, %p46
    %p48 = scmp.ne.s32.totalorder %s34, %s35
    %p49 = scmp.eq.s32.totalorder %s27, 1
    %p50 = por %p48, %p49
    %p52 = scmp.ne.s32.totalorder %s35, %s51
    %p53 = scmp.eq.s32.totalorder %s27, 0
    %p54 = por %p52, %p53
    %s56 = sadd.s32 %s55, 1
    %p59 = scmp.eq.s32.totalorder %s21, 1
    %p60 = scmp.ne.s32.totalorder %s55, %s57
    %p61 = scmp.eq.s32.totalorder %s21, 0
    %p62 = por %p60, %p61
    %p63 = scmp.ne.s32.totalorder %s55, %s57
    %p64 = scmp.eq.s32.totalorder %s26, 1
    %p65 = por %p63, %p64
    %p66 = scmp.ne.s32.totalorder %s57, %s58
    %p67 = scmp.eq.s32.totalorder %s26, 0
    %p68 = por %p66, %p67
    %p69 = scmp.ne.s32.totalorder %s57, %s58
    %p70 = scmp.eq.s32.totalorder %s27, 1
    %p71 = por %p69, %p70
    %p73 = scmp.ne.s32.totalorder %s58, %s72
    %p74 = scmp.eq.s32.totalorder %s27, 0
    %p75 = por %p73, %p74
    %s77 = sadd.s32 %s76, 1
    %p80 = scmp.eq.s32.totalorder %s21, 1
    %p81 = scmp.ne.s32.totalorder %s76, %s78
    %p82 = scmp.eq.s32.totalorder %s21, 0
    %p83 = por %p81, %p82
    %p84 = scmp.ne.s32.totalorder %s76, %s78
    %p85 = scmp.eq.s32.totalorder %s26, 1
    %p86 = por %p84, %p85
    %p87 = scmp.ne.s32.totalorder %s78, %s79
    %p88 = scmp.eq.s32.totalorder %s26, 0
    %p89 = por %p87, %p88
    %p90 = scmp.ne.s32.totalorder %s78, %s79
    %p91 = scmp.eq.s32.totalorder %s27, 1
    %p92 = por %p90, %p91
    %p94 = scmp.ne.s32.totalorder %s79, %s93
    %p95 = scmp.eq.s32.totalorder %s27, 0
    %p96 = por %p94, %p95
    %s98 = sadd.s32 %s97, 1
    %p101 = scmp.eq.s32.totalorder %s21, 1
    %p102 = scmp.ne.s32.totalorder %s97, %s99
    %p103 = scmp.eq.s32.totalorder %s21, 0
    %p104 = por %p102, %p103
    %p105 = scmp.ne.s32.totalorder %s97, %s99
    %p106 = scmp.eq.s32.totalorder %s26, 1
    %p107 = por %p105, %p106
    %p108 = scmp.ne.s32.totalorder %s99, %s100
    %p109 = scmp.eq.s32.totalorder %s26, 0
    %p110 = por %p108, %p109
    %p111 = scmp.ne.s32.totalorder %s99, %s100
    %p112 = scmp.eq.s32.totalorder %s27, 1
    %p113 = por %p111, %p112
    %p115 = scmp.ne.s32.totalorder %s100, %s114
    %p116 = scmp.eq.s32.totalorder %s27, 0
    %p117 = por %p115, %p116
    %s119 = sadd.s32 %s118, 1
    %p122 = scmp.eq.s32.totalorder %s21, 1
    %p123 = scmp.ne.s32.totalorder %s118, %s120
    %p124 = scmp.eq.s32.totalorder %s21, 0
    %p125 = por %p123, %p124
    %p126 = scmp.ne.s32.totalorder %s118, %s120
    %p127 = scmp.eq.s32.totalorder %s26, 1
    %p128 = por %p126, %p127
    %p129 = scmp.ne.s32.totalorder %s120, %s121
    %p130 = scmp.eq.s32.totalorder %s26, 0
    %p131 = por %p129, %p130
    %p132 = scmp.ne.s32.totalorder %s120, %s121
    %p133 = scmp.eq.s32.totalorder %s27, 1
    %p134 = por %p132, %p133
    %p136 = scmp.ne.s32.totalorder %s121, %s135
    %p137 = scmp.eq.s32.totalorder %s27, 0
    %p138 = por %p136, %p137
    %s140 = sadd.s32 %s139, 1
    %p143 = scmp.eq.s32.totalorder %s21, 1
    %p144 = scmp.ne.s32.totalorder %s139, %s141
    %p145 = scmp.eq.s32.totalorder %s21, 0
    %p146 = por %p144, %p145
    %p147 = scmp.ne.s32.totalorder %s139, %s141
    %p148 = scmp.eq.s32.totalorder %s26, 1
    %p149 = por %p147, %p148
    %p150 = scmp.ne.s32.totalorder %s141, %s142
    %p151 = scmp.eq.s32.totalorder %s26, 0
    %p152 = por %p150, %p151
    %p153 = scmp.ne.s32.totalorder %s141, %s142
    %p154 = scmp.eq.s32.totalorder %s27, 1
    %p155 = por %p153, %p154
    %p157 = scmp.ne.s32.totalorder %s142, %s156
    %p158 = scmp.eq.s32.totalorder %s27, 0
    %p159 = por %p157, %p158
    %s161 = sadd.s32 %s160, 1
    %p164 = scmp.eq.s32.totalorder %s21, 1
    %p165 = scmp.ne.s32.totalorder %s160, %s162
    %p166 = scmp.eq.s32.totalorder %s21, 0
    %p167 = por %p165, %p166
    %p168 = scmp.ne.s32.totalorder %s160, %s162
    %p169 = scmp.eq.s32.totalorder %s26, 1
    %p170 = por %p168, %p169
    %p171 = scmp.ne.s32.totalorder %s162, %s163
    %p172 = scmp.eq.s32.totalorder %s26, 0
    %p173 = por %p171, %p172
    %p174 = scmp.ne.s32.totalorder %s162, %s163
    %p175 = scmp.eq.s32.totalorder %s27, 1
    %p176 = por %p174, %p175
    %p178 = scmp.ne.s32.totalorder %s163, %s177
    %p179 = scmp.eq.s32.totalorder %s27, 0
    %p180 = por %p178, %p179
    %s182 = sadd.s32 %s181, 1
    %p185 = scmp.eq.s32.totalorder %s21, 1
    %p186 = scmp.ne.s32.totalorder %s181, %s183
    %p187 = scmp.eq.s32.totalorder %s21, 0
    %p188 = por %p186, %p187
    %p189 = scmp.ne.s32.totalorder %s181, %s183
    %p190 = scmp.eq.s32.totalorder %s26, 1
    %p191 = por %p189, %p190
    %p192 = scmp.ne.s32.totalorder %s183, %s184
    %p193 = scmp.eq.s32.totalorder %s26, 0
    %p194 = por %p192, %p193
    %p195 = scmp.ne.s32.totalorder %s183, %s184
    %p196 = scmp.eq.s32.totalorder %s27, 1
    %p197 = por %p195, %p196
    %p199 = scmp.ne.s32.totalorder %s184, %s198
    %p200 = scmp.eq.s32.totalorder %s27, 0
    %p201 = por %p199, %p200
    %s203 = sadd.s32 %s202, 1
    %p206 = scmp.eq.s32.totalorder %s21, 1
    %p207 = scmp.ne.s32.totalorder %s202, %s204
    %p208 = scmp.eq.s32.totalorder %s21, 0
    %p209 = por %p207, %p208
    %p210 = scmp.ne.s32.totalorder %s202, %s204
    %p211 = scmp.eq.s32.totalorder %s26, 1
    %p212 = por %p210, %p211
    %p213 = scmp.ne.s32.totalorder %s204, %s205
    %p214 = scmp.eq.s32.totalorder %s26, 0
    %p215 = por %p213, %p214
    %p216 = scmp.ne.s32.totalorder %s204, %s205
    %p217 = scmp.eq.s32.totalorder %s27, 1
    %p218 = por %p216, %p217
    %p220 = scmp.ne.s32.totalorder %s205, %s219
    %p221 = scmp.eq.s32.totalorder %s27, 0
    %p222 = por %p220, %p221
    %s224 = sadd.s32 %s223, 1
    %p227 = scmp.eq.s32.totalorder %s21, 1
    %p228 = scmp.ne.s32.totalorder %s223, %s225
    %p229 = scmp.eq.s32.totalorder %s21, 0
    %p230 = por %p228, %p229
    %p231 = scmp.ne.s32.totalorder %s223, %s225
    %p232 = scmp.eq.s32.totalorder %s26, 1
    %p233 = por %p231, %p232
    %p234 = scmp.ne.s32.totalorder %s225, %s226
    %p235 = scmp.eq.s32.totalorder %s26, 0
    %p236 = por %p234, %p235
    %p237 = scmp.ne.s32.totalorder %s225, %s226
    %p238 = scmp.eq.s32.totalorder %s27, 1
    %p239 = por %p237, %p238
    %p241 = scmp.ne.s32.totalorder %s226, %s240
    %p242 = scmp.eq.s32.totalorder %s27, 0
    %p243 = por %p241, %p242
    %s245 = sadd.s32 %s244, 1
    %p248 = scmp.eq.s32.totalorder %s21, 1
    %p249 = scmp.ne.s32.totalorder %s244, %s246
    %p250 = scmp.eq.s32.totalorder %s21, 0
    %p251 = por %p249, %p250
    %p252 = scmp.ne.s32.totalorder %s244, %s246
    %p253 = scmp.eq.s32.totalorder %s26, 1
    %p254 = por %p252, %p253
    %p255 = scmp.ne.s32.totalorder %s246, %s247
    %p256 = scmp.eq.s32.totalorder %s26, 0
    %p257 = por %p255, %p256
    %p258 = scmp.ne.s32.totalorder %s246, %s247
    %p259 = scmp.eq.s32.totalorder %s27, 1
    %p260 = por %p258, %p259
    %p262 = scmp.ne.s32.totalorder %s247, %s261
    %p263 = scmp.eq.s32.totalorder %s27, 0
    %p264 = por %p262, %p263
    %s266 = sadd.s32 %s265, 1
    %p269 = scmp.eq.s32.totalorder %s21, 1
    %p270 = scmp.ne.s32.totalorder %s265, %s267
    %p271 = scmp.eq.s32.totalorder %s21, 0
    %p272 = por %p270, %p271
    %p273 = scmp.ne.s32.totalorder %s265, %s267
    %p274 = scmp.eq.s32.totalorder %s26, 1
    %p275 = por %p273, %p274
    %p276 = scmp.ne.s32.totalorder %s267, %s268
    %p277 = scmp.eq.s32.totalorder %s26, 0
    %p278 = por %p276, %p277
    %p279 = scmp.ne.s32.totalorder %s267, %s268
    %p280 = scmp.eq.s32.totalorder %s27, 1
    %p281 = por %p279, %p280
    %p283 = scmp.ne.s32.totalorder %s268, %s282
    %p284 = scmp.eq.s32.totalorder %s27, 0
    %p285 = por %p283, %p284
    %s287 = sadd.s32 %s286, 1
    %p290 = scmp.eq.s32.totalorder %s21, 1
    %p291 = scmp.ne.s32.totalorder %s286, %s288
    %p292 = scmp.eq.s32.totalorder %s21, 0
    %p293 = por %p291, %p292
    %p294 = scmp.ne.s32.totalorder %s286, %s288
    %p295 = scmp.eq.s32.totalorder %s26, 1
    %p296 = por %p294, %p295
    %p297 = scmp.ne.s32.totalorder %s288, %s289
    %p298 = scmp.eq.s32.totalorder %s26, 0
    %p299 = por %p297, %p298
    %p300 = scmp.ne.s32.totalorder %s288, %s289
    %p301 = scmp.eq.s32.totalorder %s27, 1
    %p302 = por %p300, %p301
    %p304 = scmp.ne.s32.totalorder %s289, %s303
    %p305 = scmp.eq.s32.totalorder %s27, 0
    %p306 = por %p304, %p305
    %s307 = ssub.s32 %s21, %s28
    %p308 = scmp.eq.s32.totalorder %s307, 0
    %s310 = sadd.s32 %s309, 1
    %s311 = scalar_select %p308, %s309, %s310
    %p314 = pneg %p308
    %p315 = scmp.eq.s32.totalorder %s21, 1
    %p316 = por %p314, %p315
    %p317 = scmp.ne.s32.totalorder %s309, %s312
    %p318 = scmp.eq.s32.totalorder %s21, 0
    %p319 = por %p317, %p318
    %p320 = scmp.ne.s32.totalorder %s309, %s312
    %p321 = scmp.eq.s32.totalorder %s26, 1
    %p322 = por %p320, %p321
    %p323 = scmp.ne.s32.totalorder %s312, %s313
    %p324 = scmp.eq.s32.totalorder %s26, 0
    %p325 = por %p323, %p324
    %p326 = scmp.ne.s32.totalorder %s312, %s313
    %p327 = scmp.eq.s32.totalorder %s27, 1
    %p328 = por %p326, %p327
    %p330 = scmp.ne.s32.totalorder %s313, %s329
    %p331 = scmp.eq.s32.totalorder %s27, 0
    %p332 = por %p330, %p331
    %p333 = scmp.le.s32.totalorder 1, %s21
    %p334 = scmp.lt.s32.totalorder %s21, 3
    %p335 = pnand %p333, %p334
    %p336 = pneg %p335
    // Predicated region
    $region9: #{trimodal_forward.1} parent=5 // pred_check
      _
    $region10: #{trimodal_forward.1} parent=5 // pred_check_branch
      %338 = sbr.rel (%p335) target = $region12
    $region11: #{trimodal_forward.1} parent=5 // pred_region
      %s339 = ssub.s32 %s21, 1
      // Predicated region
      $region13: #{trimodal_forward.1} parent=11 // pred_check
        %p340 = pneg %p68
      $region14: #{trimodal_forward.1} parent=11 // pred_check_branch
        %342 = sbr.rel (%p340) target = $region16
      $region15: #{trimodal_forward.1} parent=11 // pred_region
        _
      $region16: #{trimodal_forward.1} parent=11 // pred_fallthru
        _
      // Predicated region
      $region17: #{trimodal_forward.1} parent=11 // pred_check
        %p343 = pneg %p89
      $region18: #{trimodal_forward.1} parent=11 // pred_check_branch
        %345 = sbr.rel (%p343) target = $region20
      $region19: #{trimodal_forward.1} parent=11 // pred_region
        _
      $region20: #{trimodal_forward.1} parent=11 // pred_fallthru
        _
      // Predicated region
      $region21: #{trimodal_forward.1} parent=11 // pred_check
        %p346 = pneg %p110
      $region22: #{trimodal_forward.1} parent=11 // pred_check_branch
        %348 = sbr.rel (%p346) target = $region24
      $region23: #{trimodal_forward.1} parent=11 // pred_region
        _
      $region24: #{trimodal_forward.1} parent=11 // pred_fallthru
        _
      // Predicated region
      $region25: #{trimodal_forward.1} parent=11 // pred_check
        %p349 = pneg %p131
      $region26: #{trimodal_forward.1} parent=11 // pred_check_branch
        %351 = sbr.rel (%p349) target = $region28
      $region27: #{trimodal_forward.1} parent=11 // pred_region
        _
      $region28: #{trimodal_forward.1} parent=11 // pred_fallthru
        _
      // Predicated region
      $region29: #{trimodal_forward.1} parent=11 // pred_check
        %p352 = pneg %p152
      $region30: #{trimodal_forward.1} parent=11 // pred_check_branch
        %354 = sbr.rel (%p352) target = $region32
      $region31: #{trimodal_forward.1} parent=11 // pred_region
        _
      $region32: #{trimodal_forward.1} parent=11 // pred_fallthru
        _
      // Predicated region
      $region33: #{trimodal_forward.1} parent=11 // pred_check
        %p355 = pneg %p173
      $region34: #{trimodal_forward.1} parent=11 // pred_check_branch
        %357 = sbr.rel (%p355) target = $region36
      $region35: #{trimodal_forward.1} parent=11 // pred_region
        _
      $region36: #{trimodal_forward.1} parent=11 // pred_fallthru
        _
      // Predicated region
      $region37: #{trimodal_forward.1} parent=11 // pred_check
        %p358 = pneg %p194
      $region38: #{trimodal_forward.1} parent=11 // pred_check_branch
        %360 = sbr.rel (%p358) target = $region40
      $region39: #{trimodal_forward.1} parent=11 // pred_region
        _
      $region40: #{trimodal_forward.1} parent=11 // pred_fallthru
        _
      // Predicated region
      $region41: #{trimodal_forward.1} parent=11 // pred_check
        %p361 = pneg %p215
      $region42: #{trimodal_forward.1} parent=11 // pred_check_branch
        %363 = sbr.rel (%p361) target = $region44
      $region43: #{trimodal_forward.1} parent=11 // pred_region
        _
      $region44: #{trimodal_forward.1} parent=11 // pred_fallthru
        _
      // Predicated region
      $region45: #{trimodal_forward.1} parent=11 // pred_check
        %p364 = pneg %p236
      $region46: #{trimodal_forward.1} parent=11 // pred_check_branch
        %366 = sbr.rel (%p364) target = $region48
      $region47: #{trimodal_forward.1} parent=11 // pred_region
        _
      $region48: #{trimodal_forward.1} parent=11 // pred_fallthru
        _
      // Predicated region
      $region49: #{trimodal_forward.1} parent=11 // pred_check
        %p367 = pneg %p257
      $region50: #{trimodal_forward.1} parent=11 // pred_check_branch
        %369 = sbr.rel (%p367) target = $region52
      $region51: #{trimodal_forward.1} parent=11 // pred_region
        _
      $region52: #{trimodal_forward.1} parent=11 // pred_fallthru
        _
      // Predicated region
      $region53: #{trimodal_forward.1} parent=11 // pred_check
        %p370 = pneg %p278
      $region54: #{trimodal_forward.1} parent=11 // pred_check_branch
        %372 = sbr.rel (%p370) target = $region56
      $region55: #{trimodal_forward.1} parent=11 // pred_region
        _
      $region56: #{trimodal_forward.1} parent=11 // pred_fallthru
        _
      // Predicated region
      $region57: #{trimodal_forward.1} parent=11 // pred_check
        %p373 = pneg %p299
      $region58: #{trimodal_forward.1} parent=11 // pred_check_branch
        %375 = sbr.rel (%p373) target = $region60
      $region59: #{trimodal_forward.1} parent=11 // pred_region
        _
      $region60: #{trimodal_forward.1} parent=11 // pred_fallthru
        _
    $region12: #{trimodal_forward.1} parent=5 // pred_fallthru
      _
    %p376 = scmp.lt.s32.totalorder %s21, 2
    // Predicated region
    $region61: #{trimodal_forward.1} parent=5 // pred_check
      %p377 = pneg %p376
    $region62: #{trimodal_forward.1} parent=5 // pred_check_branch
      %379 = sbr.rel (%p377) target = $region64
    $region63: #{trimodal_forward.1} parent=5 // pred_region
      // Predicated region
      $region65: #{trimodal_forward.1} parent=63 // pred_check
        %p380 = pneg %p41
      $region66: #{trimodal_forward.1} parent=63 // pred_check_branch
        %382 = sbr.rel (%p380) target = $region68
      $region67: #{trimodal_forward.1} parent=63 // pred_region
        %p383 = scmp.lt.s32.totalorder %s21, 1
        %s384 = scalar_select %p383, %s21, 1
        %s385 = smul.addr %s384, 256
        %s386 = smul.addr %s385, 8
        %s387 = scalar_lea.vmem %s0, %s386
      $region68: #{trimodal_forward.1} parent=63 // pred_fallthru
        _
    $region64: #{trimodal_forward.1} parent=5 // pred_fallthru
      _
    %p388 = scmp.le.s32.totalorder 1, %s21
    %p389 = scmp.lt.s32.totalorder %s21, 3
    %p390 = pnand %p388, %p389
    %p391 = pneg %p390
    // Predicated region
    $region69: #{trimodal_forward.1} parent=5 // pred_check
      _
    $region70: #{trimodal_forward.1} parent=5 // pred_check_branch
      %393 = sbr.rel (%p390) target = $region72
    $region71: #{trimodal_forward.1} parent=5 // pred_region
      %s394 = ssub.s32 %s21, 1
      %p395 = scmp.lt.s32.totalorder %s26, 1
      %s396 = scalar_select %p395, %s26, 1
      %s397 = smul.addr %s396, 256
      %s398 = smul.addr %s397, 8
      %s399 = scalar_lea.vmem %s0, %s398
      %p400 = pneg %p47
      %p401 = pneg %p44
      %p402 = pneg %p68
      %p403 = pneg %p65
      %p404 = pneg %p89
      %p405 = pneg %p86
      %p406 = pneg %p110
      %p407 = pneg %p107
      %p408 = pneg %p131
      %p409 = pneg %p128
      %p410 = pneg %p152
      %p411 = pneg %p149
      %p412 = pneg %p173
      %p413 = pneg %p170
      %p414 = pneg %p194
      %p415 = pneg %p191
      %p416 = pneg %p215
      %p417 = pneg %p212
      %p418 = pneg %p236
      %p419 = pneg %p233
      %p420 = pneg %p257
      %p421 = pneg %p254
      %p422 = pneg %p278
      %p423 = pneg %p275
      %p424 = pneg %p299
      %p425 = pneg %p296
      %p426 = pneg %p325
      %p427 = pneg %p322
      %p428 = scmp.lt.s32.totalorder %s26, 1
      %s429 = scalar_select %p428, %s26, 1
      %s430 = smul.addr %s429, 8
      %s431 = scalar_lea.vmem %s13, %s430
      %p432 = scmp.lt.s32.totalorder %s26, 1
      %s433 = scalar_select %p432, %s26, 1
      %s434 = smul.addr %s433, 256
      %s435 = smul.addr %s434, 8
      %s436 = scalar_lea.vmem %s0, %s435
      %p437 = scmp.lt.s32.totalorder %s26, 1
      %s438 = scalar_select %p437, %s26, 1
      %s439 = smul.addr %s438, 8
      %s440 = scalar_lea.vmem %s13, %s439
      %v441 = vld [vmem:[%s1] sm:$0xff]
      %v442 = vld [vmem:[%s1 + $0x8] sm:$0xff]
      %v443 = vld [vmem:[%s1 + $0x10] sm:$0xff]
      %v444 = vld [vmem:[%s1 + $0x18] sm:$0xff]
      %v445 = vld [vmem:[%s1 + $0x20] sm:$0xff]
      %v446 = vld [vmem:[%s1 + $0x28] sm:$0xff]
      %v447 = vld [vmem:[%s1 + $0x30] sm:$0xff]
      %v448 = vld [vmem:[%s1 + $0x38] sm:$0xff]
      %v449 = vld [vmem:[%s1 + $0x40] sm:$0xff]
      %v450 = vld [vmem:[%s1 + $0x48] sm:$0xff]
      %v451 = vld [vmem:[%s1 + $0x50] sm:$0xff]
      %v452 = vld [vmem:[%s1 + $0x58] sm:$0xff]
      %v453 = vld [vmem:[%s1 + $0x60] sm:$0xff]
      %v454 = vld [vmem:[%s1 + $0x68] sm:$0xff]
      %v455 = vld [vmem:[%s1 + $0x70] sm:$0xff]
      %v456 = vld [vmem:[%s1 + $0x78] sm:$0xff]
      %v457 = vld [vmem:[%s1 + $0x80] sm:$0xff]
      %v458 = vld [vmem:[%s1 + $0x88] sm:$0xff]
      %v459 = vld [vmem:[%s1 + $0x90] sm:$0xff]
      %v460 = vld [vmem:[%s1 + $0x98] sm:$0xff]
      %v461 = vld [vmem:[%s1 + $0xa0] sm:$0xff]
      %v462 = vld [vmem:[%s1 + $0xa8] sm:$0xff]
      %v463 = vld [vmem:[%s1 + $0xb0] sm:$0xff]
      %v464 = vld [vmem:[%s1 + $0xb8] sm:$0xff]
      %v465 = vld [vmem:[%s1 + $0xc0] sm:$0xff]
      %v466 = vld [vmem:[%s1 + $0xc8] sm:$0xff]
      %v467 = vld [vmem:[%s1 + $0xd0] sm:$0xff]
      %v468 = vld [vmem:[%s1 + $0xd8] sm:$0xff]
      %v469 = vld [vmem:[%s1 + $0xe0] sm:$0xff]
      %v470 = vld [vmem:[%s1 + $0xe8] sm:$0xff]
      %v471 = vld [vmem:[%s1 + $0xf0] sm:$0xff]
      %v472 = vld [vmem:[%s1 + $0xf8] sm:$0xff]
      %v473 = vld [vmem:[%s1 + $0x100] sm:$0xff]
      %v474 = vld [vmem:[%s1 + $0x108] sm:$0xff]
      %v475 = vld [vmem:[%s1 + $0x110] sm:$0xff]
      %v476 = vld [vmem:[%s1 + $0x118] sm:$0xff]
      %v477 = vld [vmem:[%s1 + $0x120] sm:$0xff]
      %v478 = vld [vmem:[%s1 + $0x128] sm:$0xff]
      %v479 = vld [vmem:[%s1 + $0x130] sm:$0xff]
      %v480 = vld [vmem:[%s1 + $0x138] sm:$0xff]
      %v481 = vld [vmem:[%s1 + $0x140] sm:$0xff]
      %v482 = vld [vmem:[%s1 + $0x148] sm:$0xff]
      %v483 = vld [vmem:[%s1 + $0x150] sm:$0xff]
      %v484 = vld [vmem:[%s1 + $0x158] sm:$0xff]
      %v485 = vld [vmem:[%s1 + $0x160] sm:$0xff]
      %v486 = vld [vmem:[%s1 + $0x168] sm:$0xff]
      %v487 = vld [vmem:[%s1 + $0x170] sm:$0xff]
      %v488 = vld [vmem:[%s1 + $0x178] sm:$0xff]
      %v489 = vld [vmem:[%s1 + $0x180] sm:$0xff]
      %v490 = vld [vmem:[%s1 + $0x188] sm:$0xff]
      %v491 = vld [vmem:[%s1 + $0x190] sm:$0xff]
      %v492 = vld [vmem:[%s1 + $0x198] sm:$0xff]
      %v493 = vld [vmem:[%s1 + $0x1a0] sm:$0xff]
      %v494 = vld [vmem:[%s1 + $0x1a8] sm:$0xff]
      %v495 = vld [vmem:[%s1 + $0x1b0] sm:$0xff]
      %v496 = vld [vmem:[%s1 + $0x1b8] sm:$0xff]
      %v497 = vld [vmem:[%s1 + $0x1c0] sm:$0xff]
      %v498 = vld [vmem:[%s1 + $0x1c8] sm:$0xff]
      %v499 = vld [vmem:[%s1 + $0x1d0] sm:$0xff]
      %v500 = vld [vmem:[%s1 + $0x1d8] sm:$0xff]
      %v501 = vld [vmem:[%s1 + $0x1e0] sm:$0xff]
      %v502 = vld [vmem:[%s1 + $0x1e8] sm:$0xff]
      %v503 = vld [vmem:[%s1 + $0x1f0] sm:$0xff]
      %v504 = vld [vmem:[%s1 + $0x1f8] sm:$0xff]
      %v505 = vld [vmem:[%s436] sm:$0xff]
      %v506 = vld [vmem:[%s436 + $0x8] sm:$0xff]
      %v507 = vld [vmem:[%s436 + $0x10] sm:$0xff]
      %v508 = vld [vmem:[%s436 + $0x18] sm:$0xff]
      %v509 = vld [vmem:[%s436 + $0x20] sm:$0xff]
      %v510 = vld [vmem:[%s436 + $0x28] sm:$0xff]
      %v511 = vld [vmem:[%s436 + $0x30] sm:$0xff]
      %v512 = vld [vmem:[%s436 + $0x38] sm:$0xff]
      %v513 = vld [vmem:[%s436 + $0x40] sm:$0xff]
      %v514 = vld [vmem:[%s436 + $0x48] sm:$0xff]
      %v515 = vld [vmem:[%s436 + $0x50] sm:$0xff]
      %v516 = vld [vmem:[%s436 + $0x58] sm:$0xff]
      %v517 = vld [vmem:[%s436 + $0x60] sm:$0xff]
      %v518 = vld [vmem:[%s436 + $0x68] sm:$0xff]
      %v519 = vld [vmem:[%s436 + $0x70] sm:$0xff]
      %v520 = vld [vmem:[%s436 + $0x78] sm:$0xff]
      %v521 = vld [vmem:[%s436 + $0x80] sm:$0xff]
      %v522 = vld [vmem:[%s436 + $0x88] sm:$0xff]
      %v523 = vld [vmem:[%s436 + $0x90] sm:$0xff]
      %v524 = vld [vmem:[%s436 + $0x98] sm:$0xff]
      %v525 = vld [vmem:[%s436 + $0xa0] sm:$0xff]
      %v526 = vld [vmem:[%s436 + $0xa8] sm:$0xff]
      %v527 = vld [vmem:[%s436 + $0xb0] sm:$0xff]
      %v528 = vld [vmem:[%s436 + $0xb8] sm:$0xff]
      %v529 = vld [vmem:[%s436 + $0xc0] sm:$0xff]
      %v530 = vld [vmem:[%s436 + $0xc8] sm:$0xff]
      %v531 = vld [vmem:[%s436 + $0xd0] sm:$0xff]
      %v532 = vld [vmem:[%s436 + $0xd8] sm:$0xff]
      %v533 = vld [vmem:[%s436 + $0xe0] sm:$0xff]
      %v534 = vld [vmem:[%s436 + $0xe8] sm:$0xff]
      %v535 = vld [vmem:[%s436 + $0xf0] sm:$0xff]
      %v536 = vld [vmem:[%s436 + $0xf8] sm:$0xff]
      %v537 = vld [vmem:[%s436 + $0x100] sm:$0xff]
      %v538 = vld [vmem:[%s436 + $0x108] sm:$0xff]
      %v539 = vld [vmem:[%s436 + $0x110] sm:$0xff]
      %v540 = vld [vmem:[%s436 + $0x118] sm:$0xff]
      %v541 = vld [vmem:[%s436 + $0x120] sm:$0xff]
      %v542 = vld [vmem:[%s436 + $0x128] sm:$0xff]
      %v543 = vld [vmem:[%s436 + $0x130] sm:$0xff]
      %v544 = vld [vmem:[%s436 + $0x138] sm:$0xff]
      %v545 = vld [vmem:[%s436 + $0x140] sm:$0xff]
      %v546 = vld [vmem:[%s436 + $0x148] sm:$0xff]
      %v547 = vld [vmem:[%s436 + $0x150] sm:$0xff]
      %v548 = vld [vmem:[%s436 + $0x158] sm:$0xff]
      %v549 = vld [vmem:[%s436 + $0x160] sm:$0xff]
      %v550 = vld [vmem:[%s436 + $0x168] sm:$0xff]
      %v551 = vld [vmem:[%s436 + $0x170] sm:$0xff]
      %v552 = vld [vmem:[%s436 + $0x178] sm:$0xff]
      %v553 = vld [vmem:[%s436 + $0x180] sm:$0xff]
      %v554 = vld [vmem:[%s436 + $0x188] sm:$0xff]
      %v555 = vld [vmem:[%s436 + $0x190] sm:$0xff]
      %v556 = vld [vmem:[%s436 + $0x198] sm:$0xff]
      %v557 = vld [vmem:[%s436 + $0x1a0] sm:$0xff]
      %v558 = vld [vmem:[%s436 + $0x1a8] sm:$0xff]
      %v559 = vld [vmem:[%s436 + $0x1b0] sm:$0xff]
      %v560 = vld [vmem:[%s436 + $0x1b8] sm:$0xff]
      %v561 = vld [vmem:[%s436 + $0x1c0] sm:$0xff]
      %v562 = vld [vmem:[%s436 + $0x1c8] sm:$0xff]
      %v563 = vld [vmem:[%s436 + $0x1d0] sm:$0xff]
      %v564 = vld [vmem:[%s436 + $0x1d8] sm:$0xff]
      %v565 = vld [vmem:[%s436 + $0x1e0] sm:$0xff]
      %v566 = vld [vmem:[%s436 + $0x1e8] sm:$0xff]
      %v567 = vld [vmem:[%s436 + $0x1f0] sm:$0xff]
      %v568 = vld [vmem:[%s436 + $0x1f8] sm:$0xff]
      %v569 = vld [vmem:[%s436 + $0x200] sm:$0xff]
      %v570 = vld [vmem:[%s436 + $0x208] sm:$0xff]
      %v571 = vld [vmem:[%s436 + $0x210] sm:$0xff]
      %v572 = vld [vmem:[%s436 + $0x218] sm:$0xff]
      %v573 = vld [vmem:[%s436 + $0x220] sm:$0xff]
      %v574 = vld [vmem:[%s436 + $0x228] sm:$0xff]
      %v575 = vld [vmem:[%s436 + $0x230] sm:$0xff]
      %v576 = vld [vmem:[%s436 + $0x238] sm:$0xff]
      %v577 = vld [vmem:[%s436 + $0x240] sm:$0xff]
      %v578 = vld [vmem:[%s436 + $0x248] sm:$0xff]
      %v579 = vld [vmem:[%s436 + $0x250] sm:$0xff]
      %v580 = vld [vmem:[%s436 + $0x258] sm:$0xff]
      %v581 = vld [vmem:[%s436 + $0x260] sm:$0xff]
      %v582 = vld [vmem:[%s436 + $0x268] sm:$0xff]
      %v583 = vld [vmem:[%s436 + $0x270] sm:$0xff]
      %v584 = vld [vmem:[%s436 + $0x278] sm:$0xff]
      %v585 = vld [vmem:[%s436 + $0x280] sm:$0xff]
      %v586 = vld [vmem:[%s436 + $0x288] sm:$0xff]
      %v587 = vld [vmem:[%s436 + $0x290] sm:$0xff]
      %v588 = vld [vmem:[%s436 + $0x298] sm:$0xff]
      %v589 = vld [vmem:[%s436 + $0x2a0] sm:$0xff]
      %v590 = vld [vmem:[%s436 + $0x2a8] sm:$0xff]
      %v591 = vld [vmem:[%s436 + $0x2b0] sm:$0xff]
      %v592 = vld [vmem:[%s436 + $0x2b8] sm:$0xff]
      %v593 = vld [vmem:[%s436 + $0x2c0] sm:$0xff]
      %v594 = vld [vmem:[%s436 + $0x2c8] sm:$0xff]
      %v595 = vld [vmem:[%s436 + $0x2d0] sm:$0xff]
      %v596 = vld [vmem:[%s436 + $0x2d8] sm:$0xff]
      %v597 = vld [vmem:[%s436 + $0x2e0] sm:$0xff]
      %v598 = vld [vmem:[%s436 + $0x2e8] sm:$0xff]
      %v599 = vld [vmem:[%s436 + $0x2f0] sm:$0xff]
      %v600 = vld [vmem:[%s436 + $0x2f8] sm:$0xff]
      %v601 = vld [vmem:[%s436 + $0x300] sm:$0xff]
      %v602 = vld [vmem:[%s436 + $0x308] sm:$0xff]
      %v603 = vld [vmem:[%s436 + $0x310] sm:$0xff]
      %v604 = vld [vmem:[%s436 + $0x318] sm:$0xff]
      %v605 = vld [vmem:[%s436 + $0x320] sm:$0xff]
      %v606 = vld [vmem:[%s436 + $0x328] sm:$0xff]
      %v607 = vld [vmem:[%s436 + $0x330] sm:$0xff]
      %v608 = vld [vmem:[%s436 + $0x338] sm:$0xff]
      %v609 = vld [vmem:[%s436 + $0x340] sm:$0xff]
      %v610 = vld [vmem:[%s436 + $0x348] sm:$0xff]
      %v611 = vld [vmem:[%s436 + $0x350] sm:$0xff]
      %v612 = vld [vmem:[%s436 + $0x358] sm:$0xff]
      %v613 = vld [vmem:[%s436 + $0x360] sm:$0xff]
      %v614 = vld [vmem:[%s436 + $0x368] sm:$0xff]
      %v615 = vld [vmem:[%s436 + $0x370] sm:$0xff]
      %v616 = vld [vmem:[%s436 + $0x378] sm:$0xff]
      %v617 = vld [vmem:[%s436 + $0x380] sm:$0xff]
      %v618 = vld [vmem:[%s436 + $0x388] sm:$0xff]
      %v619 = vld [vmem:[%s436 + $0x390] sm:$0xff]
      %v620 = vld [vmem:[%s436 + $0x398] sm:$0xff]
      %v621 = vld [vmem:[%s436 + $0x3a0] sm:$0xff]
      %v622 = vld [vmem:[%s436 + $0x3a8] sm:$0xff]
      %v623 = vld [vmem:[%s436 + $0x3b0] sm:$0xff]
      %v624 = vld [vmem:[%s436 + $0x3b8] sm:$0xff]
      %v625 = vld [vmem:[%s436 + $0x3c0] sm:$0xff]
      %v626 = vld [vmem:[%s436 + $0x3c8] sm:$0xff]
      %v627 = vld [vmem:[%s436 + $0x3d0] sm:$0xff]
      %v628 = vld [vmem:[%s436 + $0x3d8] sm:$0xff]
      %v629 = vld [vmem:[%s436 + $0x3e0] sm:$0xff]
      %v630 = vld [vmem:[%s436 + $0x3e8] sm:$0xff]
      %v631 = vld [vmem:[%s436 + $0x3f0] sm:$0xff]
      %v632 = vld [vmem:[%s436 + $0x3f8] sm:$0xff]
      %v633 = vld [vmem:[%s436 + $0x400] sm:$0xff]
      %v634 = vld [vmem:[%s436 + $0x408] sm:$0xff]
      %v635 = vld [vmem:[%s436 + $0x410] sm:$0xff]
      %v636 = vld [vmem:[%s436 + $0x418] sm:$0xff]
      %v637 = vld [vmem:[%s436 + $0x420] sm:$0xff]
      %v638 = vld [vmem:[%s436 + $0x428] sm:$0xff]
      %v639 = vld [vmem:[%s436 + $0x430] sm:$0xff]
      %v640 = vld [vmem:[%s436 + $0x438] sm:$0xff]
      %v641 = vld [vmem:[%s436 + $0x440] sm:$0xff]
      %v642 = vld [vmem:[%s436 + $0x448] sm:$0xff]
      %v643 = vld [vmem:[%s436 + $0x450] sm:$0xff]
      %v644 = vld [vmem:[%s436 + $0x458] sm:$0xff]
      %v645 = vld [vmem:[%s436 + $0x460] sm:$0xff]
      %v646 = vld [vmem:[%s436 + $0x468] sm:$0xff]
      %v647 = vld [vmem:[%s436 + $0x470] sm:$0xff]
      %v648 = vld [vmem:[%s436 + $0x478] sm:$0xff]
      %v649 = vld [vmem:[%s436 + $0x480] sm:$0xff]
      %v650 = vld [vmem:[%s436 + $0x488] sm:$0xff]
      %v651 = vld [vmem:[%s436 + $0x490] sm:$0xff]
      %v652 = vld [vmem:[%s436 + $0x498] sm:$0xff]
      %v653 = vld [vmem:[%s436 + $0x4a0] sm:$0xff]
      %v654 = vld [vmem:[%s436 + $0x4a8] sm:$0xff]
      %v655 = vld [vmem:[%s436 + $0x4b0] sm:$0xff]
      %v656 = vld [vmem:[%s436 + $0x4b8] sm:$0xff]
      %v657 = vld [vmem:[%s436 + $0x4c0] sm:$0xff]
      %v658 = vld [vmem:[%s436 + $0x4c8] sm:$0xff]
      %v659 = vld [vmem:[%s436 + $0x4d0] sm:$0xff]
      %v660 = vld [vmem:[%s436 + $0x4d8] sm:$0xff]
      %v661 = vld [vmem:[%s436 + $0x4e0] sm:$0xff]
      %v662 = vld [vmem:[%s436 + $0x4e8] sm:$0xff]
      %v663 = vld [vmem:[%s436 + $0x4f0] sm:$0xff]
      %v664 = vld [vmem:[%s436 + $0x4f8] sm:$0xff]
      %v665 = vld [vmem:[%s436 + $0x500] sm:$0xff]
      %v666 = vld [vmem:[%s436 + $0x508] sm:$0xff]
      %v667 = vld [vmem:[%s436 + $0x510] sm:$0xff]
      %v668 = vld [vmem:[%s436 + $0x518] sm:$0xff]
      %v669 = vld [vmem:[%s436 + $0x520] sm:$0xff]
      %v670 = vld [vmem:[%s436 + $0x528] sm:$0xff]
      %v671 = vld [vmem:[%s436 + $0x530] sm:$0xff]
      %v672 = vld [vmem:[%s436 + $0x538] sm:$0xff]
      %v673 = vld [vmem:[%s436 + $0x540] sm:$0xff]
      %v674 = vld [vmem:[%s436 + $0x548] sm:$0xff]
      %v675 = vld [vmem:[%s436 + $0x550] sm:$0xff]
      %v676 = vld [vmem:[%s436 + $0x558] sm:$0xff]
      %v677 = vld [vmem:[%s436 + $0x560] sm:$0xff]
      %v678 = vld [vmem:[%s436 + $0x568] sm:$0xff]
      %v679 = vld [vmem:[%s436 + $0x570] sm:$0xff]
      %v680 = vld [vmem:[%s436 + $0x578] sm:$0xff]
      %v681 = vld [vmem:[%s436 + $0x580] sm:$0xff]
      %v682 = vld [vmem:[%s436 + $0x588] sm:$0xff]
      %v683 = vld [vmem:[%s436 + $0x590] sm:$0xff]
      %v684 = vld [vmem:[%s436 + $0x598] sm:$0xff]
      %v685 = vld [vmem:[%s436 + $0x5a0] sm:$0xff]
      %v686 = vld [vmem:[%s436 + $0x5a8] sm:$0xff]
      %v687 = vld [vmem:[%s436 + $0x5b0] sm:$0xff]
      %v688 = vld [vmem:[%s436 + $0x5b8] sm:$0xff]
      %v689 = vld [vmem:[%s436 + $0x5c0] sm:$0xff]
      %v690 = vld [vmem:[%s436 + $0x5c8] sm:$0xff]
      %v691 = vld [vmem:[%s436 + $0x5d0] sm:$0xff]
      %v692 = vld [vmem:[%s436 + $0x5d8] sm:$0xff]
      %v693 = vld [vmem:[%s436 + $0x5e0] sm:$0xff]
      %v694 = vld [vmem:[%s436 + $0x5e8] sm:$0xff]
      %v695 = vld [vmem:[%s436 + $0x5f0] sm:$0xff]
      %v696 = vld [vmem:[%s436 + $0x5f8] sm:$0xff]
      %v697 = vld [vmem:[%s436 + $0x600] sm:$0xff]
      %v698 = vld [vmem:[%s436 + $0x608] sm:$0xff]
      %v699 = vld [vmem:[%s436 + $0x610] sm:$0xff]
      %v700 = vld [vmem:[%s436 + $0x618] sm:$0xff]
      %v701 = vld [vmem:[%s436 + $0x620] sm:$0xff]
      %v702 = vld [vmem:[%s436 + $0x628] sm:$0xff]
      %v703 = vld [vmem:[%s436 + $0x630] sm:$0xff]
      %v704 = vld [vmem:[%s436 + $0x638] sm:$0xff]
      %v705 = vld [vmem:[%s436 + $0x640] sm:$0xff]
      %v706 = vld [vmem:[%s436 + $0x648] sm:$0xff]
      %v707 = vld [vmem:[%s436 + $0x650] sm:$0xff]
      %v708 = vld [vmem:[%s436 + $0x658] sm:$0xff]
      %v709 = vld [vmem:[%s436 + $0x660] sm:$0xff]
      %v710 = vld [vmem:[%s436 + $0x668] sm:$0xff]
      %v711 = vld [vmem:[%s436 + $0x670] sm:$0xff]
      %v712 = vld [vmem:[%s436 + $0x678] sm:$0xff]
      %v713 = vld [vmem:[%s436 + $0x680] sm:$0xff]
      %v714 = vld [vmem:[%s436 + $0x688] sm:$0xff]
      %v715 = vld [vmem:[%s436 + $0x690] sm:$0xff]
      %v716 = vld [vmem:[%s436 + $0x698] sm:$0xff]
      %v717 = vld [vmem:[%s436 + $0x6a0] sm:$0xff]
      %v718 = vld [vmem:[%s436 + $0x6a8] sm:$0xff]
      %v719 = vld [vmem:[%s436 + $0x6b0] sm:$0xff]
      %v720 = vld [vmem:[%s436 + $0x6b8] sm:$0xff]
      %v721 = vld [vmem:[%s436 + $0x6c0] sm:$0xff]
      %v722 = vld [vmem:[%s436 + $0x6c8] sm:$0xff]
      %v723 = vld [vmem:[%s436 + $0x6d0] sm:$0xff]
      %v724 = vld [vmem:[%s436 + $0x6d8] sm:$0xff]
      %v725 = vld [vmem:[%s436 + $0x6e0] sm:$0xff]
      %v726 = vld [vmem:[%s436 + $0x6e8] sm:$0xff]
      %v727 = vld [vmem:[%s436 + $0x6f0] sm:$0xff]
      %v728 = vld [vmem:[%s436 + $0x6f8] sm:$0xff]
      %v729 = vld [vmem:[%s436 + $0x700] sm:$0xff]
      %v730 = vld [vmem:[%s436 + $0x708] sm:$0xff]
      %v731 = vld [vmem:[%s436 + $0x710] sm:$0xff]
      %v732 = vld [vmem:[%s436 + $0x718] sm:$0xff]
      %v733 = vld [vmem:[%s436 + $0x720] sm:$0xff]
      %v734 = vld [vmem:[%s436 + $0x728] sm:$0xff]
      %v735 = vld [vmem:[%s436 + $0x730] sm:$0xff]
      %v736 = vld [vmem:[%s436 + $0x738] sm:$0xff]
      %v737 = vld [vmem:[%s436 + $0x740] sm:$0xff]
      %v738 = vld [vmem:[%s436 + $0x748] sm:$0xff]
      %v739 = vld [vmem:[%s436 + $0x750] sm:$0xff]
      %v740 = vld [vmem:[%s436 + $0x758] sm:$0xff]
      %v741 = vld [vmem:[%s436 + $0x760] sm:$0xff]
      %v742 = vld [vmem:[%s436 + $0x768] sm:$0xff]
      %v743 = vld [vmem:[%s436 + $0x770] sm:$0xff]
      %v744 = vld [vmem:[%s436 + $0x778] sm:$0xff]
      %v745 = vld [vmem:[%s436 + $0x780] sm:$0xff]
      %v746 = vld [vmem:[%s436 + $0x788] sm:$0xff]
      %v747 = vld [vmem:[%s436 + $0x790] sm:$0xff]
      %v748 = vld [vmem:[%s436 + $0x798] sm:$0xff]
      %v749 = vld [vmem:[%s436 + $0x7a0] sm:$0xff]
      %v750 = vld [vmem:[%s436 + $0x7a8] sm:$0xff]
      %v751 = vld [vmem:[%s436 + $0x7b0] sm:$0xff]
      %v752 = vld [vmem:[%s436 + $0x7b8] sm:$0xff]
      %v753 = vld [vmem:[%s436 + $0x7c0] sm:$0xff]
      %v754 = vld [vmem:[%s436 + $0x7c8] sm:$0xff]
      %v755 = vld [vmem:[%s436 + $0x7d0] sm:$0xff]
      %v756 = vld [vmem:[%s436 + $0x7d8] sm:$0xff]
      %v757 = vld [vmem:[%s436 + $0x7e0] sm:$0xff]
      %v758 = vld [vmem:[%s436 + $0x7e8] sm:$0xff]
      %v759 = vld [vmem:[%s436 + $0x7f0] sm:$0xff]
      %v760 = vld [vmem:[%s436 + $0x7f8] sm:$0xff]
      %v761 = vld [vmem:[%s2] sm:$0xff]
      %v762 = vld [vmem:[%s2 + $0x8] sm:$0xff]
      %v763 = vld [vmem:[%s2 + $0x10] sm:$0xff]
      %v764 = vld [vmem:[%s2 + $0x18] sm:$0xff]
      %766 = vset.pattern.permute.xlu0 0
      %767 = vperm.xlu0 %766, %v761
      %v768 = vpop.permute.xlu0 %767
      %771 = vset.pattern.permute.xlu0 0
      %772 = vperm.xlu0 %771, %v762
      %v773 = vpop.permute.xlu0 %772
      %776 = vset.pattern.permute.xlu0 0
      %777 = vperm.xlu0 %776, %v763
      %v778 = vpop.permute.xlu0 %777
      %781 = vset.pattern.permute.xlu0 0
      %782 = vperm.xlu0 %781, %v764
      %v783 = vpop.permute.xlu0 %782
      %785 = vmatprep.subr.mxu0 0.0
      %786 = vmatpush1.msra.mxu0 %v505
      %787 = vmatprep.subr.mxu0 0.0
      %788 = vmatpush1.msra.mxu0 %v506
      %789 = vmatprep.subr.mxu0 0.0
      %790 = vmatpush1.msra.mxu0 %v507
      %791 = vmatprep.subr.mxu0 0.0
      %792 = vmatpush1.msra.mxu0 %v508
      %793 = vmatprep.subr.mxu0 0.0
      %794 = vmatpush1.msra.mxu0 %v509
      %795 = vmatprep.subr.mxu0 0.0
      %796 = vmatpush1.msra.mxu0 %v510
      %797 = vmatprep.subr.mxu0 0.0
      %798 = vmatpush1.msra.mxu0 %v511
      %799 = vmatprep.subr.mxu0 0.0
      %800 = vmatpush1.msra.mxu0 %v512
      %801 = vmatprep.subr.mxu0 0.0
      %802 = vmatpush1.msra.mxu0 %v513
      %803 = vmatprep.subr.mxu0 0.0
      %804 = vmatpush1.msra.mxu0 %v514
      %805 = vmatprep.subr.mxu0 0.0
      %806 = vmatpush1.msra.mxu0 %v515
      %807 = vmatprep.subr.mxu0 0.0
      %808 = vmatpush1.msra.mxu0 %v516
      %809 = vmatprep.subr.mxu0 0.0
      %810 = vmatpush1.msra.mxu0 %v517
      %811 = vmatprep.subr.mxu0 0.0
      %812 = vmatpush1.msra.mxu0 %v518
      %813 = vmatprep.subr.mxu0 0.0
      %814 = vmatpush1.msra.mxu0 %v519
      %815 = vmatprep.subr.mxu0 0.0
      %816 = vmatpush1.msra.mxu0 %v520
      %817 = vmatprep.subr.mxu0 0.0
      %818 = vmatpush1.msra.mxu0 %v521
      %819 = vmatprep.subr.mxu0 0.0
      %820 = vmatpush1.msra.mxu0 %v522
      %821 = vmatprep.subr.mxu0 0.0
      %822 = vmatpush1.msra.mxu0 %v523
      %823 = vmatprep.subr.mxu0 0.0
      %824 = vmatpush1.msra.mxu0 %v524
      %825 = vmatprep.subr.mxu0 0.0
      %826 = vmatpush1.msra.mxu0 %v525
      %827 = vmatprep.subr.mxu0 0.0
      %828 = vmatpush1.msra.mxu0 %v526
      %829 = vmatprep.subr.mxu0 0.0
      %830 = vmatpush1.msra.mxu0 %v527
      %831 = vmatprep.subr.mxu0 0.0
      %832 = vmatpush1.msra.mxu0 %v528
      %833 = vmatprep.subr.mxu0 0.0
      %834 = vmatpush1.msra.mxu0 %v529
      %835 = vmatprep.subr.mxu0 0.0
      %836 = vmatpush1.msra.mxu0 %v530
      %837 = vmatprep.subr.mxu0 0.0
      %838 = vmatpush1.msra.mxu0 %v531
      %839 = vmatprep.subr.mxu0 0.0
      %840 = vmatpush1.msra.mxu0 %v532
      %841 = vmatprep.subr.mxu0 0.0
      %842 = vmatpush1.msra.mxu0 %v533
      %843 = vmatprep.subr.mxu0 0.0
      %844 = vmatpush1.msra.mxu0 %v534
      %845 = vmatprep.subr.mxu0 0.0
      %846 = vmatpush1.msra.mxu0 %v535
      %847 = vmatprep.subr.mxu0 0.0
      %848 = vmatpush1.msra.mxu0 %v536
      %849 = vmatprep.mubr.f32.mxu0 %v442
      %850 = vmatmul.mubr.f32.gmra.mrb[0].mxu0 %v441
      %v851 = vpop.f32.mrb[0].mxu0
      %v852 = vadd.f32 %v768, %v851
      %v853 = vpop.f32.mrb[0].mxu0
      %854 = vmatprep.mubr.f32.mxu0 %v458
      %855 = vmatmul.mubr.f32.gmra.mrb[0].mxu0 %v457
      %v856 = vpop.f32.mrb[0].mxu0
      %v857 = vadd.f32 %v773, %v856
      %v858 = vpop.f32.mrb[0].mxu0
      %859 = vmatprep.mubr.f32.mxu0 %v474
      %860 = vmatmul.mubr.f32.gmra.mrb[0].mxu0 %v473
      %v861 = vpop.f32.mrb[0].mxu0
      %v862 = vadd.f32 %v778, %v861
      %v863 = vpop.f32.mrb[0].mxu0
      %864 = vmatprep.mubr.f32.mxu0 %v490
      %865 = vmatmul.mubr.f32.gmra.mrb[0].mxu0 %v489
      %v866 = vpop.f32.mrb[0].mxu0
      %v867 = vadd.f32 %v783, %v866
      %v868 = vpop.f32.mrb[0].mxu0
      %869 = vdwg.mxu0
      %870 = vmatprep.subr.mxu0 0.0
      %871 = vmatpush1.msra.mxu0 %v537
      %872 = vmatprep.subr.mxu0 0.0
      %873 = vmatpush1.msra.mxu0 %v538
      %874 = vmatprep.subr.mxu0 0.0
      %875 = vmatpush1.msra.mxu0 %v539
      %876 = vmatprep.subr.mxu0 0.0
      %877 = vmatpush1.msra.mxu0 %v540
      %878 = vmatprep.subr.mxu0 0.0
      %879 = vmatpush1.msra.mxu0 %v541
      %880 = vmatprep.subr.mxu0 0.0
      %881 = vmatpush1.msra.mxu0 %v542
      %882 = vmatprep.subr.mxu0 0.0
      %883 = vmatpush1.msra.mxu0 %v543
      %884 = vmatprep.subr.mxu0 0.0
      %885 = vmatpush1.msra.mxu0 %v544
      %886 = vmatprep.subr.mxu0 0.0
      %887 = vmatpush1.msra.mxu0 %v545
      %888 = vmatprep.subr.mxu0 0.0
      %889 = vmatpush1.msra.mxu0 %v546
      %890 = vmatprep.subr.mxu0 0.0
      %891 = vmatpush1.msra.mxu0 %v547
      %892 = vmatprep.subr.mxu0 0.0
      %893 = vmatpush1.msra.mxu0 %v548
      %894 = vmatprep.subr.mxu0 0.0
      %895 = vmatpush1.msra.mxu0 %v549
      %896 = vmatprep.subr.mxu0 0.0
      %897 = vmatpush1.msra.mxu0 %v550
      %898 = vmatprep.subr.mxu0 0.0
      %899 = vmatpush1.msra.mxu0 %v551
      %900 = vmatprep.subr.mxu0 0.0
      %901 = vmatpush1.msra.mxu0 %v552
      %902 = vmatprep.subr.mxu0 0.0
      %903 = vmatpush1.msra.mxu0 %v553
      %904 = vmatprep.subr.mxu0 0.0
      %905 = vmatpush1.msra.mxu0 %v554
      %906 = vmatprep.subr.mxu0 0.0
      %907 = vmatpush1.msra.mxu0 %v555
      %908 = vmatprep.subr.mxu0 0.0
      %909 = vmatpush1.msra.mxu0 %v556
      %910 = vmatprep.subr.mxu0 0.0
      %911 = vmatpush1.msra.mxu0 %v557
      %912 = vmatprep.subr.mxu0 0.0
      %913 = vmatpush1.msra.mxu0 %v558
      %914 = vmatprep.subr.mxu0 0.0
      %915 = vmatpush1.msra.mxu0 %v559
      %916 = vmatprep.subr.mxu0 0.0
      %917 = vmatpush1.msra.mxu0 %v560
      %918 = vmatprep.subr.mxu0 0.0
      %919 = vmatpush1.msra.mxu0 %v561
      %920 = vmatprep.subr.mxu0 0.0
      %921 = vmatpush1.msra.mxu0 %v562
      %922 = vmatprep.subr.mxu0 0.0
      %923 = vmatpush1.msra.mxu0 %v563
      %924 = vmatprep.subr.mxu0 0.0
      %925 = vmatpush1.msra.mxu0 %v564
      %926 = vmatprep.subr.mxu0 0.0
      %927 = vmatpush1.msra.mxu0 %v565
      %928 = vmatprep.subr.mxu0 0.0
      %929 = vmatpush1.msra.mxu0 %v566
      %930 = vmatprep.subr.mxu0 0.0
      %931 = vmatpush1.msra.mxu0 %v567
      %932 = vmatprep.subr.mxu0 0.0
      %933 = vmatpush1.msra.mxu0 %v568
      %934 = vmatprep.mubr.f32.mxu0 %v444
      %935 = vmatmul.mubr.f32.gmra.mrb[0].mxu0 %v443
      %v936 = vpop.f32.mrb[0].mxu0
      %v937 = vadd.f32 %v852, %v936
      %v938 = vpop.f32.mrb[0].mxu0
      %939 = vmatprep.mubr.f32.mxu0 %v460
      %940 = vmatmul.mubr.f32.gmra.mrb[0].mxu0 %v459
      %v941 = vpop.f32.mrb[0].mxu0
      %v942 = vadd.f32 %v857, %v941
      %v943 = vpop.f32.mrb[0].mxu0
      %944 = vmatprep.mubr.f32.mxu0 %v476
      %945 = vmatmul.mubr.f32.gmra.mrb[0].mxu0 %v475
      %v946 = vpop.f32.mrb[0].mxu0
      %v947 = vadd.f32 %v862, %v946
      %v948 = vpop.f32.mrb[0].mxu0
      %949 = vmatprep.mubr.f32.mxu0 %v492
      %950 = vmatmul.mubr.f32.gmra.mrb[0].mxu0 %v491
      %v951 = vpop.f32.mrb[0].mxu0
      %v952 = vadd.f32 %v867, %v951
      %v953 = vpop.f32.mrb[0].mxu0
      %954 = vdwg.mxu0
      %955 = vmatprep.subr.mxu0 0.0
      %956 = vmatpush1.msra.mxu0 %v569
      %957 = vmatprep.subr.mxu0 0.0
      %958 = vmatpush1.msra.mxu0 %v570
      %959 = vmatprep.subr.mxu0 0.0
      %960 = vmatpush1.msra.mxu0 %v571
      %961 = vmatprep.subr.mxu0 0.0
      %962 = vmatpush1.msra.mxu0 %v572
      %963 = vmatprep.subr.mxu0 0.0
      %964 = vmatpush1.msra.mxu0 %v573
      %965 = vmatprep.subr.mxu0 0.0
      %966 = vmatpush1.msra.mxu0 %v574
      %967 = vmatprep.subr.mxu0 0.0
      %968 = vmatpush1.msra.mxu0 %v575
      %969 = vmatprep.subr.mxu0 0.0
      %970 = vmatpush1.msra.mxu0 %v576
      %971 = vmatprep.subr.mxu0 0.0
      %972 = vmatpush1.msra.mxu0 %v577
      %973 = vmatprep.subr.mxu0 0.0
      %974 = vmatpush1.msra.mxu0 %v578
      %975 = vmatprep.subr.mxu0 0.0
      %976 = vmatpush1.msra.mxu0 %v579
      %977 = vmatprep.subr.mxu0 0.0
      %978 = vmatpush1.msra.mxu0 %v580
      %979 = vmatprep.subr.mxu0 0.0
      %980 = vmatpush1.msra.mxu0 %v581
      %981 = vmatprep.subr.mxu0 0.0
      %982 = vmatpush1.msra.mxu0 %v582
      %983 = vmatprep.subr.mxu0 0.0
      %984 = vmatpush1.msra.mxu0 %v583
      %985 = vmatprep.subr.mxu0 0.0
      %986 = vmatpush1.msra.mxu0 %v584
      %987 = vmatprep.subr.mxu0 0.0
      %988 = vmatpush1.msra.mxu0 %v585
      %989 = vmatprep.subr.mxu0 0.0
      %990 = vmatpush1.msra.mxu0 %v586
      %991 = vmatprep.subr.mxu0 0.0
      %992 = vmatpush1.msra.mxu0 %v587
      %993 = vmatprep.subr.mxu0 0.0
      %994 = vmatpush1.msra.mxu0 %v588
      %995 = vmatprep.subr.mxu0 0.0
      %996 = vmatpush1.msra.mxu0 %v589
      %997 = vmatprep.subr.mxu0 0.0
      %998 = vmatpush1.msra.mxu0 %v590
      %999 = vmatprep.subr.mxu0 0.0
      %1000 = vmatpush1.msra.mxu0 %v591
      %1001 = vmatprep.subr.mxu0 0.0
      %1002 = vmatpush1.msra.mxu0 %v592
      %1003 = vmatprep.subr.mxu0 0.0
      %1004 = vmatpush1.msra.mxu0 %v593
      %1005 = vmatprep.subr.mxu0 0.0
      %1006 = vmatpush1.msra.mxu0 %v594
      %1007 = vmatprep.subr.mxu0 0.0
      %1008 = vmatpush1.msra.mxu0 %v595
      %1009 = vmatprep.subr.mxu0 0.0
      %1010 = vmatpush1.msra.mxu0 %v596
      %1011 = vmatprep.subr.mxu0 0.0
      %1012 = vmatpush1.msra.mxu0 %v597
      %1013 = vmatprep.subr.mxu0 0.0
      %1014 = vmatpush1.msra.mxu0 %v598
      %1015 = vmatprep.subr.mxu0 0.0
      %1016 = vmatpush1.msra.mxu0 %v599
      %1017 = vmatprep.subr.mxu0 0.0
      %1018 = vmatpush1.msra.mxu0 %v600
      %1019 = vmatprep.mubr.f32.mxu0 %v446
      %1020 = vmatmul.mubr.f32.gmra.mrb[0].mxu0 %v445
      %v1021 = vpop.f32.mrb[0].mxu0
      %v1022 = vadd.f32 %v937, %v1021
      %v1023 = vpop.f32.mrb[0].mxu0
      %1024 = vmatprep.mubr.f32.mxu0 %v462
      %1025 = vmatmul.mubr.f32.gmra.mrb[0].mxu0 %v461
      %v1026 = vpop.f32.mrb[0].mxu0
      %v1027 = vadd.f32 %v942, %v1026
      %v1028 = vpop.f32.mrb[0].mxu0
      %1029 = vmatprep.mubr.f32.mxu0 %v478
      %1030 = vmatmul.mubr.f32.gmra.mrb[0].mxu0 %v477
      %v1031 = vpop.f32.mrb[0].mxu0
      %v1032 = vadd.f32 %v947, %v1031
      %v1033 = vpop.f32.mrb[0].mxu0
      %1034 = vmatprep.mubr.f32.mxu0 %v494
      %1035 = vmatmul.mubr.f32.gmra.mrb[0].mxu0 %v493
      %v1036 = vpop.f32.mrb[0].mxu0
      %v1037 = vadd.f32 %v952, %v1036
      %v1038 = vpop.f32.mrb[0].mxu0
      %1039 = vdwg.mxu0
      %1040 = vmatprep.subr.mxu0 0.0
      %1041 = vmatpush1.msra.mxu0 %v601
      %1042 = vmatprep.subr.mxu0 0.0
      %1043 = vmatpush1.msra.mxu0 %v602
      %1044 = vmatprep.subr.mxu0 0.0
      %1045 = vmatpush1.msra.mxu0 %v603
      %1046 = vmatprep.subr.mxu0 0.0
      %1047 = vmatpush1.msra.mxu0 %v604
      %1048 = vmatprep.subr.mxu0 0.0
      %1049 = vmatpush1.msra.mxu0 %v605
      %1050 = vmatprep.subr.mxu0 0.0
      %1051 = vmatpush1.msra.mxu0 %v606
      %1052 = vmatprep.subr.mxu0 0.0
      %1053 = vmatpush1.msra.mxu0 %v607
      %1054 = vmatprep.subr.mxu0 0.0
      %1055 = vmatpush1.msra.mxu0 %v608
      %1056 = vmatprep.subr.mxu0 0.0
      %1057 = vmatpush1.msra.mxu0 %v609
      %1058 = vmatprep.subr.mxu0 0.0
      %1059 = vmatpush1.msra.mxu0 %v610
      %1060 = vmatprep.subr.mxu0 0.0
      %1061 = vmatpush1.msra.mxu0 %v611
      %1062 = vmatprep.subr.mxu0 0.0
      %1063 = vmatpush1.msra.mxu0 %v612
      %1064 = vmatprep.subr.mxu0 0.0
      %1065 = vmatpush1.msra.mxu0 %v613
      %1066 = vmatprep.subr.mxu0 0.0
      %1067 = vmatpush1.msra.mxu0 %v614
      %1068 = vmatprep.subr.mxu0 0.0
      %1069 = vmatpush1.msra.mxu0 %v615
      %1070 = vmatprep.subr.mxu0 0.0
      %1071 = vmatpush1.msra.mxu0 %v616
      %1072 = vmatprep.subr.mxu0 0.0
      %1073 = vmatpush1.msra.mxu0 %v617
      %1074 = vmatprep.subr.mxu0 0.0
      %1075 = vmatpush1.msra.mxu0 %v618
      %1076 = vmatprep.subr.mxu0 0.0
      %1077 = vmatpush1.msra.mxu0 %v619
      %1078 = vmatprep.subr.mxu0 0.0
      %1079 = vmatpush1.msra.mxu0 %v620
      %1080 = vmatprep.subr.mxu0 0.0
      %1081 = vmatpush1.msra.mxu0 %v621
      %1082 = vmatprep.subr.mxu0 0.0
      %1083 = vmatpush1.msra.mxu0 %v622
      %1084 = vmatprep.subr.mxu0 0.0
      %1085 = vmatpush1.msra.mxu0 %v623
      %1086 = vmatprep.subr.mxu0 0.0
      %1087 = vmatpush1.msra.mxu0 %v624
      %1088 = vmatprep.subr.mxu0 0.0
      %1089 = vmatpush1.msra.mxu0 %v625
      %1090 = vmatprep.subr.mxu0 0.0
      %1091 = vmatpush1.msra.mxu0 %v626
      %1092 = vmatprep.subr.mxu0 0.0
      %1093 = vmatpush1.msra.mxu0 %v627
      %1094 = vmatprep.subr.mxu0 0.0
      %1095 = vmatpush1.msra.mxu0 %v628
      %1096 = vmatprep.subr.mxu0 0.0
      %1097 = vmatpush1.msra.mxu0 %v629
      %1098 = vmatprep.subr.mxu0 0.0
      %1099 = vmatpush1.msra.mxu0 %v630
      %1100 = vmatprep.subr.mxu0 0.0
      %1101 = vmatpush1.msra.mxu0 %v631
      %1102 = vmatprep.subr.mxu0 0.0
      %1103 = vmatpush1.msra.mxu0 %v632
      %1104 = vmatprep.mubr.f32.mxu0 %v448
      %1105 = vmatmul.mubr.f32.gmra.mrb[0].mxu0 %v447
      %v1106 = vpop.f32.mrb[0].mxu0
      %v1107 = vadd.f32 %v1022, %v1106
      %v1108 = vpop.f32.mrb[0].mxu0
      %1109 = vmatprep.mubr.f32.mxu0 %v464
      %1110 = vmatmul.mubr.f32.gmra.mrb[0].mxu0 %v463
      %v1111 = vpop.f32.mrb[0].mxu0
      %v1112 = vadd.f32 %v1027, %v1111
      %v1113 = vpop.f32.mrb[0].mxu0
      %1114 = vmatprep.mubr.f32.mxu0 %v480
      %1115 = vmatmul.mubr.f32.gmra.mrb[0].mxu0 %v479
      %v1116 = vpop.f32.mrb[0].mxu0
      %v1117 = vadd.f32 %v1032, %v1116
      %v1118 = vpop.f32.mrb[0].mxu0
      %1119 = vmatprep.mubr.f32.mxu0 %v496
      %1120 = vmatmul.mubr.f32.gmra.mrb[0].mxu0 %v495
      %v1121 = vpop.f32.mrb[0].mxu0
      %v1122 = vadd.f32 %v1037, %v1121
      %v1123 = vpop.f32.mrb[0].mxu0
      %1124 = vdwg.mxu0
      %1125 = vmatprep.subr.mxu0 0.0
      %1126 = vmatpush1.msra.mxu0 %v633
      %1127 = vmatprep.subr.mxu0 0.0
      %1128 = vmatpush1.msra.mxu0 %v634
      %1129 = vmatprep.subr.mxu0 0.0
      %1130 = vmatpush1.msra.mxu0 %v635
      %1131 = vmatprep.subr.mxu0 0.0
      %1132 = vmatpush1.msra.mxu0 %v636
      %1133 = vmatprep.subr.mxu0 0.0
      %1134 = vmatpush1.msra.mxu0 %v637
      %1135 = vmatprep.subr.mxu0 0.0
      %1136 = vmatpush1.msra.mxu0 %v638
      %1137 = vmatprep.subr.mxu0 0.0
      %1138 = vmatpush1.msra.mxu0 %v639
      %1139 = vmatprep.subr.mxu0 0.0
      %1140 = vmatpush1.msra.mxu0 %v640
      %1141 = vmatprep.subr.mxu0 0.0
      %1142 = vmatpush1.msra.mxu0 %v641
      %1143 = vmatprep.subr.mxu0 0.0
      %1144 = vmatpush1.msra.mxu0 %v642
      %1145 = vmatprep.subr.mxu0 0.0
      %1146 = vmatpush1.msra.mxu0 %v643
      %1147 = vmatprep.subr.mxu0 0.0
      %1148 = vmatpush1.msra.mxu0 %v644
      %1149 = vmatprep.subr.mxu0 0.0
      %1150 = vmatpush1.msra.mxu0 %v645
      %1151 = vmatprep.subr.mxu0 0.0
      %1152 = vmatpush1.msra.mxu0 %v646
      %1153 = vmatprep.subr.mxu0 0.0
      %1154 = vmatpush1.msra.mxu0 %v647
      %1155 = vmatprep.subr.mxu0 0.0
      %1156 = vmatpush1.msra.mxu0 %v648
      %1157 = vmatprep.subr.mxu0 0.0
      %1158 = vmatpush1.msra.mxu0 %v649
      %1159 = vmatprep.subr.mxu0 0.0
      %1160 = vmatpush1.msra.mxu0 %v650
      %1161 = vmatprep.subr.mxu0 0.0
      %1162 = vmatpush1.msra.mxu0 %v651
      %1163 = vmatprep.subr.mxu0 0.0
      %1164 = vmatpush1.msra.mxu0 %v652
      %1165 = vmatprep.subr.mxu0 0.0
      %1166 = vmatpush1.msra.mxu0 %v653
      %1167 = vmatprep.subr.mxu0 0.0
      %1168 = vmatpush1.msra.mxu0 %v654
      %1169 = vmatprep.subr.mxu0 0.0
      %1170 = vmatpush1.msra.mxu0 %v655
      %1171 = vmatprep.subr.mxu0 0.0
      %1172 = vmatpush1.msra.mxu0 %v656
      %1173 = vmatprep.subr.mxu0 0.0
      %1174 = vmatpush1.msra.mxu0 %v657
      %1175 = vmatprep.subr.mxu0 0.0
      %1176 = vmatpush1.msra.mxu0 %v658
      %1177 = vmatprep.subr.mxu0 0.0
      %1178 = vmatpush1.msra.mxu0 %v659
      %1179 = vmatprep.subr.mxu0 0.0
      %1180 = vmatpush1.msra.mxu0 %v660
      %1181 = vmatprep.subr.mxu0 0.0
      %1182 = vmatpush1.msra.mxu0 %v661
      %1183 = vmatprep.subr.mxu0 0.0
      %1184 = vmatpush1.msra.mxu0 %v662
      %1185 = vmatprep.subr.mxu0 0.0
      %1186 = vmatpush1.msra.mxu0 %v663
      %1187 = vmatprep.subr.mxu0 0.0
      %1188 = vmatpush1.msra.mxu0 %v664
      %1189 = vmatprep.mubr.f32.mxu0 %v450
      %1190 = vmatmul.mubr.f32.gmra.mrb[0].mxu0 %v449
      %v1191 = vpop.f32.mrb[0].mxu0
      %v1192 = vadd.f32 %v1107, %v1191
      %v1193 = vpop.f32.mrb[0].mxu0
      %1194 = vmatprep.mubr.f32.mxu0 %v466
      %1195 = vmatmul.mubr.f32.gmra.mrb[0].mxu0 %v465
      %v1196 = vpop.f32.mrb[0].mxu0
      %v1197 = vadd.f32 %v1112, %v1196
      %v1198 = vpop.f32.mrb[0].mxu0
      %1199 = vmatprep.mubr.f32.mxu0 %v482
      %1200 = vmatmul.mubr.f32.gmra.mrb[0].mxu0 %v481
      %v1201 = vpop.f32.mrb[0].mxu0
      %v1202 = vadd.f32 %v1117, %v1201
      %v1203 = vpop.f32.mrb[0].mxu0
      %1204 = vmatprep.mubr.f32.mxu0 %v498
      %1205 = vmatmul.mubr.f32.gmra.mrb[0].mxu0 %v497
      %v1206 = vpop.f32.mrb[0].mxu0
      %v1207 = vadd.f32 %v1122, %v1206
      %v1208 = vpop.f32.mrb[0].mxu0
      %1209 = vdwg.mxu0
      %1210 = vmatprep.subr.mxu0 0.0
      %1211 = vmatpush1.msra.mxu0 %v665
      %1212 = vmatprep.subr.mxu0 0.0
      %1213 = vmatpush1.msra.mxu0 %v666
      %1214 = vmatprep.subr.mxu0 0.0
      %1215 = vmatpush1.msra.mxu0 %v667
      %1216 = vmatprep.subr.mxu0 0.0
      %1217 = vmatpush1.msra.mxu0 %v668
      %1218 = vmatprep.subr.mxu0 0.0
      %1219 = vmatpush1.msra.mxu0 %v669
      %1220 = vmatprep.subr.mxu0 0.0
      %1221 = vmatpush1.msra.mxu0 %v670
      %1222 = vmatprep.subr.mxu0 0.0
      %1223 = vmatpush1.msra.mxu0 %v671
      %1224 = vmatprep.subr.mxu0 0.0
      %1225 = vmatpush1.msra.mxu0 %v672
      %1226 = vmatprep.subr.mxu0 0.0
      %1227 = vmatpush1.msra.mxu0 %v673
      %1228 = vmatprep.subr.mxu0 0.0
      %1229 = vmatpush1.msra.mxu0 %v674
      %1230 = vmatprep.subr.mxu0 0.0
      %1231 = vmatpush1.msra.mxu0 %v675
      %1232 = vmatprep.subr.mxu0 0.0
      %1233 = vmatpush1.msra.mxu0 %v676
      %1234 = vmatprep.subr.mxu0 0.0
      %1235 = vmatpush1.msra.mxu0 %v677
      %1236 = vmatprep.subr.mxu0 0.0
      %1237 = vmatpush1.msra.mxu0 %v678
      %1238 = vmatprep.subr.mxu0 0.0
      %1239 = vmatpush1.msra.mxu0 %v679
      %1240 = vmatprep.subr.mxu0 0.0
      %1241 = vmatpush1.msra.mxu0 %v680
      %1242 = vmatprep.subr.mxu0 0.0
      %1243 = vmatpush1.msra.mxu0 %v681
      %1244 = vmatprep.subr.mxu0 0.0
      %1245 = vmatpush1.msra.mxu0 %v682
      %1246 = vmatprep.subr.mxu0 0.0
      %1247 = vmatpush1.msra.mxu0 %v683
      %1248 = vmatprep.subr.mxu0 0.0
      %1249 = vmatpush1.msra.mxu0 %v684
      %1250 = vmatprep.subr.mxu0 0.0
      %1251 = vmatpush1.msra.mxu0 %v685
      %1252 = vmatprep.subr.mxu0 0.0
      %1253 = vmatpush1.msra.mxu0 %v686
      %1254 = vmatprep.subr.mxu0 0.0
      %1255 = vmatpush1.msra.mxu0 %v687
      %1256 = vmatprep.subr.mxu0 0.0
      %1257 = vmatpush1.msra.mxu0 %v688
      %1258 = vmatprep.subr.mxu0 0.0
      %1259 = vmatpush1.msra.mxu0 %v689
      %1260 = vmatprep.subr.mxu0 0.0
      %1261 = vmatpush1.msra.mxu0 %v690
      %1262 = vmatprep.subr.mxu0 0.0
      %1263 = vmatpush1.msra.mxu0 %v691
      %1264 = vmatprep.subr.mxu0 0.0
      %1265 = vmatpush1.msra.mxu0 %v692
      %1266 = vmatprep.subr.mxu0 0.0
      %1267 = vmatpush1.msra.mxu0 %v693
      %1268 = vmatprep.subr.mxu0 0.0
      %1269 = vmatpush1.msra.mxu0 %v694
      %1270 = vmatprep.subr.mxu0 0.0
      %1271 = vmatpush1.msra.mxu0 %v695
      %1272 = vmatprep.subr.mxu0 0.0
      %1273 = vmatpush1.msra.mxu0 %v696
      %1274 = vmatprep.mubr.f32.mxu0 %v452
      %1275 = vmatmul.mubr.f32.gmra.mrb[0].mxu0 %v451
      %v1276 = vpop.f32.mrb[0].mxu0
      %v1277 = vadd.f32 %v1192, %v1276
      %v1278 = vpop.f32.mrb[0].mxu0
      %1279 = vmatprep.mubr.f32.mxu0 %v468
      %1280 = vmatmul.mubr.f32.gmra.mrb[0].mxu0 %v467
      %v1281 = vpop.f32.mrb[0].mxu0
      %v1282 = vadd.f32 %v1197, %v1281
      %v1283 = vpop.f32.mrb[0].mxu0
      %1284 = vmatprep.mubr.f32.mxu0 %v484
      %1285 = vmatmul.mubr.f32.gmra.mrb[0].mxu0 %v483
      %v1286 = vpop.f32.mrb[0].mxu0
      %v1287 = vadd.f32 %v1202, %v1286
      %v1288 = vpop.f32.mrb[0].mxu0
      %1289 = vmatprep.mubr.f32.mxu0 %v500
      %1290 = vmatmul.mubr.f32.gmra.mrb[0].mxu0 %v499
      %v1291 = vpop.f32.mrb[0].mxu0
      %v1292 = vadd.f32 %v1207, %v1291
      %v1293 = vpop.f32.mrb[0].mxu0
      %1294 = vdwg.mxu0
      %1295 = vmatprep.subr.mxu0 0.0
      %1296 = vmatpush1.msra.mxu0 %v697
      %1297 = vmatprep.subr.mxu0 0.0
      %1298 = vmatpush1.msra.mxu0 %v698
      %1299 = vmatprep.subr.mxu0 0.0
      %1300 = vmatpush1.msra.mxu0 %v699
      %1301 = vmatprep.subr.mxu0 0.0
      %1302 = vmatpush1.msra.mxu0 %v700
      %1303 = vmatprep.subr.mxu0 0.0
      %1304 = vmatpush1.msra.mxu0 %v701
      %1305 = vmatprep.subr.mxu0 0.0
      %1306 = vmatpush1.msra.mxu0 %v702
      %1307 = vmatprep.subr.mxu0 0.0
      %1308 = vmatpush1.msra.mxu0 %v703
      %1309 = vmatprep.subr.mxu0 0.0
      %1310 = vmatpush1.msra.mxu0 %v704
      %1311 = vmatprep.subr.mxu0 0.0
      %1312 = vmatpush1.msra.mxu0 %v705
      %1313 = vmatprep.subr.mxu0 0.0
      %1314 = vmatpush1.msra.mxu0 %v706
      %1315 = vmatprep.subr.mxu0 0.0
      %1316 = vmatpush1.msra.mxu0 %v707
      %1317 = vmatprep.subr.mxu0 0.0
      %1318 = vmatpush1.msra.mxu0 %v708
      %1319 = vmatprep.subr.mxu0 0.0
      %1320 = vmatpush1.msra.mxu0 %v709
      %1321 = vmatprep.subr.mxu0 0.0
      %1322 = vmatpush1.msra.mxu0 %v710
      %1323 = vmatprep.subr.mxu0 0.0
      %1324 = vmatpush1.msra.mxu0 %v711
      %1325 = vmatprep.subr.mxu0 0.0
      %1326 = vmatpush1.msra.mxu0 %v712
      %1327 = vmatprep.subr.mxu0 0.0
      %1328 = vmatpush1.msra.mxu0 %v713
      %1329 = vmatprep.subr.mxu0 0.0
      %1330 = vmatpush1.msra.mxu0 %v714
      %1331 = vmatprep.subr.mxu0 0.0
      %1332 = vmatpush1.msra.mxu0 %v715
      %1333 = vmatprep.subr.mxu0 0.0
      %1334 = vmatpush1.msra.mxu0 %v716
      %1335 = vmatprep.subr.mxu0 0.0
      %1336 = vmatpush1.msra.mxu0 %v717
      %1337 = vmatprep.subr.mxu0 0.0
      %1338 = vmatpush1.msra.mxu0 %v718
      %1339 = vmatprep.subr.mxu0 0.0
      %1340 = vmatpush1.msra.mxu0 %v719
      %1341 = vmatprep.subr.mxu0 0.0
      %1342 = vmatpush1.msra.mxu0 %v720
      %1343 = vmatprep.subr.mxu0 0.0
      %1344 = vmatpush1.msra.mxu0 %v721
      %1345 = vmatprep.subr.mxu0 0.0
      %1346 = vmatpush1.msra.mxu0 %v722
      %1347 = vmatprep.subr.mxu0 0.0
      %1348 = vmatpush1.msra.mxu0 %v723
      %1349 = vmatprep.subr.mxu0 0.0
      %1350 = vmatpush1.msra.mxu0 %v724
      %1351 = vmatprep.subr.mxu0 0.0
      %1352 = vmatpush1.msra.mxu0 %v725
      %1353 = vmatprep.subr.mxu0 0.0
      %1354 = vmatpush1.msra.mxu0 %v726
      %1355 = vmatprep.subr.mxu0 0.0
      %1356 = vmatpush1.msra.mxu0 %v727
      %1357 = vmatprep.subr.mxu0 0.0
      %1358 = vmatpush1.msra.mxu0 %v728
      %1359 = vmatprep.mubr.f32.mxu0 %v454
      %1360 = vmatmul.mubr.f32.gmra.mrb[0].mxu0 %v453
      %v1361 = vpop.f32.mrb[0].mxu0
      %v1362 = vadd.f32 %v1277, %v1361
      %v1363 = vpop.f32.mrb[0].mxu0
      %1364 = vmatprep.mubr.f32.mxu0 %v470
      %1365 = vmatmul.mubr.f32.gmra.mrb[0].mxu0 %v469
      %v1366 = vpop.f32.mrb[0].mxu0
      %v1367 = vadd.f32 %v1282, %v1366
      %v1368 = vpop.f32.mrb[0].mxu0
      %1369 = vmatprep.mubr.f32.mxu0 %v486
      %1370 = vmatmul.mubr.f32.gmra.mrb[0].mxu0 %v485
      %v1371 = vpop.f32.mrb[0].mxu0
      %v1372 = vadd.f32 %v1287, %v1371
      %v1373 = vpop.f32.mrb[0].mxu0
      %1374 = vmatprep.mubr.f32.mxu0 %v502
      %1375 = vmatmul.mubr.f32.gmra.mrb[0].mxu0 %v501
      %v1376 = vpop.f32.mrb[0].mxu0
      %v1377 = vadd.f32 %v1292, %v1376
      %v1378 = vpop.f32.mrb[0].mxu0
      %1379 = vdwg.mxu0
      %1380 = vmatprep.subr.mxu0 0.0
      %1381 = vmatpush1.msra.mxu0 %v729
      %1382 = vmatprep.subr.mxu0 0.0
      %1383 = vmatpush1.msra.mxu0 %v730
      %1384 = vmatprep.subr.mxu0 0.0
      %1385 = vmatpush1.msra.mxu0 %v731
      %1386 = vmatprep.subr.mxu0 0.0
      %1387 = vmatpush1.msra.mxu0 %v732
      %1388 = vmatprep.subr.mxu0 0.0
      %1389 = vmatpush1.msra.mxu0 %v733
      %1390 = vmatprep.subr.mxu0 0.0
      %1391 = vmatpush1.msra.mxu0 %v734
      %1392 = vmatprep.subr.mxu0 0.0
      %1393 = vmatpush1.msra.mxu0 %v735
      %1394 = vmatprep.subr.mxu0 0.0
      %1395 = vmatpush1.msra.mxu0 %v736
      %1396 = vmatprep.subr.mxu0 0.0
      %1397 = vmatpush1.msra.mxu0 %v737
      %1398 = vmatprep.subr.mxu0 0.0
      %1399 = vmatpush1.msra.mxu0 %v738
      %1400 = vmatprep.subr.mxu0 0.0
      %1401 = vmatpush1.msra.mxu0 %v739
      %1402 = vmatprep.subr.mxu0 0.0
      %1403 = vmatpush1.msra.mxu0 %v740
      %1404 = vmatprep.subr.mxu0 0.0
      %1405 = vmatpush1.msra.mxu0 %v741
      %1406 = vmatprep.subr.mxu0 0.0
      %1407 = vmatpush1.msra.mxu0 %v742
      %1408 = vmatprep.subr.mxu0 0.0
      %1409 = vmatpush1.msra.mxu0 %v743
      %1410 = vmatprep.subr.mxu0 0.0
      %1411 = vmatpush1.msra.mxu0 %v744
      %1412 = vmatprep.subr.mxu0 0.0
      %1413 = vmatpush1.msra.mxu0 %v745
      %1414 = vmatprep.subr.mxu0 0.0
      %1415 = vmatpush1.msra.mxu0 %v746
      %1416 = vmatprep.subr.mxu0 0.0
      %1417 = vmatpush1.msra.mxu0 %v747
      %1418 = vmatprep.subr.mxu0 0.0
      %1419 = vmatpush1.msra.mxu0 %v748
      %1420 = vmatprep.subr.mxu0 0.0
      %1421 = vmatpush1.msra.mxu0 %v749
      %1422 = vmatprep.subr.mxu0 0.0
      %1423 = vmatpush1.msra.mxu0 %v750
      %1424 = vmatprep.subr.mxu0 0.0
      %1425 = vmatpush1.msra.mxu0 %v751
      %1426 = vmatprep.subr.mxu0 0.0
      %1427 = vmatpush1.msra.mxu0 %v752
      %1428 = vmatprep.subr.mxu0 0.0
      %1429 = vmatpush1.msra.mxu0 %v753
      %1430 = vmatprep.subr.mxu0 0.0
      %1431 = vmatpush1.msra.mxu0 %v754
      %1432 = vmatprep.subr.mxu0 0.0
      %1433 = vmatpush1.msra.mxu0 %v755
      %1434 = vmatprep.subr.mxu0 0.0
      %1435 = vmatpush1.msra.mxu0 %v756
      %1436 = vmatprep.subr.mxu0 0.0
      %1437 = vmatpush1.msra.mxu0 %v757
      %1438 = vmatprep.subr.mxu0 0.0
      %1439 = vmatpush1.msra.mxu0 %v758
      %1440 = vmatprep.subr.mxu0 0.0
      %1441 = vmatpush1.msra.mxu0 %v759
      %1442 = vmatprep.subr.mxu0 0.0
      %1443 = vmatpush1.msra.mxu0 %v760
      %1444 = vmatprep.mubr.f32.mxu0 %v456
      %1445 = vmatmul.mubr.f32.gmra.mrb[0].mxu0 %v455
      %v1446 = vpop.f32.mrb[0].mxu0
      %v1447 = vadd.f32 %v1362, %v1446
      %v1448 = vpop.f32.mrb[0].mxu0
      %1449 = vmatprep.mubr.f32.mxu0 %v472
      %1450 = vmatmul.mubr.f32.gmra.mrb[0].mxu0 %v471
      %v1451 = vpop.f32.mrb[0].mxu0
      %v1452 = vadd.f32 %v1367, %v1451
      %v1453 = vpop.f32.mrb[0].mxu0
      %1454 = vmatprep.mubr.f32.mxu0 %v488
      %1455 = vmatmul.mubr.f32.gmra.mrb[0].mxu0 %v487
      %v1456 = vpop.f32.mrb[0].mxu0
      %v1457 = vadd.f32 %v1372, %v1456
      %v1458 = vpop.f32.mrb[0].mxu0
      %1459 = vmatprep.mubr.f32.mxu0 %v504
      %1460 = vmatmul.mubr.f32.gmra.mrb[0].mxu0 %v503
      %v1461 = vpop.f32.mrb[0].mxu0
      %v1462 = vadd.f32 %v1377, %v1461
      %v1463 = vpop.f32.mrb[0].mxu0
      %1464 = vdwg.mxu0
      %v1465 = vld [vmem:[%s3] sm:$0xff]
      %v1466 = vld [vmem:[%s10] sm:$0xff]
      %v1467 = vadd.f32 %v1465, %v1465
      %v1468 = vld [vmem:[%s4] sm:$0xff]
      %v1469 = vld [vmem:[%s4 + $0x8] sm:$0xff]
      %v1470 = vld [vmem:[%s4 + $0x10] sm:$0xff]
      %v1471 = vld [vmem:[%s4 + $0x18] sm:$0xff]
      %v1472 = vlaneseq
      %v1473 = vshrl.u32 %v1472, 7
      %v1474 = vsub.s32 0, %v1473
      %v1475 = vrot.slane %v1466, %v1474
      %vm1476 = vcmask 261120
      %v1478 = vsel %vm1476, %v1467, 0
      %1480 = vmatprep.subr.mxu0 0.0
      %1481 = vmatpush1.msra.mxu0 %v1468
      %1482 = vmatprep.subr.mxu0 0.0
      %1483 = vmatpush1.msra.mxu0 %v1469
      %1484 = vmatprep.subr.mxu0 0.0
      %1485 = vmatpush1.msra.mxu0 %v1470
      %1486 = vmatprep.subr.mxu0 0.0
      %1487 = vmatpush1.msra.mxu0 %v1471
      %1488 = vmatprep.subr.mxu0 0.0
      %1489 = vmatpush1.msra.mxu0 0.0
      %1490 = vmatprep.subr.mxu0 0.0
      %1491 = vmatpush1.msra.mxu0 0.0
      %1492 = vmatprep.subr.mxu0 0.0
      %1493 = vmatpush1.msra.mxu0 0.0
      %1494 = vmatprep.subr.mxu0 0.0
      %1495 = vmatpush1.msra.mxu0 0.0
      %1496 = vmatprep.subr.mxu0 0.0
      %1497 = vmatpush1.msra.mxu0 0.0
      %1498 = vmatprep.subr.mxu0 0.0
      %1499 = vmatpush1.msra.mxu0 0.0
      %1500 = vmatprep.subr.mxu0 0.0
      %1501 = vmatpush1.msra.mxu0 0.0
      %1502 = vmatprep.subr.mxu0 0.0
      %1503 = vmatpush1.msra.mxu0 0.0
      %1504 = vmatprep.subr.mxu0 0.0
      %1505 = vmatpush1.msra.mxu0 0.0
      %1506 = vmatprep.subr.mxu0 0.0
      %1507 = vmatpush1.msra.mxu0 0.0
      %1508 = vmatprep.subr.mxu0 0.0
      %1509 = vmatpush1.msra.mxu0 0.0
      %1510 = vmatprep.subr.mxu0 0.0
      %1511 = vmatpush1.msra.mxu0 0.0
      %1512 = vmatprep.subr.mxu0 0.0
      %1513 = vmatpush1.msra.mxu0 0.0
      %1514 = vmatprep.subr.mxu0 0.0
      %1515 = vmatpush1.msra.mxu0 0.0
      %1516 = vmatprep.subr.mxu0 0.0
      %1517 = vmatpush1.msra.mxu0 0.0
      %1518 = vmatprep.subr.mxu0 0.0
      %1519 = vmatpush1.msra.mxu0 0.0
      %1520 = vmatprep.subr.mxu0 0.0
      %1521 = vmatpush1.msra.mxu0 0.0
      %1522 = vmatprep.subr.mxu0 0.0
      %1523 = vmatpush1.msra.mxu0 0.0
      %1524 = vmatprep.subr.mxu0 0.0
      %1525 = vmatpush1.msra.mxu0 0.0
      %1526 = vmatprep.subr.mxu0 0.0
      %1527 = vmatpush1.msra.mxu0 0.0
      %1528 = vmatprep.subr.mxu0 0.0
      %1529 = vmatpush1.msra.mxu0 0.0
      %1530 = vmatprep.subr.mxu0 0.0
      %1531 = vmatpush1.msra.mxu0 0.0
      %1532 = vmatprep.subr.mxu0 0.0
      %1533 = vmatpush1.msra.mxu0 0.0
      %1534 = vmatprep.subr.mxu0 0.0
      %1535 = vmatpush1.msra.mxu0 0.0
      %1536 = vmatprep.subr.mxu0 0.0
      %1537 = vmatpush1.msra.mxu0 0.0
      %1538 = vmatprep.subr.mxu0 0.0
      %1539 = vmatpush1.msra.mxu0 0.0
      %1540 = vmatprep.subr.mxu0 0.0
      %1541 = vmatpush1.msra.mxu0 0.0
      %1542 = vmatprep.subr.mxu0 0.0
      %1543 = vmatpush1.msra.mxu0 0.0
      %1544 = vmatprep.mubr.f32.mxu0 0.0
      %1545 = vmatmul.mubr.f32.gmra.mrb[0].mxu0 %v1478
      %v1546 = vpop.f32.mrb[0].mxu0
      %v1547 = vadd.f32 %v1475, %v1546
      %v1548 = vpop.f32.mrb[0].mxu0
      %1549 = vdwg.mxu0
      %v1550 = vld [vmem:[%s5] sm:$0xff]
      %v1551 = vld [vmem:[%s5 + $0x8] sm:$0xff]
      %v1552 = vld [vmem:[%s5 + $0x10] sm:$0xff]
      %v1553 = vld [vmem:[%s5 + $0x18] sm:$0xff]
      %v1554 = vld [vmem:[%s5 + $0x20] sm:$0xff]
      %v1555 = vld [vmem:[%s5 + $0x28] sm:$0xff]
      %v1556 = vld [vmem:[%s5 + $0x30] sm:$0xff]
      %v1557 = vld [vmem:[%s5 + $0x38] sm:$0xff]
      %v1558 = vld [vmem:[%s6] sm:$0xff]
      %v1559 = vld [vmem:[%s6 + $0x8] sm:$0xff]
      %v1560 = vld [vmem:[%s6 + $0x10] sm:$0xff]
      %v1561 = vld [vmem:[%s6 + $0x18] sm:$0xff]
      %v1562 = vld [vmem:[%s6 + $0x20] sm:$0xff]
      %v1563 = vld [vmem:[%s6 + $0x28] sm:$0xff]
      %v1564 = vld [vmem:[%s6 + $0x30] sm:$0xff]
      %v1565 = vld [vmem:[%s6 + $0x38] sm:$0xff]
      %1567 = vset.pattern.permute.xlu0 0
      %1568 = vperm.xlu0 %1567, %v1558
      %v1569 = vpop.permute.xlu0 %1568
      %1572 = vset.pattern.permute.xlu0 0
      %1573 = vperm.xlu0 %1572, %v1559
      %v1574 = vpop.permute.xlu0 %1573
      %1577 = vset.pattern.permute.xlu0 0
      %1578 = vperm.xlu0 %1577, %v1560
      %v1579 = vpop.permute.xlu0 %1578
      %1582 = vset.pattern.permute.xlu0 0
      %1583 = vperm.xlu0 %1582, %v1561
      %v1584 = vpop.permute.xlu0 %1583
      %1587 = vset.pattern.permute.xlu0 0
      %1588 = vperm.xlu0 %1587, %v1562
      %v1589 = vpop.permute.xlu0 %1588
      %1592 = vset.pattern.permute.xlu0 0
      %1593 = vperm.xlu0 %1592, %v1563
      %v1594 = vpop.permute.xlu0 %1593
      %1597 = vset.pattern.permute.xlu0 0
      %1598 = vperm.xlu0 %1597, %v1564
      %v1599 = vpop.permute.xlu0 %1598
      %1602 = vset.pattern.permute.xlu0 0
      %1603 = vperm.xlu0 %1602, %v1565
      %v1604 = vpop.permute.xlu0 %1603
      %v1607 = vsel %vm1476, %v1550, 0
      %v1610 = vsel %vm1476, %v1551, 0
      %v1613 = vsel %vm1476, %v1552, 0
      %v1616 = vsel %vm1476, %v1553, 0
      %v1619 = vsel %vm1476, %v1554, 0
      %v1622 = vsel %vm1476, %v1555, 0
      %v1625 = vsel %vm1476, %v1556, 0
      %v1628 = vsel %vm1476, %v1557, 0
      %1630 = vmatprep.subr.mxu0 0.0
      %1631 = vmatpush1.msra.mxu0 %v1447
      %1632 = vmatprep.subr.mxu0 0.0
      %1633 = vmatpush1.msra.mxu0 %v1452
      %1634 = vmatprep.subr.mxu0 0.0
      %1635 = vmatpush1.msra.mxu0 %v1457
      %1636 = vmatprep.subr.mxu0 0.0
      %1637 = vmatpush1.msra.mxu0 %v1462
      %1638 = vmatprep.subr.mxu0 0.0
      %1639 = vmatpush1.msra.mxu0 0.0
      %1640 = vmatprep.subr.mxu0 0.0
      %1641 = vmatpush1.msra.mxu0 0.0
      %1642 = vmatprep.subr.mxu0 0.0
      %1643 = vmatpush1.msra.mxu0 0.0
      %1644 = vmatprep.subr.mxu0 0.0
      %1645 = vmatpush1.msra.mxu0 0.0
      %1646 = vmatprep.subr.mxu0 0.0
      %1647 = vmatpush1.msra.mxu0 0.0
      %1648 = vmatprep.subr.mxu0 0.0
      %1649 = vmatpush1.msra.mxu0 0.0
      %1650 = vmatprep.subr.mxu0 0.0
      %1651 = vmatpush1.msra.mxu0 0.0
      %1652 = vmatprep.subr.mxu0 0.0
      %1653 = vmatpush1.msra.mxu0 0.0
      %1654 = vmatprep.subr.mxu0 0.0
      %1655 = vmatpush1.msra.mxu0 0.0
      %1656 = vmatprep.subr.mxu0 0.0
      %1657 = vmatpush1.msra.mxu0 0.0
      %1658 = vmatprep.subr.mxu0 0.0
      %1659 = vmatpush1.msra.mxu0 0.0
      %1660 = vmatprep.subr.mxu0 0.0
      %1661 = vmatpush1.msra.mxu0 0.0
      %1662 = vmatprep.subr.mxu0 0.0
      %1663 = vmatpush1.msra.mxu0 0.0
      %1664 = vmatprep.subr.mxu0 0.0
      %1665 = vmatpush1.msra.mxu0 0.0
      %1666 = vmatprep.subr.mxu0 0.0
      %1667 = vmatpush1.msra.mxu0 0.0
      %1668 = vmatprep.subr.mxu0 0.0
      %1669 = vmatpush1.msra.mxu0 0.0
      %1670 = vmatprep.subr.mxu0 0.0
      %1671 = vmatpush1.msra.mxu0 0.0
      %1672 = vmatprep.subr.mxu0 0.0
      %1673 = vmatpush1.msra.mxu0 0.0
      %1674 = vmatprep.subr.mxu0 0.0
      %1675 = vmatpush1.msra.mxu0 0.0
      %1676 = vmatprep.subr.mxu0 0.0
      %1677 = vmatpush1.msra.mxu0 0.0
      %1678 = vmatprep.subr.mxu0 0.0
      %1679 = vmatpush1.msra.mxu0 0.0
      %1680 = vmatprep.subr.mxu0 0.0
      %1681 = vmatpush1.msra.mxu0 0.0
      %1682 = vmatprep.subr.mxu0 0.0
      %1683 = vmatpush1.msra.mxu0 0.0
      %1684 = vmatprep.subr.mxu0 0.0
      %1685 = vmatpush1.msra.mxu0 0.0
      %1686 = vmatprep.subr.mxu0 0.0
      %1687 = vmatpush1.msra.mxu0 0.0
      %1688 = vmatprep.subr.mxu0 0.0
      %1689 = vmatpush1.msra.mxu0 0.0
      %1690 = vmatprep.subr.mxu0 0.0
      %1691 = vmatpush1.msra.mxu0 0.0
      %1692 = vmatprep.subr.mxu0 0.0
      %1693 = vmatpush1.msra.mxu0 0.0
      %1694 = vmatprep.mubr.f32.mxu0 0.0
      %1695 = vmatmul.mubr.f32.gmra.mrb[0].mxu0 %v1607
      %v1696 = vpop.f32.mrb[0].mxu0
      %v1697 = vadd.f32 %v1569, %v1696
      %v1698 = vpop.f32.mrb[0].mxu0
      %1699 = vmatprep.mubr.f32.mxu0 0.0
      %1700 = vmatmul.mubr.f32.gmra.mrb[0].mxu0 %v1610
      %v1701 = vpop.f32.mrb[0].mxu0
      %v1702 = vadd.f32 %v1574, %v1701
      %v1703 = vpop.f32.mrb[0].mxu0
      %1704 = vmatprep.mubr.f32.mxu0 0.0
      %1705 = vmatmul.mubr.f32.gmra.mrb[0].mxu0 %v1613
      %v1706 = vpop.f32.mrb[0].mxu0
      %v1707 = vadd.f32 %v1579, %v1706
      %v1708 = vpop.f32.mrb[0].mxu0
      %1709 = vmatprep.mubr.f32.mxu0 0.0
      %1710 = vmatmul.mubr.f32.gmra.mrb[0].mxu0 %v1616
      %v1711 = vpop.f32.mrb[0].mxu0
      %v1712 = vadd.f32 %v1584, %v1711
      %v1713 = vpop.f32.mrb[0].mxu0
      %1714 = vmatprep.mubr.f32.mxu0 0.0
      %1715 = vmatmul.mubr.f32.gmra.mrb[0].mxu0 %v1619
      %v1716 = vpop.f32.mrb[0].mxu0
      %v1717 = vadd.f32 %v1589, %v1716
      %v1718 = vpop.f32.mrb[0].mxu0
      %1719 = vmatprep.mubr.f32.mxu0 0.0
      %1720 = vmatmul.mubr.f32.gmra.mrb[0].mxu0 %v1622
      %v1721 = vpop.f32.mrb[0].mxu0
      %v1722 = vadd.f32 %v1594, %v1721
      %v1723 = vpop.f32.mrb[0].mxu0
      %1724 = vmatprep.mubr.f32.mxu0 0.0
      %1725 = vmatmul.mubr.f32.gmra.mrb[0].mxu0 %v1625
      %v1726 = vpop.f32.mrb[0].mxu0
      %v1727 = vadd.f32 %v1599, %v1726
      %v1728 = vpop.f32.mrb[0].mxu0
      %1729 = vmatprep.mubr.f32.mxu0 0.0
      %1730 = vmatmul.mubr.f32.gmra.mrb[0].mxu0 %v1628
      %v1731 = vpop.f32.mrb[0].mxu0
      %v1732 = vadd.f32 %v1604, %v1731
      %v1733 = vpop.f32.mrb[0].mxu0
      %1734 = vdwg.mxu0
      %vm1735 = vcmask 64512
      %v1737 = vsel %vm1735, %v1547, 0
      %1739 = vmatprep.subr.mxu0 0.0
      %1740 = vmatpush1.msra.mxu0 %v1697
      %1741 = vmatprep.subr.mxu0 0.0
      %1742 = vmatpush1.msra.mxu0 0.0
      %1743 = vmatprep.subr.mxu0 0.0
      %1744 = vmatpush1.msra.mxu0 0.0
      %1745 = vmatprep.subr.mxu0 0.0
      %1746 = vmatpush1.msra.mxu0 0.0
      %1747 = vmatprep.subr.mxu0 0.0
      %1748 = vmatpush1.msra.mxu0 0.0
      %1749 = vmatprep.subr.mxu0 0.0
      %1750 = vmatpush1.msra.mxu0 0.0
      %1751 = vmatprep.subr.mxu0 0.0
      %1752 = vmatpush1.msra.mxu0 0.0
      %1753 = vmatprep.subr.mxu0 0.0
      %1754 = vmatpush1.msra.mxu0 0.0
      %1755 = vmatprep.subr.mxu0 0.0
      %1756 = vmatpush1.msra.mxu0 0.0
      %1757 = vmatprep.subr.mxu0 0.0
      %1758 = vmatpush1.msra.mxu0 0.0
      %1759 = vmatprep.subr.mxu0 0.0
      %1760 = vmatpush1.msra.mxu0 0.0
      %1761 = vmatprep.subr.mxu0 0.0
      %1762 = vmatpush1.msra.mxu0 0.0
      %1763 = vmatprep.subr.mxu0 0.0
      %1764 = vmatpush1.msra.mxu0 0.0
      %1765 = vmatprep.subr.mxu0 0.0
      %1766 = vmatpush1.msra.mxu0 0.0
      %1767 = vmatprep.subr.mxu0 0.0
      %1768 = vmatpush1.msra.mxu0 0.0
      %1769 = vmatprep.subr.mxu0 0.0
      %1770 = vmatpush1.msra.mxu0 0.0
      %1771 = vmatprep.subr.mxu0 0.0
      %1772 = vmatpush1.msra.mxu0 0.0
      %1773 = vmatprep.subr.mxu0 0.0
      %1774 = vmatpush1.msra.mxu0 0.0
      %1775 = vmatprep.subr.mxu0 0.0
      %1776 = vmatpush1.msra.mxu0 0.0
      %1777 = vmatprep.subr.mxu0 0.0
      %1778 = vmatpush1.msra.mxu0 0.0
      %1779 = vmatprep.subr.mxu0 0.0
      %1780 = vmatpush1.msra.mxu0 0.0
      %1781 = vmatprep.subr.mxu0 0.0
      %1782 = vmatpush1.msra.mxu0 0.0
      %1783 = vmatprep.subr.mxu0 0.0
      %1784 = vmatpush1.msra.mxu0 0.0
      %1785 = vmatprep.subr.mxu0 0.0
      %1786 = vmatpush1.msra.mxu0 0.0
      %1787 = vmatprep.subr.mxu0 0.0
      %1788 = vmatpush1.msra.mxu0 0.0
      %1789 = vmatprep.subr.mxu0 0.0
      %1790 = vmatpush1.msra.mxu0 0.0
      %1791 = vmatprep.subr.mxu0 0.0
      %1792 = vmatpush1.msra.mxu0 0.0
      %1793 = vmatprep.subr.mxu0 0.0
      %1794 = vmatpush1.msra.mxu0 0.0
      %1795 = vmatprep.subr.mxu0 0.0
      %1796 = vmatpush1.msra.mxu0 0.0
      %1797 = vmatprep.subr.mxu0 0.0
      %1798 = vmatpush1.msra.mxu0 0.0
      %1799 = vmatprep.subr.mxu0 0.0
      %1800 = vmatpush1.msra.mxu0 0.0
      %1801 = vmatprep.subr.mxu0 0.0
      %1802 = vmatpush1.msra.mxu0 0.0
      %1803 = vmatprep.mubr.f32.mxu0 0.0
      %1804 = vmatmul.mubr.f32.gmra.mrb[0].mxu0 %v1737
      %v1805 = vpop.f32.mrb[0].mxu0
      %v1806 = vadd.f32 0.0, %v1805
      %v1807 = vpop.f32.mrb[0].mxu0
      %1808 = vdwg.mxu0
      %v1809 = vmul.f32 %v1806, 0.35355338
      %vm1810 = vcmask 130048
      %v1811 = vsel %vm1810, %v1809, -inf
      %1812 = vmax.xlane.f32.xlu0 %v1811
      %v1813 = vpop.xlane.xlu0 %1812
      %v1814 = vsub.f32 %v1809, %v1813
      %v1815 = vmul.f32 %v1814, 1.442695
      %v1816 = vpow.pop %v1815
      %v1817 = vsel %vm1810, %v1816, 0.0
      %1818 = vadd.xlane.f32.xlu0 %v1817
      %v1819 = vpop.xlane.xlu0 %1818
      %v1820 = vrcp.pop %v1819
      %v1821 = vmul.f32 %v1816, %v1820
      %v1823 = vsel %vm1810, %v1821, 0
      %v1826 = vsel %vm1810, %v1717, 0
      %1828 = vmatprep.subr.mxu0 0.0
      %1829 = vmatpush1.xpose.msra.mxu0 %v1826
      %1830 = vmatprep.subr.mxu0 0.0
      %1831 = vmatpush1.xpose.msra.mxu0 0.0
      %1832 = vmatprep.subr.mxu0 0.0
      %1833 = vmatpush1.xpose.msra.mxu0 0.0
      %1834 = vmatprep.subr.mxu0 0.0
      %1835 = vmatpush1.xpose.msra.mxu0 0.0
      %1836 = vmatprep.subr.mxu0 0.0
      %1837 = vmatpush1.xpose.msra.mxu0 0.0
      %1838 = vmatprep.subr.mxu0 0.0
      %1839 = vmatpush1.xpose.msra.mxu0 0.0
      %1840 = vmatprep.subr.mxu0 0.0
      %1841 = vmatpush1.xpose.msra.mxu0 0.0
      %1842 = vmatprep.subr.mxu0 0.0
      %1843 = vmatpush1.xpose.msra.mxu0 0.0
      %1844 = vmatprep.subr.mxu0 0.0
      %1845 = vmatpush1.xpose.msra.mxu0 0.0
      %1846 = vmatprep.subr.mxu0 0.0
      %1847 = vmatpush1.xpose.msra.mxu0 0.0
      %1848 = vmatprep.subr.mxu0 0.0
      %1849 = vmatpush1.xpose.msra.mxu0 0.0
      %1850 = vmatprep.subr.mxu0 0.0
      %1851 = vmatpush1.xpose.msra.mxu0 0.0
      %1852 = vmatprep.subr.mxu0 0.0
      %1853 = vmatpush1.xpose.msra.mxu0 0.0
      %1854 = vmatprep.subr.mxu0 0.0
      %1855 = vmatpush1.xpose.msra.mxu0 0.0
      %1856 = vmatprep.subr.mxu0 0.0
      %1857 = vmatpush1.xpose.msra.mxu0 0.0
      %1858 = vmatprep.subr.mxu0 0.0
      %1859 = vmatpush1.xpose.msra.mxu0 0.0
      %1860 = vmatprep.subr.mxu0 0.0
      %1861 = vmatpush1.xpose.msra.mxu0 0.0
      %1862 = vmatprep.subr.mxu0 0.0
      %1863 = vmatpush1.xpose.msra.mxu0 0.0
      %1864 = vmatprep.subr.mxu0 0.0
      %1865 = vmatpush1.xpose.msra.mxu0 0.0
      %1866 = vmatprep.subr.mxu0 0.0
      %1867 = vmatpush1.xpose.msra.mxu0 0.0
      %1868 = vmatprep.subr.mxu0 0.0
      %1869 = vmatpush1.xpose.msra.mxu0 0.0
      %1870 = vmatprep.subr.mxu0 0.0
      %1871 = vmatpush1.xpose.msra.mxu0 0.0
      %1872 = vmatprep.subr.mxu0 0.0
      %1873 = vmatpush1.xpose.msra.mxu0 0.0
      %1874 = vmatprep.subr.mxu0 0.0
      %1875 = vmatpush1.xpose.msra.mxu0 0.0
      %1876 = vmatprep.subr.mxu0 0.0
      %1877 = vmatpush1.xpose.msra.mxu0 0.0
      %1878 = vmatprep.subr.mxu0 0.0
      %1879 = vmatpush1.xpose.msra.mxu0 0.0
      %1880 = vmatprep.subr.mxu0 0.0
      %1881 = vmatpush1.xpose.msra.mxu0 0.0
      %1882 = vmatprep.subr.mxu0 0.0
      %1883 = vmatpush1.xpose.msra.mxu0 0.0
      %1884 = vmatprep.subr.mxu0 0.0
      %1885 = vmatpush1.xpose.msra.mxu0 0.0
      %1886 = vmatprep.subr.mxu0 0.0
      %1887 = vmatpush1.xpose.msra.mxu0 0.0
      %1888 = vmatprep.subr.mxu0 0.0
      %1889 = vmatpush1.xpose.msra.mxu0 0.0
      %1890 = vmatprep.subr.mxu0 0.0
      %1891 = vmatpush1.xpose.msra.mxu0 0.0
      %1892 = vmatprep.mubr.f32.mxu0 0.0
      %1893 = vmatmul.mubr.f32.gmra.mrb[0].mxu0 %v1823
      %v1894 = vpop.f32.mrb[0].mxu0
      %v1895 = vadd.f32 0.0, %v1894
      %v1896 = vpop.f32.mrb[0].mxu0
      %1897 = vdwg.mxu0
      %1898 = vrot.lane.b32.xlu0 %v1547, 120
      %v1899 = vpop.permute.xlu0 %1898
      %v1900 = vsel %vm1735, %v1899, 0
      %1902 = vmatprep.subr.mxu0 0.0
      %1903 = vmatpush1.msra.mxu0 %v1702
      %1904 = vmatprep.subr.mxu0 0.0
      %1905 = vmatpush1.msra.mxu0 0.0
      %1906 = vmatprep.subr.mxu0 0.0
      %1907 = vmatpush1.msra.mxu0 0.0
      %1908 = vmatprep.subr.mxu0 0.0
      %1909 = vmatpush1.msra.mxu0 0.0
      %1910 = vmatprep.subr.mxu0 0.0
      %1911 = vmatpush1.msra.mxu0 0.0
      %1912 = vmatprep.subr.mxu0 0.0
      %1913 = vmatpush1.msra.mxu0 0.0
      %1914 = vmatprep.subr.mxu0 0.0
      %1915 = vmatpush1.msra.mxu0 0.0
      %1916 = vmatprep.subr.mxu0 0.0
      %1917 = vmatpush1.msra.mxu0 0.0
      %1918 = vmatprep.subr.mxu0 0.0
      %1919 = vmatpush1.msra.mxu0 0.0
      %1920 = vmatprep.subr.mxu0 0.0
      %1921 = vmatpush1.msra.mxu0 0.0
      %1922 = vmatprep.subr.mxu0 0.0
      %1923 = vmatpush1.msra.mxu0 0.0
      %1924 = vmatprep.subr.mxu0 0.0
      %1925 = vmatpush1.msra.mxu0 0.0
      %1926 = vmatprep.subr.mxu0 0.0
      %1927 = vmatpush1.msra.mxu0 0.0
      %1928 = vmatprep.subr.mxu0 0.0
      %1929 = vmatpush1.msra.mxu0 0.0
      %1930 = vmatprep.subr.mxu0 0.0
      %1931 = vmatpush1.msra.mxu0 0.0
      %1932 = vmatprep.subr.mxu0 0.0
      %1933 = vmatpush1.msra.mxu0 0.0
      %1934 = vmatprep.subr.mxu0 0.0
      %1935 = vmatpush1.msra.mxu0 0.0
      %1936 = vmatprep.subr.mxu0 0.0
      %1937 = vmatpush1.msra.mxu0 0.0
      %1938 = vmatprep.subr.mxu0 0.0
      %1939 = vmatpush1.msra.mxu0 0.0
      %1940 = vmatprep.subr.mxu0 0.0
      %1941 = vmatpush1.msra.mxu0 0.0
      %1942 = vmatprep.subr.mxu0 0.0
      %1943 = vmatpush1.msra.mxu0 0.0
      %1944 = vmatprep.subr.mxu0 0.0
      %1945 = vmatpush1.msra.mxu0 0.0
      %1946 = vmatprep.subr.mxu0 0.0
      %1947 = vmatpush1.msra.mxu0 0.0
      %1948 = vmatprep.subr.mxu0 0.0
      %1949 = vmatpush1.msra.mxu0 0.0
      %1950 = vmatprep.subr.mxu0 0.0
      %1951 = vmatpush1.msra.mxu0 0.0
      %1952 = vmatprep.subr.mxu0 0.0
      %1953 = vmatpush1.msra.mxu0 0.0
      %1954 = vmatprep.subr.mxu0 0.0
      %1955 = vmatpush1.msra.mxu0 0.0
      %1956 = vmatprep.subr.mxu0 0.0
      %1957 = vmatpush1.msra.mxu0 0.0
      %1958 = vmatprep.subr.mxu0 0.0
      %1959 = vmatpush1.msra.mxu0 0.0
      %1960 = vmatprep.subr.mxu0 0.0
      %1961 = vmatpush1.msra.mxu0 0.0
      %1962 = vmatprep.subr.mxu0 0.0
      %1963 = vmatpush1.msra.mxu0 0.0
      %1964 = vmatprep.subr.mxu0 0.0
      %1965 = vmatpush1.msra.mxu0 0.0
      %1966 = vmatprep.mubr.f32.mxu0 0.0
      %1967 = vmatmul.mubr.f32.gmra.mrb[0].mxu0 %v1900
      %v1968 = vpop.f32.mrb[0].mxu0
      %v1969 = vadd.f32 0.0, %v1968
      %v1970 = vpop.f32.mrb[0].mxu0
      %1971 = vdwg.mxu0
      %v1972 = vmul.f32 %v1969, 0.35355338
      %v1973 = vsel %vm1810, %v1972, -inf
      %1974 = vmax.xlane.f32.xlu0 %v1973
      %v1975 = vpop.xlane.xlu0 %1974
      %v1976 = vsub.f32 %v1972, %v1975
      %v1977 = vmul.f32 %v1976, 1.442695
      %v1978 = vpow.pop %v1977
      %v1979 = vsel %vm1810, %v1978, 0.0
      %1980 = vadd.xlane.f32.xlu0 %v1979
      %v1981 = vpop.xlane.xlu0 %1980
      %v1982 = vrcp.pop %v1981
      %v1983 = vmul.f32 %v1978, %v1982
      %v1985 = vsel %vm1810, %v1983, 0
      %v1988 = vsel %vm1810, %v1722, 0
      %1990 = vmatprep.subr.mxu0 0.0
      %1991 = vmatpush1.xpose.msra.mxu0 %v1988
      %1992 = vmatprep.subr.mxu0 0.0
      %1993 = vmatpush1.xpose.msra.mxu0 0.0
      %1994 = vmatprep.subr.mxu0 0.0
      %1995 = vmatpush1.xpose.msra.mxu0 0.0
      %1996 = vmatprep.subr.mxu0 0.0
      %1997 = vmatpush1.xpose.msra.mxu0 0.0
      %1998 = vmatprep.subr.mxu0 0.0
      %1999 = vmatpush1.xpose.msra.mxu0 0.0
      %2000 = vmatprep.subr.mxu0 0.0
      %2001 = vmatpush1.xpose.msra.mxu0 0.0
      %2002 = vmatprep.subr.mxu0 0.0
      %2003 = vmatpush1.xpose.msra.mxu0 0.0
      %2004 = vmatprep.subr.mxu0 0.0
      %2005 = vmatpush1.xpose.msra.mxu0 0.0
      %2006 = vmatprep.subr.mxu0 0.0
      %2007 = vmatpush1.xpose.msra.mxu0 0.0
      %2008 = vmatprep.subr.mxu0 0.0
      %2009 = vmatpush1.xpose.msra.mxu0 0.0
      %2010 = vmatprep.subr.mxu0 0.0
      %2011 = vmatpush1.xpose.msra.mxu0 0.0
      %2012 = vmatprep.subr.mxu0 0.0
      %2013 = vmatpush1.xpose.msra.mxu0 0.0
      %2014 = vmatprep.subr.mxu0 0.0
      %2015 = vmatpush1.xpose.msra.mxu0 0.0
      %2016 = vmatprep.subr.mxu0 0.0
      %2017 = vmatpush1.xpose.msra.mxu0 0.0
      %2018 = vmatprep.subr.mxu0 0.0
      %2019 = vmatpush1.xpose.msra.mxu0 0.0
      %2020 = vmatprep.subr.mxu0 0.0
      %2021 = vmatpush1.xpose.msra.mxu0 0.0
      %2022 = vmatprep.subr.mxu0 0.0
      %2023 = vmatpush1.xpose.msra.mxu0 0.0
      %2024 = vmatprep.subr.mxu0 0.0
      %2025 = vmatpush1.xpose.msra.mxu0 0.0
      %2026 = vmatprep.subr.mxu0 0.0
      %2027 = vmatpush1.xpose.msra.mxu0 0.0
      %2028 = vmatprep.subr.mxu0 0.0
      %2029 = vmatpush1.xpose.msra.mxu0 0.0
      %2030 = vmatprep.subr.mxu0 0.0
      %2031 = vmatpush1.xpose.msra.mxu0 0.0
      %2032 = vmatprep.subr.mxu0 0.0
      %2033 = vmatpush1.xpose.msra.mxu0 0.0
      %2034 = vmatprep.subr.mxu0 0.0
      %2035 = vmatpush1.xpose.msra.mxu0 0.0
      %2036 = vmatprep.subr.mxu0 0.0
      %2037 = vmatpush1.xpose.msra.mxu0 0.0
      %2038 = vmatprep.subr.mxu0 0.0
      %2039 = vmatpush1.xpose.msra.mxu0 0.0
      %2040 = vmatprep.subr.mxu0 0.0
      %2041 = vmatpush1.xpose.msra.mxu0 0.0
      %2042 = vmatprep.subr.mxu0 0.0
      %2043 = vmatpush1.xpose.msra.mxu0 0.0
      %2044 = vmatprep.subr.mxu0 0.0
      %2045 = vmatpush1.xpose.msra.mxu0 0.0
      %2046 = vmatprep.subr.mxu0 0.0
      %2047 = vmatpush1.xpose.msra.mxu0 0.0
      %2048 = vmatprep.subr.mxu0 0.0
      %2049 = vmatpush1.xpose.msra.mxu0 0.0
      %2050 = vmatprep.subr.mxu0 0.0
      %2051 = vmatpush1.xpose.msra.mxu0 0.0
      %2052 = vmatprep.subr.mxu0 0.0
      %2053 = vmatpush1.xpose.msra.mxu0 0.0
      %2054 = vmatprep.mubr.f32.mxu0 0.0
      %2055 = vmatmul.mubr.f32.gmra.mrb[0].mxu0 %v1985
      %v2056 = vpop.f32.mrb[0].mxu0
      %v2057 = vadd.f32 0.0, %v2056
      %v2058 = vpop.f32.mrb[0].mxu0
      %2059 = vdwg.mxu0
      %2060 = vrot.lane.b32.xlu0 %v1547, 112
      %v2061 = vpop.permute.xlu0 %2060
      %v2062 = vsel %vm1735, %v2061, 0
      %2064 = vmatprep.subr.mxu0 0.0
      %2065 = vmatpush1.msra.mxu0 %v1707
      %2066 = vmatprep.subr.mxu0 0.0
      %2067 = vmatpush1.msra.mxu0 0.0
      %2068 = vmatprep.subr.mxu0 0.0
      %2069 = vmatpush1.msra.mxu0 0.0
      %2070 = vmatprep.subr.mxu0 0.0
      %2071 = vmatpush1.msra.mxu0 0.0
      %2072 = vmatprep.subr.mxu0 0.0
      %2073 = vmatpush1.msra.mxu0 0.0
      %2074 = vmatprep.subr.mxu0 0.0
      %2075 = vmatpush1.msra.mxu0 0.0
      %2076 = vmatprep.subr.mxu0 0.0
      %2077 = vmatpush1.msra.mxu0 0.0
      %2078 = vmatprep.subr.mxu0 0.0
      %2079 = vmatpush1.msra.mxu0 0.0
      %2080 = vmatprep.subr.mxu0 0.0
      %2081 = vmatpush1.msra.mxu0 0.0
      %2082 = vmatprep.subr.mxu0 0.0
      %2083 = vmatpush1.msra.mxu0 0.0
      %2084 = vmatprep.subr.mxu0 0.0
      %2085 = vmatpush1.msra.mxu0 0.0
      %2086 = vmatprep.subr.mxu0 0.0
      %2087 = vmatpush1.msra.mxu0 0.0
      %2088 = vmatprep.subr.mxu0 0.0
      %2089 = vmatpush1.msra.mxu0 0.0
      %2090 = vmatprep.subr.mxu0 0.0
      %2091 = vmatpush1.msra.mxu0 0.0
      %2092 = vmatprep.subr.mxu0 0.0
      %2093 = vmatpush1.msra.mxu0 0.0
      %2094 = vmatprep.subr.mxu0 0.0
      %2095 = vmatpush1.msra.mxu0 0.0
      %2096 = vmatprep.subr.mxu0 0.0
      %2097 = vmatpush1.msra.mxu0 0.0
      %2098 = vmatprep.subr.mxu0 0.0
      %2099 = vmatpush1.msra.mxu0 0.0
      %2100 = vmatprep.subr.mxu0 0.0
      %2101 = vmatpush1.msra.mxu0 0.0
      %2102 = vmatprep.subr.mxu0 0.0
      %2103 = vmatpush1.msra.mxu0 0.0
      %2104 = vmatprep.subr.mxu0 0.0
      %2105 = vmatpush1.msra.mxu0 0.0
      %2106 = vmatprep.subr.mxu0 0.0
      %2107 = vmatpush1.msra.mxu0 0.0
      %2108 = vmatprep.subr.mxu0 0.0
      %2109 = vmatpush1.msra.mxu0 0.0
      %2110 = vmatprep.subr.mxu0 0.0
      %2111 = vmatpush1.msra.mxu0 0.0
      %2112 = vmatprep.subr.mxu0 0.0
      %2113 = vmatpush1.msra.mxu0 0.0
      %2114 = vmatprep.subr.mxu0 0.0
      %2115 = vmatpush1.msra.mxu0 0.0
      %2116 = vmatprep.subr.mxu0 0.0
      %2117 = vmatpush1.msra.mxu0 0.0
      %2118 = vmatprep.subr.mxu0 0.0
      %2119 = vmatpush1.msra.mxu0 0.0
      %2120 = vmatprep.subr.mxu0 0.0
      %2121 = vmatpush1.msra.mxu0 0.0
      %2122 = vmatprep.subr.mxu0 0.0
      %2123 = vmatpush1.msra.mxu0 0.0
      %2124 = vmatprep.subr.mxu0 0.0
      %2125 = vmatpush1.msra.mxu0 0.0
      %2126 = vmatprep.subr.mxu0 0.0
      %2127 = vmatpush1.msra.mxu0 0.0
      %2128 = vmatprep.mubr.f32.mxu0 0.0
      %2129 = vmatmul.mubr.f32.gmra.mrb[0].mxu0 %v2062
      %v2130 = vpop.f32.mrb[0].mxu0
      %v2131 = vadd.f32 0.0, %v2130
      %v2132 = vpop.f32.mrb[0].mxu0
      %2133 = vdwg.mxu0
      %v2134 = vmul.f32 %v2131, 0.35355338
      %v2135 = vsel %vm1810, %v2134, -inf
      %2136 = vmax.xlane.f32.xlu0 %v2135
      %v2137 = vpop.xlane.xlu0 %2136
      %v2138 = vsub.f32 %v2134, %v2137
      %v2139 = vmul.f32 %v2138, 1.442695
      %v2140 = vpow.pop %v2139
      %v2141 = vsel %vm1810, %v2140, 0.0
      %2142 = vadd.xlane.f32.xlu0 %v2141
      %v2143 = vpop.xlane.xlu0 %2142
      %v2144 = vrcp.pop %v2143
      %v2145 = vmul.f32 %v2140, %v2144
      %v2147 = vsel %vm1810, %v2145, 0
      %v2150 = vsel %vm1810, %v1727, 0
      %2152 = vmatprep.subr.mxu0 0.0
      %2153 = vmatpush1.xpose.msra.mxu0 %v2150
      %2154 = vmatprep.subr.mxu0 0.0
      %2155 = vmatpush1.xpose.msra.mxu0 0.0
      %2156 = vmatprep.subr.mxu0 0.0
      %2157 = vmatpush1.xpose.msra.mxu0 0.0
      %2158 = vmatprep.subr.mxu0 0.0
      %2159 = vmatpush1.xpose.msra.mxu0 0.0
      %2160 = vmatprep.subr.mxu0 0.0
      %2161 = vmatpush1.xpose.msra.mxu0 0.0
      %2162 = vmatprep.subr.mxu0 0.0
      %2163 = vmatpush1.xpose.msra.mxu0 0.0
      %2164 = vmatprep.subr.mxu0 0.0
      %2165 = vmatpush1.xpose.msra.mxu0 0.0
      %2166 = vmatprep.subr.mxu0 0.0
      %2167 = vmatpush1.xpose.msra.mxu0 0.0
      %2168 = vmatprep.subr.mxu0 0.0
      %2169 = vmatpush1.xpose.msra.mxu0 0.0
      %2170 = vmatprep.subr.mxu0 0.0
      %2171 = vmatpush1.xpose.msra.mxu0 0.0
      %2172 = vmatprep.subr.mxu0 0.0
      %2173 = vmatpush1.xpose.msra.mxu0 0.0
      %2174 = vmatprep.subr.mxu0 0.0
      %2175 = vmatpush1.xpose.msra.mxu0 0.0
      %2176 = vmatprep.subr.mxu0 0.0
      %2177 = vmatpush1.xpose.msra.mxu0 0.0
      %2178 = vmatprep.subr.mxu0 0.0
      %2179 = vmatpush1.xpose.msra.mxu0 0.0
      %2180 = vmatprep.subr.mxu0 0.0
      %2181 = vmatpush1.xpose.msra.mxu0 0.0
      %2182 = vmatprep.subr.mxu0 0.0
      %2183 = vmatpush1.xpose.msra.mxu0 0.0
      %2184 = vmatprep.subr.mxu0 0.0
      %2185 = vmatpush1.xpose.msra.mxu0 0.0
      %2186 = vmatprep.subr.mxu0 0.0
      %2187 = vmatpush1.xpose.msra.mxu0 0.0
      %2188 = vmatprep.subr.mxu0 0.0
      %2189 = vmatpush1.xpose.msra.mxu0 0.0
      %2190 = vmatprep.subr.mxu0 0.0
      %2191 = vmatpush1.xpose.msra.mxu0 0.0
      %2192 = vmatprep.subr.mxu0 0.0
      %2193 = vmatpush1.xpose.msra.mxu0 0.0
      %2194 = vmatprep.subr.mxu0 0.0
      %2195 = vmatpush1.xpose.msra.mxu0 0.0
      %2196 = vmatprep.subr.mxu0 0.0
      %2197 = vmatpush1.xpose.msra.mxu0 0.0
      %2198 = vmatprep.subr.mxu0 0.0
      %2199 = vmatpush1.xpose.msra.mxu0 0.0
      %2200 = vmatprep.subr.mxu0 0.0
      %2201 = vmatpush1.xpose.msra.mxu0 0.0
      %2202 = vmatprep.subr.mxu0 0.0
      %2203 = vmatpush1.xpose.msra.mxu0 0.0
      %2204 = vmatprep.subr.mxu0 0.0
      %2205 = vmatpush1.xpose.msra.mxu0 0.0
      %2206 = vmatprep.subr.mxu0 0.0
      %2207 = vmatpush1.xpose.msra.mxu0 0.0
      %2208 = vmatprep.subr.mxu0 0.0
      %2209 = vmatpush1.xpose.msra.mxu0 0.0
      %2210 = vmatprep.subr.mxu0 0.0
      %2211 = vmatpush1.xpose.msra.mxu0 0.0
      %2212 = vmatprep.subr.mxu0 0.0
      %2213 = vmatpush1.xpose.msra.mxu0 0.0
      %2214 = vmatprep.subr.mxu0 0.0
      %2215 = vmatpush1.xpose.msra.mxu0 0.0
      %2216 = vmatprep.mubr.f32.mxu0 0.0
      %2217 = vmatmul.mubr.f32.gmra.mrb[0].mxu0 %v2147
      %v2218 = vpop.f32.mrb[0].mxu0
      %v2219 = vadd.f32 0.0, %v2218
      %v2220 = vpop.f32.mrb[0].mxu0
      %2221 = vdwg.mxu0
      %2222 = vrot.lane.b32.xlu0 %v1547, 104
      %v2223 = vpop.permute.xlu0 %2222
      %v2224 = vsel %vm1735, %v2223, 0
      %2226 = vmatprep.subr.mxu0 0.0
      %2227 = vmatpush1.msra.mxu0 %v1712
      %2228 = vmatprep.subr.mxu0 0.0
      %2229 = vmatpush1.msra.mxu0 0.0
      %2230 = vmatprep.subr.mxu0 0.0
      %2231 = vmatpush1.msra.mxu0 0.0
      %2232 = vmatprep.subr.mxu0 0.0
      %2233 = vmatpush1.msra.mxu0 0.0
      %2234 = vmatprep.subr.mxu0 0.0
      %2235 = vmatpush1.msra.mxu0 0.0
      %2236 = vmatprep.subr.mxu0 0.0
      %2237 = vmatpush1.msra.mxu0 0.0
      %2238 = vmatprep.subr.mxu0 0.0
      %2239 = vmatpush1.msra.mxu0 0.0
      %2240 = vmatprep.subr.mxu0 0.0
      %2241 = vmatpush1.msra.mxu0 0.0
      %2242 = vmatprep.subr.mxu0 0.0
      %2243 = vmatpush1.msra.mxu0 0.0
      %2244 = vmatprep.subr.mxu0 0.0
      %2245 = vmatpush1.msra.mxu0 0.0
      %2246 = vmatprep.subr.mxu0 0.0
      %2247 = vmatpush1.msra.mxu0 0.0
      %2248 = vmatprep.subr.mxu0 0.0
      %2249 = vmatpush1.msra.mxu0 0.0
      %2250 = vmatprep.subr.mxu0 0.0
      %2251 = vmatpush1.msra.mxu0 0.0
      %2252 = vmatprep.subr.mxu0 0.0
      %2253 = vmatpush1.msra.mxu0 0.0
      %2254 = vmatprep.subr.mxu0 0.0
      %2255 = vmatpush1.msra.mxu0 0.0
      %2256 = vmatprep.subr.mxu0 0.0
      %2257 = vmatpush1.msra.mxu0 0.0
      %2258 = vmatprep.subr.mxu0 0.0
      %2259 = vmatpush1.msra.mxu0 0.0
      %2260 = vmatprep.subr.mxu0 0.0
      %2261 = vmatpush1.msra.mxu0 0.0
      %2262 = vmatprep.subr.mxu0 0.0
      %2263 = vmatpush1.msra.mxu0 0.0
      %2264 = vmatprep.subr.mxu0 0.0
      %2265 = vmatpush1.msra.mxu0 0.0
      %2266 = vmatprep.subr.mxu0 0.0
      %2267 = vmatpush1.msra.mxu0 0.0
      %2268 = vmatprep.subr.mxu0 0.0
      %2269 = vmatpush1.msra.mxu0 0.0
      %2270 = vmatprep.subr.mxu0 0.0
      %2271 = vmatpush1.msra.mxu0 0.0
      %2272 = vmatprep.subr.mxu0 0.0
      %2273 = vmatpush1.msra.mxu0 0.0
      %2274 = vmatprep.subr.mxu0 0.0
      %2275 = vmatpush1.msra.mxu0 0.0
      %2276 = vmatprep.subr.mxu0 0.0
      %2277 = vmatpush1.msra.mxu0 0.0
      %2278 = vmatprep.subr.mxu0 0.0
      %2279 = vmatpush1.msra.mxu0 0.0
      %2280 = vmatprep.subr.mxu0 0.0
      %2281 = vmatpush1.msra.mxu0 0.0
      %2282 = vmatprep.subr.mxu0 0.0
      %2283 = vmatpush1.msra.mxu0 0.0
      %2284 = vmatprep.subr.mxu0 0.0
      %2285 = vmatpush1.msra.mxu0 0.0
      %2286 = vmatprep.subr.mxu0 0.0
      %2287 = vmatpush1.msra.mxu0 0.0
      %2288 = vmatprep.subr.mxu0 0.0
      %2289 = vmatpush1.msra.mxu0 0.0
      %2290 = vmatprep.mubr.f32.mxu0 0.0
      %2291 = vmatmul.mubr.f32.gmra.mrb[0].mxu0 %v2224
      %v2292 = vpop.f32.mrb[0].mxu0
      %v2293 = vadd.f32 0.0, %v2292
      %v2294 = vpop.f32.mrb[0].mxu0
      %2295 = vdwg.mxu0
      %v2296 = vmul.f32 %v2293, 0.35355338
      %v2297 = vsel %vm1810, %v2296, -inf
      %2298 = vmax.xlane.f32.xlu0 %v2297
      %v2299 = vpop.xlane.xlu0 %2298
      %v2300 = vsub.f32 %v2296, %v2299
      %v2301 = vmul.f32 %v2300, 1.442695
      %v2302 = vpow.pop %v2301
      %v2303 = vsel %vm1810, %v2302, 0.0
      %2304 = vadd.xlane.f32.xlu0 %v2303
      %v2305 = vpop.xlane.xlu0 %2304
      %v2306 = vrcp.pop %v2305
      %v2307 = vmul.f32 %v2302, %v2306
      %v2309 = vsel %vm1810, %v2307, 0
      %v2312 = vsel %vm1810, %v1732, 0
      %2314 = vmatprep.subr.mxu0 0.0
      %2315 = vmatpush1.xpose.msra.mxu0 %v2312
      %2316 = vmatprep.subr.mxu0 0.0
      %2317 = vmatpush1.xpose.msra.mxu0 0.0
      %2318 = vmatprep.subr.mxu0 0.0
      %2319 = vmatpush1.xpose.msra.mxu0 0.0
      %2320 = vmatprep.subr.mxu0 0.0
      %2321 = vmatpush1.xpose.msra.mxu0 0.0
      %2322 = vmatprep.subr.mxu0 0.0
      %2323 = vmatpush1.xpose.msra.mxu0 0.0
      %2324 = vmatprep.subr.mxu0 0.0
      %2325 = vmatpush1.xpose.msra.mxu0 0.0
      %2326 = vmatprep.subr.mxu0 0.0
      %2327 = vmatpush1.xpose.msra.mxu0 0.0
      %2328 = vmatprep.subr.mxu0 0.0
      %2329 = vmatpush1.xpose.msra.mxu0 0.0
      %2330 = vmatprep.subr.mxu0 0.0
      %2331 = vmatpush1.xpose.msra.mxu0 0.0
      %2332 = vmatprep.subr.mxu0 0.0
      %2333 = vmatpush1.xpose.msra.mxu0 0.0
      %2334 = vmatprep.subr.mxu0 0.0
      %2335 = vmatpush1.xpose.msra.mxu0 0.0
      %2336 = vmatprep.subr.mxu0 0.0
      %2337 = vmatpush1.xpose.msra.mxu0 0.0
      %2338 = vmatprep.subr.mxu0 0.0
      %2339 = vmatpush1.xpose.msra.mxu0 0.0
      %2340 = vmatprep.subr.mxu0 0.0
      %2341 = vmatpush1.xpose.msra.mxu0 0.0
      %2342 = vmatprep.subr.mxu0 0.0
      %2343 = vmatpush1.xpose.msra.mxu0 0.0
      %2344 = vmatprep.subr.mxu0 0.0
      %2345 = vmatpush1.xpose.msra.mxu0 0.0
      %2346 = vmatprep.subr.mxu0 0.0
      %2347 = vmatpush1.xpose.msra.mxu0 0.0
      %2348 = vmatprep.subr.mxu0 0.0
      %2349 = vmatpush1.xpose.msra.mxu0 0.0
      %2350 = vmatprep.subr.mxu0 0.0
      %2351 = vmatpush1.xpose.msra.mxu0 0.0
      %2352 = vmatprep.subr.mxu0 0.0
      %2353 = vmatpush1.xpose.msra.mxu0 0.0
      %2354 = vmatprep.subr.mxu0 0.0
      %2355 = vmatpush1.xpose.msra.mxu0 0.0
      %2356 = vmatprep.subr.mxu0 0.0
      %2357 = vmatpush1.xpose.msra.mxu0 0.0
      %2358 = vmatprep.subr.mxu0 0.0
      %2359 = vmatpush1.xpose.msra.mxu0 0.0
      %2360 = vmatprep.subr.mxu0 0.0
      %2361 = vmatpush1.xpose.msra.mxu0 0.0
      %2362 = vmatprep.subr.mxu0 0.0
      %2363 = vmatpush1.xpose.msra.mxu0 0.0
      %2364 = vmatprep.subr.mxu0 0.0
      %2365 = vmatpush1.xpose.msra.mxu0 0.0
      %2366 = vmatprep.subr.mxu0 0.0
      %2367 = vmatpush1.xpose.msra.mxu0 0.0
      %2368 = vmatprep.subr.mxu0 0.0
      %2369 = vmatpush1.xpose.msra.mxu0 0.0
      %2370 = vmatprep.subr.mxu0 0.0
      %2371 = vmatpush1.xpose.msra.mxu0 0.0
      %2372 = vmatprep.subr.mxu0 0.0
      %2373 = vmatpush1.xpose.msra.mxu0 0.0
      %2374 = vmatprep.subr.mxu0 0.0
      %2375 = vmatpush1.xpose.msra.mxu0 0.0
      %2376 = vmatprep.subr.mxu0 0.0
      %2377 = vmatpush1.xpose.msra.mxu0 0.0
      %2378 = vmatprep.mubr.f32.mxu0 0.0
      %2379 = vmatmul.mubr.f32.gmra.mrb[0].mxu0 %v2309
      %v2380 = vpop.f32.mrb[0].mxu0
      %v2381 = vadd.f32 0.0, %v2380
      %v2382 = vpop.f32.mrb[0].mxu0
      %2383 = vdwg.mxu0
      %2385 = vrot.lane.b32.xlu0 %v2057, 8
      %v2386 = vpop.permute.xlu0 %2385
      %2389 = vrot.lane.b32.xlu0 %v2219, 16
      %v2390 = vpop.permute.xlu0 %2389
      %2393 = vrot.lane.b32.xlu0 %v2381, 24
      %v2394 = vpop.permute.xlu0 %2393
      %v2396 = vsel %vm1735, %v1895, %v2386
      %v2397 = vsel %vm1810, %v2396, %v2390
      %vm2398 = vcmask 195584
      %v2399 = vsel %vm2398, %v2397, %v2394
      %v2400 = vld [vmem:[%s7] sm:$0xff]
      %v2401 = vld [vmem:[%s7 + $0x8] sm:$0xff]
      %v2402 = vld [vmem:[%s7 + $0x10] sm:$0xff]
      %v2403 = vld [vmem:[%s7 + $0x18] sm:$0xff]
      %v2404 = vlaneseq
      %v2405 = vshrl.u32 %v2404, 7
      %v2406 = vsub.s32 1, %v2405
      %v2407 = vrot.slane %v1466, %v2406
      %v2409 = vsel %vm1476, %v2399, 0
      %2411 = vmatprep.subr.mxu0 0.0
      %2412 = vmatpush1.msra.mxu0 %v2400
      %2413 = vmatprep.subr.mxu0 0.0
      %2414 = vmatpush1.msra.mxu0 %v2401
      %2415 = vmatprep.subr.mxu0 0.0
      %2416 = vmatpush1.msra.mxu0 %v2402
      %2417 = vmatprep.subr.mxu0 0.0
      %2418 = vmatpush1.msra.mxu0 %v2403
      %2419 = vmatprep.subr.mxu0 0.0
      %2420 = vmatpush1.msra.mxu0 0.0
      %2421 = vmatprep.subr.mxu0 0.0
      %2422 = vmatpush1.msra.mxu0 0.0
      %2423 = vmatprep.subr.mxu0 0.0
      %2424 = vmatpush1.msra.mxu0 0.0
      %2425 = vmatprep.subr.mxu0 0.0
      %2426 = vmatpush1.msra.mxu0 0.0
      %2427 = vmatprep.subr.mxu0 0.0
      %2428 = vmatpush1.msra.mxu0 0.0
      %2429 = vmatprep.subr.mxu0 0.0
      %2430 = vmatpush1.msra.mxu0 0.0
      %2431 = vmatprep.subr.mxu0 0.0
      %2432 = vmatpush1.msra.mxu0 0.0
      %2433 = vmatprep.subr.mxu0 0.0
      %2434 = vmatpush1.msra.mxu0 0.0
      %2435 = vmatprep.subr.mxu0 0.0
      %2436 = vmatpush1.msra.mxu0 0.0
      %2437 = vmatprep.subr.mxu0 0.0
      %2438 = vmatpush1.msra.mxu0 0.0
      %2439 = vmatprep.subr.mxu0 0.0
      %2440 = vmatpush1.msra.mxu0 0.0
      %2441 = vmatprep.subr.mxu0 0.0
      %2442 = vmatpush1.msra.mxu0 0.0
      %2443 = vmatprep.subr.mxu0 0.0
      %2444 = vmatpush1.msra.mxu0 0.0
      %2445 = vmatprep.subr.mxu0 0.0
      %2446 = vmatpush1.msra.mxu0 0.0
      %2447 = vmatprep.subr.mxu0 0.0
      %2448 = vmatpush1.msra.mxu0 0.0
      %2449 = vmatprep.subr.mxu0 0.0
      %2450 = vmatpush1.msra.mxu0 0.0
      %2451 = vmatprep.subr.mxu0 0.0
      %2452 = vmatpush1.msra.mxu0 0.0
      %2453 = vmatprep.subr.mxu0 0.0
      %2454 = vmatpush1.msra.mxu0 0.0
      %2455 = vmatprep.subr.mxu0 0.0
      %2456 = vmatpush1.msra.mxu0 0.0
      %2457 = vmatprep.subr.mxu0 0.0
      %2458 = vmatpush1.msra.mxu0 0.0
      %2459 = vmatprep.subr.mxu0 0.0
      %2460 = vmatpush1.msra.mxu0 0.0
      %2461 = vmatprep.subr.mxu0 0.0
      %2462 = vmatpush1.msra.mxu0 0.0
      %2463 = vmatprep.subr.mxu0 0.0
      %2464 = vmatpush1.msra.mxu0 0.0
      %2465 = vmatprep.subr.mxu0 0.0
      %2466 = vmatpush1.msra.mxu0 0.0
      %2467 = vmatprep.subr.mxu0 0.0
      %2468 = vmatpush1.msra.mxu0 0.0
      %2469 = vmatprep.subr.mxu0 0.0
      %2470 = vmatpush1.msra.mxu0 0.0
      %2471 = vmatprep.subr.mxu0 0.0
      %2472 = vmatpush1.msra.mxu0 0.0
      %2473 = vmatprep.subr.mxu0 0.0
      %2474 = vmatpush1.msra.mxu0 0.0
      %2475 = vmatprep.mubr.f32.mxu0 0.0
      %2476 = vmatmul.mubr.f32.gmra.mrb[0].mxu0 %v2409
      %v2477 = vpop.f32.mrb[0].mxu0
      %v2478 = vadd.f32 %v2407, %v2477
      %v2479 = vpop.f32.mrb[0].mxu0
      %2480 = vdwg.mxu0
      %v2481 = vadd.f32 %v1465, %v2478
      %v2482 = vsel %vm1476, %v2481, 0.0
      %2483 = vadd.xlane.f32.xlu0 %v2482
      %v2484 = vpop.xlane.xlu0 %2483
      %v2485 = vrcp.pop 32.0
      %v2486 = vmul.f32 %v2484, %v2485
      %v2487 = vsub.f32 %v2481, %v2486
      %v2488 = vmul.f32 %v2487, %v2487
      %v2489 = vsel %vm1476, %v2488, 0.0
      %2490 = vadd.xlane.f32.xlu0 %v2489
      %v2491 = vpop.xlane.xlu0 %2490
      %v2492 = vmul.f32 %v2491, %v2485
      %v2493 = vadd.f32 %v2492, 1e-05
      %v2494 = vrsqrt.pop %v2493
      %v2495 = vmul.f32 %v2487, %v2494
      %v2496 = vlaneseq
      %v2497 = vshrl.u32 %v2496, 7
      %v2498 = vsub.s32 4, %v2497
      %v2499 = vrot.slane %v1466, %v2498
      %v2500 = vmul.f32 %v2495, %v2499
      %v2501 = vlaneseq
      %v2502 = vshrl.u32 %v2501, 7
      %v2503 = vsub.s32 5, %v2502
      %v2504 = vrot.slane %v1466, %v2503
      %v2505 = vadd.f32 %v2500, %v2504
      %v2506 = vld [vmem:[%s8] sm:$0xff]
      %v2507 = vld [vmem:[%s8 + $0x8] sm:$0xff]
      %v2508 = vld [vmem:[%s8 + $0x10] sm:$0xff]
      %v2509 = vld [vmem:[%s8 + $0x18] sm:$0xff]
      %v2510 = vlaneseq
      %v2511 = vshrl.u32 %v2510, 7
      %v2512 = vsub.s32 2, %v2511
      %v2513 = vrot.slane %v1466, %v2512
      %v2515 = vsel %vm1476, %v2505, 0
      %2517 = vmatprep.subr.mxu0 0.0
      %2518 = vmatpush1.msra.mxu0 %v2506
      %2519 = vmatprep.subr.mxu0 0.0
      %2520 = vmatpush1.msra.mxu0 %v2507
      %2521 = vmatprep.subr.mxu0 0.0
      %2522 = vmatpush1.msra.mxu0 %v2508
      %2523 = vmatprep.subr.mxu0 0.0
      %2524 = vmatpush1.msra.mxu0 %v2509
      %2525 = vmatprep.subr.mxu0 0.0
      %2526 = vmatpush1.msra.mxu0 0.0
      %2527 = vmatprep.subr.mxu0 0.0
      %2528 = vmatpush1.msra.mxu0 0.0
      %2529 = vmatprep.subr.mxu0 0.0
      %2530 = vmatpush1.msra.mxu0 0.0
      %2531 = vmatprep.subr.mxu0 0.0
      %2532 = vmatpush1.msra.mxu0 0.0
      %2533 = vmatprep.subr.mxu0 0.0
      %2534 = vmatpush1.msra.mxu0 0.0
      %2535 = vmatprep.subr.mxu0 0.0
      %2536 = vmatpush1.msra.mxu0 0.0
      %2537 = vmatprep.subr.mxu0 0.0
      %2538 = vmatpush1.msra.mxu0 0.0
      %2539 = vmatprep.subr.mxu0 0.0
      %2540 = vmatpush1.msra.mxu0 0.0
      %2541 = vmatprep.subr.mxu0 0.0
      %2542 = vmatpush1.msra.mxu0 0.0
      %2543 = vmatprep.subr.mxu0 0.0
      %2544 = vmatpush1.msra.mxu0 0.0
      %2545 = vmatprep.subr.mxu0 0.0
      %2546 = vmatpush1.msra.mxu0 0.0
      %2547 = vmatprep.subr.mxu0 0.0
      %2548 = vmatpush1.msra.mxu0 0.0
      %2549 = vmatprep.subr.mxu0 0.0
      %2550 = vmatpush1.msra.mxu0 0.0
      %2551 = vmatprep.subr.mxu0 0.0
      %2552 = vmatpush1.msra.mxu0 0.0
      %2553 = vmatprep.subr.mxu0 0.0
      %2554 = vmatpush1.msra.mxu0 0.0
      %2555 = vmatprep.subr.mxu0 0.0
      %2556 = vmatpush1.msra.mxu0 0.0
      %2557 = vmatprep.subr.mxu0 0.0
      %2558 = vmatpush1.msra.mxu0 0.0
      %2559 = vmatprep.subr.mxu0 0.0
      %2560 = vmatpush1.msra.mxu0 0.0
      %2561 = vmatprep.subr.mxu0 0.0
      %2562 = vmatpush1.msra.mxu0 0.0
      %2563 = vmatprep.subr.mxu0 0.0
      %2564 = vmatpush1.msra.mxu0 0.0
      %2565 = vmatprep.subr.mxu0 0.0
      %2566 = vmatpush1.msra.mxu0 0.0
      %2567 = vmatprep.subr.mxu0 0.0
      %2568 = vmatpush1.msra.mxu0 0.0
      %2569 = vmatprep.subr.mxu0 0.0
      %2570 = vmatpush1.msra.mxu0 0.0
      %2571 = vmatprep.subr.mxu0 0.0
      %2572 = vmatpush1.msra.mxu0 0.0
      %2573 = vmatprep.subr.mxu0 0.0
      %2574 = vmatpush1.msra.mxu0 0.0
      %2575 = vmatprep.subr.mxu0 0.0
      %2576 = vmatpush1.msra.mxu0 0.0
      %2577 = vmatprep.subr.mxu0 0.0
      %2578 = vmatpush1.msra.mxu0 0.0
      %2579 = vmatprep.subr.mxu0 0.0
      %2580 = vmatpush1.msra.mxu0 0.0
      %2581 = vmatprep.mubr.f32.mxu0 0.0
      %2582 = vmatmul.mubr.f32.gmra.mrb[0].mxu0 %v2515
      %v2583 = vpop.f32.mrb[0].mxu0
      %v2584 = vadd.f32 %v2513, %v2583
      %v2585 = vpop.f32.mrb[0].mxu0
      %2586 = vdwg.mxu0
      %v2587 = vmax.f32 %v2584, 0.0
      %v2588 = vld [vmem:[%s9] sm:$0xff]
      %v2589 = vld [vmem:[%s9 + $0x8] sm:$0xff]
      %v2590 = vld [vmem:[%s9 + $0x10] sm:$0xff]
      %v2591 = vld [vmem:[%s9 + $0x18] sm:$0xff]
      %v2592 = vld [vmem:[%s9 + $0x20] sm:$0xff]
      %v2593 = vld [vmem:[%s9 + $0x28] sm:$0xff]
      %v2594 = vld [vmem:[%s9 + $0x30] sm:$0xff]
      %v2595 = vld [vmem:[%s9 + $0x38] sm:$0xff]
      %v2596 = vlaneseq
      %v2597 = vshrl.u32 %v2596, 7
      %v2598 = vsub.s32 3, %v2597
      %v2599 = vrot.slane %v1466, %v2598
      %vm2600 = vcmask 523264
      %v2602 = vsel %vm2600, %v2587, 0
      %2604 = vmatprep.subr.mxu0 0.0
      %2605 = vmatpush1.msra.mxu0 %v2588
      %2606 = vmatprep.subr.mxu0 0.0
      %2607 = vmatpush1.msra.mxu0 %v2589
      %2608 = vmatprep.subr.mxu0 0.0
      %2609 = vmatpush1.msra.mxu0 %v2590
      %2610 = vmatprep.subr.mxu0 0.0
      %2611 = vmatpush1.msra.mxu0 %v2591
      %2612 = vmatprep.subr.mxu0 0.0
      %2613 = vmatpush1.msra.mxu0 %v2592
      %2614 = vmatprep.subr.mxu0 0.0
      %2615 = vmatpush1.msra.mxu0 %v2593
      %2616 = vmatprep.subr.mxu0 0.0
      %2617 = vmatpush1.msra.mxu0 %v2594
      %2618 = vmatprep.subr.mxu0 0.0
      %2619 = vmatpush1.msra.mxu0 %v2595
      %2620 = vmatprep.subr.mxu0 0.0
      %2621 = vmatpush1.msra.mxu0 0.0
      %2622 = vmatprep.subr.mxu0 0.0
      %2623 = vmatpush1.msra.mxu0 0.0
      %2624 = vmatprep.subr.mxu0 0.0
      %2625 = vmatpush1.msra.mxu0 0.0
      %2626 = vmatprep.subr.mxu0 0.0
      %2627 = vmatpush1.msra.mxu0 0.0
      %2628 = vmatprep.subr.mxu0 0.0
      %2629 = vmatpush1.msra.mxu0 0.0
      %2630 = vmatprep.subr.mxu0 0.0
      %2631 = vmatpush1.msra.mxu0 0.0
      %2632 = vmatprep.subr.mxu0 0.0
      %2633 = vmatpush1.msra.mxu0 0.0
      %2634 = vmatprep.subr.mxu0 0.0
      %2635 = vmatpush1.msra.mxu0 0.0
      %2636 = vmatprep.subr.mxu0 0.0
      %2637 = vmatpush1.msra.mxu0 0.0
      %2638 = vmatprep.subr.mxu0 0.0
      %2639 = vmatpush1.msra.mxu0 0.0
      %2640 = vmatprep.subr.mxu0 0.0
      %2641 = vmatpush1.msra.mxu0 0.0
      %2642 = vmatprep.subr.mxu0 0.0
      %2643 = vmatpush1.msra.mxu0 0.0
      %2644 = vmatprep.subr.mxu0 0.0
      %2645 = vmatpush1.msra.mxu0 0.0
      %2646 = vmatprep.subr.mxu0 0.0
      %2647 = vmatpush1.msra.mxu0 0.0
      %2648 = vmatprep.subr.mxu0 0.0
      %2649 = vmatpush1.msra.mxu0 0.0
      %2650 = vmatprep.subr.mxu0 0.0
      %2651 = vmatpush1.msra.mxu0 0.0
      %2652 = vmatprep.subr.mxu0 0.0
      %2653 = vmatpush1.msra.mxu0 0.0
      %2654 = vmatprep.subr.mxu0 0.0
      %2655 = vmatpush1.msra.mxu0 0.0
      %2656 = vmatprep.subr.mxu0 0.0
      %2657 = vmatpush1.msra.mxu0 0.0
      %2658 = vmatprep.subr.mxu0 0.0
      %2659 = vmatpush1.msra.mxu0 0.0
      %2660 = vmatprep.subr.mxu0 0.0
      %2661 = vmatpush1.msra.mxu0 0.0
      %2662 = vmatprep.subr.mxu0 0.0
      %2663 = vmatpush1.msra.mxu0 0.0
      %2664 = vmatprep.subr.mxu0 0.0
      %2665 = vmatpush1.msra.mxu0 0.0
      %2666 = vmatprep.subr.mxu0 0.0
      %2667 = vmatpush1.msra.mxu0 0.0
      %2668 = vmatprep.mubr.f32.mxu0 0.0
      %2669 = vmatmul.mubr.f32.gmra.mrb[0].mxu0 %v2602
      %v2670 = vpop.f32.mrb[0].mxu0
      %v2671 = vadd.f32 %v2599, %v2670
      %v2672 = vpop.f32.mrb[0].mxu0
      %2673 = vdwg.mxu0
      %v2674 = vadd.f32 %v2505, %v2671
      %v2675 = vsel %vm1476, %v2674, 0.0
      %2676 = vadd.xlane.f32.xlu0 %v2675
      %v2677 = vpop.xlane.xlu0 %2676
      %v2678 = vmul.f32 %v2677, %v2485
      %v2679 = vsub.f32 %v2674, %v2678
      %v2680 = vmul.f32 %v2679, %v2679
      %v2681 = vsel %vm1476, %v2680, 0.0
      %2682 = vadd.xlane.f32.xlu0 %v2681
      %v2683 = vpop.xlane.xlu0 %2682
      %v2684 = vmul.f32 %v2683, %v2485
      %v2685 = vadd.f32 %v2684, 1e-05
      %v2686 = vrsqrt.pop %v2685
      %v2687 = vmul.f32 %v2679, %v2686
      %v2688 = vlaneseq
      %v2689 = vshrl.u32 %v2688, 7
      %v2690 = vsub.s32 6, %v2689
      %v2691 = vrot.slane %v1466, %v2690
      %v2692 = vmul.f32 %v2687, %v2691
      %v2693 = vlaneseq
      %v2694 = vshrl.u32 %v2693, 7
      %v2695 = vsub.s32 7, %v2694
      %v2696 = vrot.slane %v1466, %v2695
      %v2697 = vadd.f32 %v2692, %v2696
      %s2698 = scalar_lea.vmem %s10, 8
      %v2699 = vld [vmem:[%s2698] sm:$0xff]
      %v2700 = vadd.f32 %v2697, %v1465
      %s2701 = scalar_lea.vmem %s4, 32
      %v2702 = vld [vmem:[%s2701] sm:$0xff]
      %v2703 = vld [vmem:[%s2701 + $0x8] sm:$0xff]
      %v2704 = vld [vmem:[%s2701 + $0x10] sm:$0xff]
      %v2705 = vld [vmem:[%s2701 + $0x18] sm:$0xff]
      %v2706 = vlaneseq
      %v2707 = vshrl.u32 %v2706, 7
      %v2708 = vsub.s32 0, %v2707
      %v2709 = vrot.slane %v2699, %v2708
      %v2711 = vsel %vm1476, %v2700, 0
      %2713 = vmatprep.subr.mxu0 0.0
      %2714 = vmatpush1.msra.mxu0 %v2702
      %2715 = vmatprep.subr.mxu0 0.0
      %2716 = vmatpush1.msra.mxu0 %v2703
      %2717 = vmatprep.subr.mxu0 0.0
      %2718 = vmatpush1.msra.mxu0 %v2704
      %2719 = vmatprep.subr.mxu0 0.0
      %2720 = vmatpush1.msra.mxu0 %v2705
      %2721 = vmatprep.subr.mxu0 0.0
      %2722 = vmatpush1.msra.mxu0 0.0
      %2723 = vmatprep.subr.mxu0 0.0
      %2724 = vmatpush1.msra.mxu0 0.0
      %2725 = vmatprep.subr.mxu0 0.0
      %2726 = vmatpush1.msra.mxu0 0.0
      %2727 = vmatprep.subr.mxu0 0.0
      %2728 = vmatpush1.msra.mxu0 0.0
      %2729 = vmatprep.subr.mxu0 0.0
      %2730 = vmatpush1.msra.mxu0 0.0
      %2731 = vmatprep.subr.mxu0 0.0
      %2732 = vmatpush1.msra.mxu0 0.0
      %2733 = vmatprep.subr.mxu0 0.0
      %2734 = vmatpush1.msra.mxu0 0.0
      %2735 = vmatprep.subr.mxu0 0.0
      %2736 = vmatpush1.msra.mxu0 0.0
      %2737 = vmatprep.subr.mxu0 0.0
      %2738 = vmatpush1.msra.mxu0 0.0
      %2739 = vmatprep.subr.mxu0 0.0
      %2740 = vmatpush1.msra.mxu0 0.0
      %2741 = vmatprep.subr.mxu0 0.0
      %2742 = vmatpush1.msra.mxu0 0.0
      %2743 = vmatprep.subr.mxu0 0.0
      %2744 = vmatpush1.msra.mxu0 0.0
      %2745 = vmatprep.subr.mxu0 0.0
      %2746 = vmatpush1.msra.mxu0 0.0
      %2747 = vmatprep.subr.mxu0 0.0
      %2748 = vmatpush1.msra.mxu0 0.0
      %2749 = vmatprep.subr.mxu0 0.0
      %2750 = vmatpush1.msra.mxu0 0.0
      %2751 = vmatprep.subr.mxu0 0.0
      %2752 = vmatpush1.msra.mxu0 0.0
      %2753 = vmatprep.subr.mxu0 0.0
      %2754 = vmatpush1.msra.mxu0 0.0
      %2755 = vmatprep.subr.mxu0 0.0
      %2756 = vmatpush1.msra.mxu0 0.0
      %2757 = vmatprep.subr.mxu0 0.0
      %2758 = vmatpush1.msra.mxu0 0.0
      %2759 = vmatprep.subr.mxu0 0.0
      %2760 = vmatpush1.msra.mxu0 0.0
      %2761 = vmatprep.subr.mxu0 0.0
      %2762 = vmatpush1.msra.mxu0 0.0
      %2763 = vmatprep.subr.mxu0 0.0
      %2764 = vmatpush1.msra.mxu0 0.0
      %2765 = vmatprep.subr.mxu0 0.0
      %2766 = vmatpush1.msra.mxu0 0.0
      %2767 = vmatprep.subr.mxu0 0.0
      %2768 = vmatpush1.msra.mxu0 0.0
      %2769 = vmatprep.subr.mxu0 0.0
      %2770 = vmatpush1.msra.mxu0 0.0
      %2771 = vmatprep.subr.mxu0 0.0
      %2772 = vmatpush1.msra.mxu0 0.0
      %2773 = vmatprep.subr.mxu0 0.0
      %2774 = vmatpush1.msra.mxu0 0.0
      %2775 = vmatprep.subr.mxu0 0.0
      %2776 = vmatpush1.msra.mxu0 0.0
      %2777 = vmatprep.mubr.f32.mxu0 0.0
      %2778 = vmatmul.mubr.f32.gmra.mrb[0].mxu0 %v2711
      %v2779 = vpop.f32.mrb[0].mxu0
      %v2780 = vadd.f32 %v2709, %v2779
      %v2781 = vpop.f32.mrb[0].mxu0
      %2782 = vdwg.mxu0
      %s2783 = scalar_lea.vmem %s5, 64
      %v2784 = vld [vmem:[%s2783] sm:$0xff]
      %v2785 = vld [vmem:[%s2783 + $0x8] sm:$0xff]
      %v2786 = vld [vmem:[%s2783 + $0x10] sm:$0xff]
      %v2787 = vld [vmem:[%s2783 + $0x18] sm:$0xff]
      %v2788 = vld [vmem:[%s2783 + $0x20] sm:$0xff]
      %v2789 = vld [vmem:[%s2783 + $0x28] sm:$0xff]
      %v2790 = vld [vmem:[%s2783 + $0x30] sm:$0xff]
      %v2791 = vld [vmem:[%s2783 + $0x38] sm:$0xff]
      %s2792 = scalar_lea.vmem %s6, 64
      %v2793 = vld [vmem:[%s2792] sm:$0xff]
      %v2794 = vld [vmem:[%s2792 + $0x8] sm:$0xff]
      %v2795 = vld [vmem:[%s2792 + $0x10] sm:$0xff]
      %v2796 = vld [vmem:[%s2792 + $0x18] sm:$0xff]
      %v2797 = vld [vmem:[%s2792 + $0x20] sm:$0xff]
      %v2798 = vld [vmem:[%s2792 + $0x28] sm:$0xff]
      %v2799 = vld [vmem:[%s2792 + $0x30] sm:$0xff]
      %v2800 = vld [vmem:[%s2792 + $0x38] sm:$0xff]
      %2802 = vset.pattern.permute.xlu0 0
      %2803 = vperm.xlu0 %2802, %v2793
      %v2804 = vpop.permute.xlu0 %2803
      %2807 = vset.pattern.permute.xlu0 0
      %2808 = vperm.xlu0 %2807, %v2794
      %v2809 = vpop.permute.xlu0 %2808
      %2812 = vset.pattern.permute.xlu0 0
      %2813 = vperm.xlu0 %2812, %v2795
      %v2814 = vpop.permute.xlu0 %2813
      %2817 = vset.pattern.permute.xlu0 0
      %2818 = vperm.xlu0 %2817, %v2796
      %v2819 = vpop.permute.xlu0 %2818
      %2822 = vset.pattern.permute.xlu0 0
      %2823 = vperm.xlu0 %2822, %v2797
      %v2824 = vpop.permute.xlu0 %2823
      %2827 = vset.pattern.permute.xlu0 0
      %2828 = vperm.xlu0 %2827, %v2798
      %v2829 = vpop.permute.xlu0 %2828
      %2832 = vset.pattern.permute.xlu0 0
      %2833 = vperm.xlu0 %2832, %v2799
      %v2834 = vpop.permute.xlu0 %2833
      %2837 = vset.pattern.permute.xlu0 0
      %2838 = vperm.xlu0 %2837, %v2800
      %v2839 = vpop.permute.xlu0 %2838
      %v2842 = vsel %vm1476, %v2784, 0
      %v2845 = vsel %vm1476, %v2785, 0
      %v2848 = vsel %vm1476, %v2786, 0
      %v2851 = vsel %vm1476, %v2787, 0
      %v2854 = vsel %vm1476, %v2788, 0
      %v2857 = vsel %vm1476, %v2789, 0
      %v2860 = vsel %vm1476, %v2790, 0
      %v2863 = vsel %vm1476, %v2791, 0
      %2865 = vmatprep.subr.mxu0 0.0
      %2866 = vmatpush1.msra.mxu0 %v1447
      %2867 = vmatprep.subr.mxu0 0.0
      %2868 = vmatpush1.msra.mxu0 %v1452
      %2869 = vmatprep.subr.mxu0 0.0
      %2870 = vmatpush1.msra.mxu0 %v1457
      %2871 = vmatprep.subr.mxu0 0.0
      %2872 = vmatpush1.msra.mxu0 %v1462
      %2873 = vmatprep.subr.mxu0 0.0
      %2874 = vmatpush1.msra.mxu0 0.0
      %2875 = vmatprep.subr.mxu0 0.0
      %2876 = vmatpush1.msra.mxu0 0.0
      %2877 = vmatprep.subr.mxu0 0.0
      %2878 = vmatpush1.msra.mxu0 0.0
      %2879 = vmatprep.subr.mxu0 0.0
      %2880 = vmatpush1.msra.mxu0 0.0
      %2881 = vmatprep.subr.mxu0 0.0
      %2882 = vmatpush1.msra.mxu0 0.0
      %2883 = vmatprep.subr.mxu0 0.0
      %2884 = vmatpush1.msra.mxu0 0.0
      %2885 = vmatprep.subr.mxu0 0.0
      %2886 = vmatpush1.msra.mxu0 0.0
      %2887 = vmatprep.subr.mxu0 0.0
      %2888 = vmatpush1.msra.mxu0 0.0
      %2889 = vmatprep.subr.mxu0 0.0
      %2890 = vmatpush1.msra.mxu0 0.0
      %2891 = vmatprep.subr.mxu0 0.0
      %2892 = vmatpush1.msra.mxu0 0.0
      %2893 = vmatprep.subr.mxu0 0.0
      %2894 = vmatpush1.msra.mxu0 0.0
      %2895 = vmatprep.subr.mxu0 0.0
      %2896 = vmatpush1.msra.mxu0 0.0
      %2897 = vmatprep.subr.mxu0 0.0
      %2898 = vmatpush1.msra.mxu0 0.0
      %2899 = vmatprep.subr.mxu0 0.0
      %2900 = vmatpush1.msra.mxu0 0.0
      %2901 = vmatprep.subr.mxu0 0.0
      %2902 = vmatpush1.msra.mxu0 0.0
      %2903 = vmatprep.subr.mxu0 0.0
      %2904 = vmatpush1.msra.mxu0 0.0
      %2905 = vmatprep.subr.mxu0 0.0
      %2906 = vmatpush1.msra.mxu0 0.0
      %2907 = vmatprep.subr.mxu0 0.0
      %2908 = vmatpush1.msra.mxu0 0.0
      %2909 = vmatprep.subr.mxu0 0.0
      %2910 = vmatpush1.msra.mxu0 0.0
      %2911 = vmatprep.subr.mxu0 0.0
      %2912 = vmatpush1.msra.mxu0 0.0
      %2913 = vmatprep.subr.mxu0 0.0
      %2914 = vmatpush1.msra.mxu0 0.0
      %2915 = vmatprep.subr.mxu0 0.0
      %2916 = vmatpush1.msra.mxu0 0.0
      %2917 = vmatprep.subr.mxu0 0.0
      %2918 = vmatpush1.msra.mxu0 0.0
      %2919 = vmatprep.subr.mxu0 0.0
      %2920 = vmatpush1.msra.mxu0 0.0
      %2921 = vmatprep.subr.mxu0 0.0
      %2922 = vmatpush1.msra.mxu0 0.0
      %2923 = vmatprep.subr.mxu0 0.0
      %2924 = vmatpush1.msra.mxu0 0.0
      %2925 = vmatprep.subr.mxu0 0.0
      %2926 = vmatpush1.msra.mxu0 0.0
      %2927 = vmatprep.subr.mxu0 0.0
      %2928 = vmatpush1.msra.mxu0 0.0
      %2929 = vmatprep.mubr.f32.mxu0 0.0
      %2930 = vmatmul.mubr.f32.gmra.mrb[0].mxu0 %v2842
      %v2931 = vpop.f32.mrb[0].mxu0
      %v2932 = vadd.f32 %v2804, %v2931
      %v2933 = vpop.f32.mrb[0].mxu0
      %2934 = vmatprep.mubr.f32.mxu0 0.0
      %2935 = vmatmul.mubr.f32.gmra.mrb[0].mxu0 %v2845
      %v2936 = vpop.f32.mrb[0].mxu0
      %v2937 = vadd.f32 %v2809, %v2936
      %v2938 = vpop.f32.mrb[0].mxu0
      %2939 = vmatprep.mubr.f32.mxu0 0.0
      %2940 = vmatmul.mubr.f32.gmra.mrb[0].mxu0 %v2848
      %v2941 = vpop.f32.mrb[0].mxu0
      %v2942 = vadd.f32 %v2814, %v2941
      %v2943 = vpop.f32.mrb[0].mxu0
      %2944 = vmatprep.mubr.f32.mxu0 0.0
      %2945 = vmatmul.mubr.f32.gmra.mrb[0].mxu0 %v2851
      %v2946 = vpop.f32.mrb[0].mxu0
      %v2947 = vadd.f32 %v2819, %v2946
      %v2948 = vpop.f32.mrb[0].mxu0
      %2949 = vmatprep.mubr.f32.mxu0 0.0
      %2950 = vmatmul.mubr.f32.gmra.mrb[0].mxu0 %v2854
      %v2951 = vpop.f32.mrb[0].mxu0
      %v2952 = vadd.f32 %v2824, %v2951
      %v2953 = vpop.f32.mrb[0].mxu0
      %2954 = vmatprep.mubr.f32.mxu0 0.0
      %2955 = vmatmul.mubr.f32.gmra.mrb[0].mxu0 %v2857
      %v2956 = vpop.f32.mrb[0].mxu0
      %v2957 = vadd.f32 %v2829, %v2956
      %v2958 = vpop.f32.mrb[0].mxu0
      %2959 = vmatprep.mubr.f32.mxu0 0.0
      %2960 = vmatmul.mubr.f32.gmra.mrb[0].mxu0 %v2860
      %v2961 = vpop.f32.mrb[0].mxu0
      %v2962 = vadd.f32 %v2834, %v2961
      %v2963 = vpop.f32.mrb[0].mxu0
      %2964 = vmatprep.mubr.f32.mxu0 0.0
      %2965 = vmatmul.mubr.f32.gmra.mrb[0].mxu0 %v2863
      %v2966 = vpop.f32.mrb[0].mxu0
      %v2967 = vadd.f32 %v2839, %v2966
      %v2968 = vpop.f32.mrb[0].mxu0
      %2969 = vdwg.mxu0
      %v2971 = vsel %vm1735, %v2780, 0
      %2973 = vmatprep.subr.mxu0 0.0
      %2974 = vmatpush1.msra.mxu0 %v2932
      %2975 = vmatprep.subr.mxu0 0.0
      %2976 = vmatpush1.msra.mxu0 0.0
      %2977 = vmatprep.subr.mxu0 0.0
      %2978 = vmatpush1.msra.mxu0 0.0
      %2979 = vmatprep.subr.mxu0 0.0
      %2980 = vmatpush1.msra.mxu0 0.0
      %2981 = vmatprep.subr.mxu0 0.0
      %2982 = vmatpush1.msra.mxu0 0.0
      %2983 = vmatprep.subr.mxu0 0.0
      %2984 = vmatpush1.msra.mxu0 0.0
      %2985 = vmatprep.subr.mxu0 0.0
      %2986 = vmatpush1.msra.mxu0 0.0
      %2987 = vmatprep.subr.mxu0 0.0
      %2988 = vmatpush1.msra.mxu0 0.0
      %2989 = vmatprep.subr.mxu0 0.0
      %2990 = vmatpush1.msra.mxu0 0.0
      %2991 = vmatprep.subr.mxu0 0.0
      %2992 = vmatpush1.msra.mxu0 0.0
      %2993 = vmatprep.subr.mxu0 0.0
      %2994 = vmatpush1.msra.mxu0 0.0
      %2995 = vmatprep.subr.mxu0 0.0
      %2996 = vmatpush1.msra.mxu0 0.0
      %2997 = vmatprep.subr.mxu0 0.0
      %2998 = vmatpush1.msra.mxu0 0.0
      %2999 = vmatprep.subr.mxu0 0.0
      %3000 = vmatpush1.msra.mxu0 0.0
      %3001 = vmatprep.subr.mxu0 0.0
      %3002 = vmatpush1.msra.mxu0 0.0
      %3003 = vmatprep.subr.mxu0 0.0
      %3004 = vmatpush1.msra.mxu0 0.0
      %3005 = vmatprep.subr.mxu0 0.0
      %3006 = vmatpush1.msra.mxu0 0.0
      %3007 = vmatprep.subr.mxu0 0.0
      %3008 = vmatpush1.msra.mxu0 0.0
      %3009 = vmatprep.subr.mxu0 0.0
      %3010 = vmatpush1.msra.mxu0 0.0
      %3011 = vmatprep.subr.mxu0 0.0
      %3012 = vmatpush1.msra.mxu0 0.0
      %3013 = vmatprep.subr.mxu0 0.0
      %3014 = vmatpush1.msra.mxu0 0.0
      %3015 = vmatprep.subr.mxu0 0.0
      %3016 = vmatpush1.msra.mxu0 0.0
      %3017 = vmatprep.subr.mxu0 0.0
      %3018 = vmatpush1.msra.mxu0 0.0
      %3019 = vmatprep.subr.mxu0 0.0
      %3020 = vmatpush1.msra.mxu0 0.0
      %3021 = vmatprep.subr.mxu0 0.0
      %3022 = vmatpush1.msra.mxu0 0.0
      %3023 = vmatprep.subr.mxu0 0.0
      %3024 = vmatpush1.msra.mxu0 0.0
      %3025 = vmatprep.subr.mxu0 0.0
      %3026 = vmatpush1.msra.mxu0 0.0
      %3027 = vmatprep.subr.mxu0 0.0
      %3028 = vmatpush1.msra.mxu0 0.0
      %3029 = vmatprep.subr.mxu0 0.0
      %3030 = vmatpush1.msra.mxu0 0.0
      %3031 = vmatprep.subr.mxu0 0.0
      %3032 = vmatpush1.msra.mxu0 0.0
      %3033 = vmatprep.subr.mxu0 0.0
      %3034 = vmatpush1.msra.mxu0 0.0
      %3035 = vmatprep.subr.mxu0 0.0
      %3036 = vmatpush1.msra.mxu0 0.0
      %3037 = vmatprep.mubr.f32.mxu0 0.0
      %3038 = vmatmul.mubr.f32.gmra.mrb[0].mxu0 %v2971
      %v3039 = vpop.f32.mrb[0].mxu0
      %v3040 = vadd.f32 0.0, %v3039
      %v3041 = vpop.f32.mrb[0].mxu0
      %3042 = vdwg.mxu0
      %v3043 = vmul.f32 %v3040, 0.35355338
      %v3044 = vsel %vm1810, %v3043, -inf
      %3045 = vmax.xlane.f32.xlu0 %v3044
      %v3046 = vpop.xlane.xlu0 %3045
      %v3047 = vsub.f32 %v3043, %v3046
      %v3048 = vmul.f32 %v3047, 1.442695
      %v3049 = vpow.pop %v3048
      %v3050 = vsel %vm1810, %v3049, 0.0
      %3051 = vadd.xlane.f32.xlu0 %v3050
      %v3052 = vpop.xlane.xlu0 %3051
      %v3053 = vrcp.pop %v3052
      %v3054 = vmul.f32 %v3049, %v3053
      %v3056 = vsel %vm1810, %v3054, 0
      %v3059 = vsel %vm1810, %v2952, 0
      %3061 = vmatprep.subr.mxu0 0.0
      %3062 = vmatpush1.xpose.msra.mxu0 %v3059
      %3063 = vmatprep.subr.mxu0 0.0
      %3064 = vmatpush1.xpose.msra.mxu0 0.0
      %3065 = vmatprep.subr.mxu0 0.0
      %3066 = vmatpush1.xpose.msra.mxu0 0.0
      %3067 = vmatprep.subr.mxu0 0.0
      %3068 = vmatpush1.xpose.msra.mxu0 0.0
      %3069 = vmatprep.subr.mxu0 0.0
      %3070 = vmatpush1.xpose.msra.mxu0 0.0
      %3071 = vmatprep.subr.mxu0 0.0
      %3072 = vmatpush1.xpose.msra.mxu0 0.0
      %3073 = vmatprep.subr.mxu0 0.0
      %3074 = vmatpush1.xpose.msra.mxu0 0.0
      %3075 = vmatprep.subr.mxu0 0.0
      %3076 = vmatpush1.xpose.msra.mxu0 0.0
      %3077 = vmatprep.subr.mxu0 0.0
      %3078 = vmatpush1.xpose.msra.mxu0 0.0
      %3079 = vmatprep.subr.mxu0 0.0
      %3080 = vmatpush1.xpose.msra.mxu0 0.0
      %3081 = vmatprep.subr.mxu0 0.0
      %3082 = vmatpush1.xpose.msra.mxu0 0.0
      %3083 = vmatprep.subr.mxu0 0.0
      %3084 = vmatpush1.xpose.msra.mxu0 0.0
      %3085 = vmatprep.subr.mxu0 0.0
      %3086 = vmatpush1.xpose.msra.mxu0 0.0
      %3087 = vmatprep.subr.mxu0 0.0
      %3088 = vmatpush1.xpose.msra.mxu0 0.0
      %3089 = vmatprep.subr.mxu0 0.0
      %3090 = vmatpush1.xpose.msra.mxu0 0.0
      %3091 = vmatprep.subr.mxu0 0.0
      %3092 = vmatpush1.xpose.msra.mxu0 0.0
      %3093 = vmatprep.subr.mxu0 0.0
      %3094 = vmatpush1.xpose.msra.mxu0 0.0
      %3095 = vmatprep.subr.mxu0 0.0
      %3096 = vmatpush1.xpose.msra.mxu0 0.0
      %3097 = vmatprep.subr.mxu0 0.0
      %3098 = vmatpush1.xpose.msra.mxu0 0.0
      %3099 = vmatprep.subr.mxu0 0.0
      %3100 = vmatpush1.xpose.msra.mxu0 0.0
      %3101 = vmatprep.subr.mxu0 0.0
      %3102 = vmatpush1.xpose.msra.mxu0 0.0
      %3103 = vmatprep.subr.mxu0 0.0
      %3104 = vmatpush1.xpose.msra.mxu0 0.0
      %3105 = vmatprep.subr.mxu0 0.0
      %3106 = vmatpush1.xpose.msra.mxu0 0.0
      %3107 = vmatprep.subr.mxu0 0.0
      %3108 = vmatpush1.xpose.msra.mxu0 0.0
      %3109 = vmatprep.subr.mxu0 0.0
      %3110 = vmatpush1.xpose.msra.mxu0 0.0
      %3111 = vmatprep.subr.mxu0 0.0
      %3112 = vmatpush1.xpose.msra.mxu0 0.0
      %3113 = vmatprep.subr.mxu0 0.0
      %3114 = vmatpush1.xpose.msra.mxu0 0.0
      %3115 = vmatprep.subr.mxu0 0.0
      %3116 = vmatpush1.xpose.msra.mxu0 0.0
      %3117 = vmatprep.subr.mxu0 0.0
      %3118 = vmatpush1.xpose.msra.mxu0 0.0
      %3119 = vmatprep.subr.mxu0 0.0
      %3120 = vmatpush1.xpose.msra.mxu0 0.0
      %3121 = vmatprep.subr.mxu0 0.0
      %3122 = vmatpush1.xpose.msra.mxu0 0.0
      %3123 = vmatprep.subr.mxu0 0.0
      %3124 = vmatpush1.xpose.msra.mxu0 0.0
      %3125 = vmatprep.mubr.f32.mxu0 0.0
      %3126 = vmatmul.mubr.f32.gmra.mrb[0].mxu0 %v3056
      %v3127 = vpop.f32.mrb[0].mxu0
      %v3128 = vadd.f32 0.0, %v3127
      %v3129 = vpop.f32.mrb[0].mxu0
      %3130 = vdwg.mxu0
      %3131 = vrot.lane.b32.xlu0 %v2780, 120
      %v3132 = vpop.permute.xlu0 %3131
      %v3133 = vsel %vm1735, %v3132, 0
      %3135 = vmatprep.subr.mxu0 0.0
      %3136 = vmatpush1.msra.mxu0 %v2937
      %3137 = vmatprep.subr.mxu0 0.0
      %3138 = vmatpush1.msra.mxu0 0.0
      %3139 = vmatprep.subr.mxu0 0.0
      %3140 = vmatpush1.msra.mxu0 0.0
      %3141 = vmatprep.subr.mxu0 0.0
      %3142 = vmatpush1.msra.mxu0 0.0
      %3143 = vmatprep.subr.mxu0 0.0
      %3144 = vmatpush1.msra.mxu0 0.0
      %3145 = vmatprep.subr.mxu0 0.0
      %3146 = vmatpush1.msra.mxu0 0.0
      %3147 = vmatprep.subr.mxu0 0.0
      %3148 = vmatpush1.msra.mxu0 0.0
      %3149 = vmatprep.subr.mxu0 0.0
      %3150 = vmatpush1.msra.mxu0 0.0
      %3151 = vmatprep.subr.mxu0 0.0
      %3152 = vmatpush1.msra.mxu0 0.0
      %3153 = vmatprep.subr.mxu0 0.0
      %3154 = vmatpush1.msra.mxu0 0.0
      %3155 = vmatprep.subr.mxu0 0.0
      %3156 = vmatpush1.msra.mxu0 0.0
      %3157 = vmatprep.subr.mxu0 0.0
      %3158 = vmatpush1.msra.mxu0 0.0
      %3159 = vmatprep.subr.mxu0 0.0
      %3160 = vmatpush1.msra.mxu0 0.0
      %3161 = vmatprep.subr.mxu0 0.0
      %3162 = vmatpush1.msra.mxu0 0.0
      %3163 = vmatprep.subr.mxu0 0.0
      %3164 = vmatpush1.msra.mxu0 0.0
      %3165 = vmatprep.subr.mxu0 0.0
      %3166 = vmatpush1.msra.mxu0 0.0
      %3167 = vmatprep.subr.mxu0 0.0
      %3168 = vmatpush1.msra.mxu0 0.0
      %3169 = vmatprep.subr.mxu0 0.0
      %3170 = vmatpush1.msra.mxu0 0.0
      %3171 = vmatprep.subr.mxu0 0.0
      %3172 = vmatpush1.msra.mxu0 0.0
      %3173 = vmatprep.subr.mxu0 0.0
      %3174 = vmatpush1.msra.mxu0 0.0
      %3175 = vmatprep.subr.mxu0 0.0
      %3176 = vmatpush1.msra.mxu0 0.0
      %3177 = vmatprep.subr.mxu0 0.0
      %3178 = vmatpush1.msra.mxu0 0.0
      %3179 = vmatprep.subr.mxu0 0.0
      %3180 = vmatpush1.msra.mxu0 0.0
      %3181 = vmatprep.subr.mxu0 0.0
      %3182 = vmatpush1.msra.mxu0 0.0
      %3183 = vmatprep.subr.mxu0 0.0
      %3184 = vmatpush1.msra.mxu0 0.0
      %3185 = vmatprep.subr.mxu0 0.0
      %3186 = vmatpush1.msra.mxu0 0.0
      %3187 = vmatprep.subr.mxu0 0.0
      %3188 = vmatpush1.msra.mxu0 0.0
      %3189 = vmatprep.subr.mxu0 0.0
      %3190 = vmatpush1.msra.mxu0 0.0
      %3191 = vmatprep.subr.mxu0 0.0
      %3192 = vmatpush1.msra.mxu0 0.0
      %3193 = vmatprep.subr.mxu0 0.0
      %3194 = vmatpush1.msra.mxu0 0.0
      %3195 = vmatprep.subr.mxu0 0.0
      %3196 = vmatpush1.msra.mxu0 0.0
      %3197 = vmatprep.subr.mxu0 0.0
      %3198 = vmatpush1.msra.mxu0 0.0
      %3199 = vmatprep.mubr.f32.mxu0 0.0
      %3200 = vmatmul.mubr.f32.gmra.mrb[0].mxu0 %v3133
      %v3201 = vpop.f32.mrb[0].mxu0
      %v3202 = vadd.f32 0.0, %v3201
      %v3203 = vpop.f32.mrb[0].mxu0
      %3204 = vdwg.mxu0
      %v3205 = vmul.f32 %v3202, 0.35355338
      %v3206 = vsel %vm1810, %v3205, -inf
      %3207 = vmax.xlane.f32.xlu0 %v3206
      %v3208 = vpop.xlane.xlu0 %3207
      %v3209 = vsub.f32 %v3205, %v3208
      %v3210 = vmul.f32 %v3209, 1.442695
      %v3211 = vpow.pop %v3210
      %v3212 = vsel %vm1810, %v3211, 0.0
      %3213 = vadd.xlane.f32.xlu0 %v3212
      %v3214 = vpop.xlane.xlu0 %3213
      %v3215 = vrcp.pop %v3214
      %v3216 = vmul.f32 %v3211, %v3215
      %v3218 = vsel %vm1810, %v3216, 0
      %v3221 = vsel %vm1810, %v2957, 0
      %3223 = vmatprep.subr.mxu0 0.0
      %3224 = vmatpush1.xpose.msra.mxu0 %v3221
      %3225 = vmatprep.subr.mxu0 0.0
      %3226 = vmatpush1.xpose.msra.mxu0 0.0
      %3227 = vmatprep.subr.mxu0 0.0
      %3228 = vmatpush1.xpose.msra.mxu0 0.0
      %3229 = vmatprep.subr.mxu0 0.0
      %3230 = vmatpush1.xpose.msra.mxu0 0.0
      %3231 = vmatprep.subr.mxu0 0.0
      %3232 = vmatpush1.xpose.msra.mxu0 0.0
      %3233 = vmatprep.subr.mxu0 0.0
      %3234 = vmatpush1.xpose.msra.mxu0 0.0
      %3235 = vmatprep.subr.mxu0 0.0
      %3236 = vmatpush1.xpose.msra.mxu0 0.0
      %3237 = vmatprep.subr.mxu0 0.0
      %3238 = vmatpush1.xpose.msra.mxu0 0.0
      %3239 = vmatprep.subr.mxu0 0.0
      %3240 = vmatpush1.xpose.msra.mxu0 0.0
      %3241 = vmatprep.subr.mxu0 0.0
      %3242 = vmatpush1.xpose.msra.mxu0 0.0
      %3243 = vmatprep.subr.mxu0 0.0
      %3244 = vmatpush1.xpose.msra.mxu0 0.0
      %3245 = vmatprep.subr.mxu0 0.0
      %3246 = vmatpush1.xpose.msra.mxu0 0.0
      %3247 = vmatprep.subr.mxu0 0.0
      %3248 = vmatpush1.xpose.msra.mxu0 0.0
      %3249 = vmatprep.subr.mxu0 0.0
      %3250 = vmatpush1.xpose.msra.mxu0 0.0
      %3251 = vmatprep.subr.mxu0 0.0
      %3252 = vmatpush1.xpose.msra.mxu0 0.0
      %3253 = vmatprep.subr.mxu0 0.0
      %3254 = vmatpush1.xpose.msra.mxu0 0.0
      %3255 = vmatprep.subr.mxu0 0.0
      %3256 = vmatpush1.xpose.msra.mxu0 0.0
      %3257 = vmatprep.subr.mxu0 0.0
      %3258 = vmatpush1.xpose.msra.mxu0 0.0
      %3259 = vmatprep.subr.mxu0 0.0
      %3260 = vmatpush1.xpose.msra.mxu0 0.0
      %3261 = vmatprep.subr.mxu0 0.0
      %3262 = vmatpush1.xpose.msra.mxu0 0.0
      %3263 = vmatprep.subr.mxu0 0.0
      %3264 = vmatpush1.xpose.msra.mxu0 0.0
      %3265 = vmatprep.subr.mxu0 0.0
      %3266 = vmatpush1.xpose.msra.mxu0 0.0
      %3267 = vmatprep.subr.mxu0 0.0
      %3268 = vmatpush1.xpose.msra.mxu0 0.0
      %3269 = vmatprep.subr.mxu0 0.0
      %3270 = vmatpush1.xpose.msra.mxu0 0.0
      %3271 = vmatprep.subr.mxu0 0.0
      %3272 = vmatpush1.xpose.msra.mxu0 0.0
      %3273 = vmatprep.subr.mxu0 0.0
      %3274 = vmatpush1.xpose.msra.mxu0 0.0
      %3275 = vmatprep.subr.mxu0 0.0
      %3276 = vmatpush1.xpose.msra.mxu0 0.0
      %3277 = vmatprep.subr.mxu0 0.0
      %3278 = vmatpush1.xpose.msra.mxu0 0.0
      %3279 = vmatprep.subr.mxu0 0.0
      %3280 = vmatpush1.xpose.msra.mxu0 0.0
      %3281 = vmatprep.subr.mxu0 0.0
      %3282 = vmatpush1.xpose.msra.mxu0 0.0
      %3283 = vmatprep.subr.mxu0 0.0
      %3284 = vmatpush1.xpose.msra.mxu0 0.0
      %3285 = vmatprep.subr.mxu0 0.0
      %3286 = vmatpush1.xpose.msra.mxu0 0.0
      %3287 = vmatprep.mubr.f32.mxu0 0.0
      %3288 = vmatmul.mubr.f32.gmra.mrb[0].mxu0 %v3218
      %v3289 = vpop.f32.mrb[0].mxu0
      %v3290 = vadd.f32 0.0, %v3289
      %v3291 = vpop.f32.mrb[0].mxu0
      %3292 = vdwg.mxu0
      %3293 = vrot.lane.b32.xlu0 %v2780, 112
      %v3294 = vpop.permute.xlu0 %3293
      %v3295 = vsel %vm1735, %v3294, 0
      %3297 = vmatprep.subr.mxu0 0.0
      %3298 = vmatpush1.msra.mxu0 %v2942
      %3299 = vmatprep.subr.mxu0 0.0
      %3300 = vmatpush1.msra.mxu0 0.0
      %3301 = vmatprep.subr.mxu0 0.0
      %3302 = vmatpush1.msra.mxu0 0.0
      %3303 = vmatprep.subr.mxu0 0.0
      %3304 = vmatpush1.msra.mxu0 0.0
      %3305 = vmatprep.subr.mxu0 0.0
      %3306 = vmatpush1.msra.mxu0 0.0
      %3307 = vmatprep.subr.mxu0 0.0
      %3308 = vmatpush1.msra.mxu0 0.0
      %3309 = vmatprep.subr.mxu0 0.0
      %3310 = vmatpush1.msra.mxu0 0.0
      %3311 = vmatprep.subr.mxu0 0.0
      %3312 = vmatpush1.msra.mxu0 0.0
      %3313 = vmatprep.subr.mxu0 0.0
      %3314 = vmatpush1.msra.mxu0 0.0
      %3315 = vmatprep.subr.mxu0 0.0
      %3316 = vmatpush1.msra.mxu0 0.0
      %3317 = vmatprep.subr.mxu0 0.0
      %3318 = vmatpush1.msra.mxu0 0.0
      %3319 = vmatprep.subr.mxu0 0.0
      %3320 = vmatpush1.msra.mxu0 0.0
      %3321 = vmatprep.subr.mxu0 0.0
      %3322 = vmatpush1.msra.mxu0 0.0
      %3323 = vmatprep.subr.mxu0 0.0
      %3324 = vmatpush1.msra.mxu0 0.0
      %3325 = vmatprep.subr.mxu0 0.0
      %3326 = vmatpush1.msra.mxu0 0.0
      %3327 = vmatprep.subr.mxu0 0.0
      %3328 = vmatpush1.msra.mxu0 0.0
      %3329 = vmatprep.subr.mxu0 0.0
      %3330 = vmatpush1.msra.mxu0 0.0
      %3331 = vmatprep.subr.mxu0 0.0
      %3332 = vmatpush1.msra.mxu0 0.0
      %3333 = vmatprep.subr.mxu0 0.0
      %3334 = vmatpush1.msra.mxu0 0.0
      %3335 = vmatprep.subr.mxu0 0.0
      %3336 = vmatpush1.msra.mxu0 0.0
      %3337 = vmatprep.subr.mxu0 0.0
      %3338 = vmatpush1.msra.mxu0 0.0
      %3339 = vmatprep.subr.mxu0 0.0
      %3340 = vmatpush1.msra.mxu0 0.0
      %3341 = vmatprep.subr.mxu0 0.0
      %3342 = vmatpush1.msra.mxu0 0.0
      %3343 = vmatprep.subr.mxu0 0.0
      %3344 = vmatpush1.msra.mxu0 0.0
      %3345 = vmatprep.subr.mxu0 0.0
      %3346 = vmatpush1.msra.mxu0 0.0
      %3347 = vmatprep.subr.mxu0 0.0
      %3348 = vmatpush1.msra.mxu0 0.0
      %3349 = vmatprep.subr.mxu0 0.0
      %3350 = vmatpush1.msra.mxu0 0.0
      %3351 = vmatprep.subr.mxu0 0.0
      %3352 = vmatpush1.msra.mxu0 0.0
      %3353 = vmatprep.subr.mxu0 0.0
      %3354 = vmatpush1.msra.mxu0 0.0
      %3355 = vmatprep.subr.mxu0 0.0
      %3356 = vmatpush1.msra.mxu0 0.0
      %3357 = vmatprep.subr.mxu0 0.0
      %3358 = vmatpush1.msra.mxu0 0.0
      %3359 = vmatprep.subr.mxu0 0.0
      %3360 = vmatpush1.msra.mxu0 0.0
      %3361 = vmatprep.mubr.f32.mxu0 0.0
      %3362 = vmatmul.mubr.f32.gmra.mrb[0].mxu0 %v3295
      %v3363 = vpop.f32.mrb[0].mxu0
      %v3364 = vadd.f32 0.0, %v3363
      %v3365 = vpop.f32.mrb[0].mxu0
      %3366 = vdwg.mxu0
      %v3367 = vmul.f32 %v3364, 0.35355338
      %v3368 = vsel %vm1810, %v3367, -inf
      %3369 = vmax.xlane.f32.xlu0 %v3368
      %v3370 = vpop.xlane.xlu0 %3369
      %v3371 = vsub.f32 %v3367, %v3370
      %v3372 = vmul.f32 %v3371, 1.442695
      %v3373 = vpow.pop %v3372
      %v3374 = vsel %vm1810, %v3373, 0.0
      %3375 = vadd.xlane.f32.xlu0 %v3374
      %v3376 = vpop.xlane.xlu0 %3375
      %v3377 = vrcp.pop %v3376
      %v3378 = vmul.f32 %v3373, %v3377
      %v3380 = vsel %vm1810, %v3378, 0
      %v3383 = vsel %vm1810, %v2962, 0
      %3385 = vmatprep.subr.mxu0 0.0
      %3386 = vmatpush1.xpose.msra.mxu0 %v3383
      %3387 = vmatprep.subr.mxu0 0.0
      %3388 = vmatpush1.xpose.msra.mxu0 0.0
      %3389 = vmatprep.subr.mxu0 0.0
      %3390 = vmatpush1.xpose.msra.mxu0 0.0
      %3391 = vmatprep.subr.mxu0 0.0
      %3392 = vmatpush1.xpose.msra.mxu0 0.0
      %3393 = vmatprep.subr.mxu0 0.0
      %3394 = vmatpush1.xpose.msra.mxu0 0.0
      %3395 = vmatprep.subr.mxu0 0.0
      %3396 = vmatpush1.xpose.msra.mxu0 0.0
      %3397 = vmatprep.subr.mxu0 0.0
      %3398 = vmatpush1.xpose.msra.mxu0 0.0
      %3399 = vmatprep.subr.mxu0 0.0
      %3400 = vmatpush1.xpose.msra.mxu0 0.0
      %3401 = vmatprep.subr.mxu0 0.0
      %3402 = vmatpush1.xpose.msra.mxu0 0.0
      %3403 = vmatprep.subr.mxu0 0.0
      %3404 = vmatpush1.xpose.msra.mxu0 0.0
      %3405 = vmatprep.subr.mxu0 0.0
      %3406 = vmatpush1.xpose.msra.mxu0 0.0
      %3407 = vmatprep.subr.mxu0 0.0
      %3408 = vmatpush1.xpose.msra.mxu0 0.0
      %3409 = vmatprep.subr.mxu0 0.0
      %3410 = vmatpush1.xpose.msra.mxu0 0.0
      %3411 = vmatprep.subr.mxu0 0.0
      %3412 = vmatpush1.xpose.msra.mxu0 0.0
      %3413 = vmatprep.subr.mxu0 0.0
      %3414 = vmatpush1.xpose.msra.mxu0 0.0
      %3415 = vmatprep.subr.mxu0 0.0
      %3416 = vmatpush1.xpose.msra.mxu0 0.0
      %3417 = vmatprep.subr.mxu0 0.0
      %3418 = vmatpush1.xpose.msra.mxu0 0.0
      %3419 = vmatprep.subr.mxu0 0.0
      %3420 = vmatpush1.xpose.msra.mxu0 0.0
      %3421 = vmatprep.subr.mxu0 0.0
      %3422 = vmatpush1.xpose.msra.mxu0 0.0
      %3423 = vmatprep.subr.mxu0 0.0
      %3424 = vmatpush1.xpose.msra.mxu0 0.0
      %3425 = vmatprep.subr.mxu0 0.0
      %3426 = vmatpush1.xpose.msra.mxu0 0.0
      %3427 = vmatprep.subr.mxu0 0.0
      %3428 = vmatpush1.xpose.msra.mxu0 0.0
      %3429 = vmatprep.subr.mxu0 0.0
      %3430 = vmatpush1.xpose.msra.mxu0 0.0
      %3431 = vmatprep.subr.mxu0 0.0
      %3432 = vmatpush1.xpose.msra.mxu0 0.0
      %3433 = vmatprep.subr.mxu0 0.0
      %3434 = vmatpush1.xpose.msra.mxu0 0.0
      %3435 = vmatprep.subr.mxu0 0.0
      %3436 = vmatpush1.xpose.msra.mxu0 0.0
      %3437 = vmatprep.subr.mxu0 0.0
      %3438 = vmatpush1.xpose.msra.mxu0 0.0
      %3439 = vmatprep.subr.mxu0 0.0
      %3440 = vmatpush1.xpose.msra.mxu0 0.0
      %3441 = vmatprep.subr.mxu0 0.0
      %3442 = vmatpush1.xpose.msra.mxu0 0.0
      %3443 = vmatprep.subr.mxu0 0.0
      %3444 = vmatpush1.xpose.msra.mxu0 0.0
      %3445 = vmatprep.subr.mxu0 0.0
      %3446 = vmatpush1.xpose.msra.mxu0 0.0
      %3447 = vmatprep.subr.mxu0 0.0
      %3448 = vmatpush1.xpose.msra.mxu0 0.0
      %3449 = vmatprep.mubr.f32.mxu0 0.0
      %3450 = vmatmul.mubr.f32.gmra.mrb[0].mxu0 %v3380
      %v3451 = vpop.f32.mrb[0].mxu0
      %v3452 = vadd.f32 0.0, %v3451
      %v3453 = vpop.f32.mrb[0].mxu0
      %3454 = vdwg.mxu0
      %3455 = vrot.lane.b32.xlu0 %v2780, 104
      %v3456 = vpop.permute.xlu0 %3455
      %v3457 = vsel %vm1735, %v3456, 0
      %3459 = vmatprep.subr.mxu0 0.0
      %3460 = vmatpush1.msra.mxu0 %v2947
      %3461 = vmatprep.subr.mxu0 0.0
      %3462 = vmatpush1.msra.mxu0 0.0
      %3463 = vmatprep.subr.mxu0 0.0
      %3464 = vmatpush1.msra.mxu0 0.0
      %3465 = vmatprep.subr.mxu0 0.0
      %3466 = vmatpush1.msra.mxu0 0.0
      %3467 = vmatprep.subr.mxu0 0.0
      %3468 = vmatpush1.msra.mxu0 0.0
      %3469 = vmatprep.subr.mxu0 0.0
      %3470 = vmatpush1.msra.mxu0 0.0
      %3471 = vmatprep.subr.mxu0 0.0
      %3472 = vmatpush1.msra.mxu0 0.0
      %3473 = vmatprep.subr.mxu0 0.0
      %3474 = vmatpush1.msra.mxu0 0.0
      %3475 = vmatprep.subr.mxu0 0.0
      %3476 = vmatpush1.msra.mxu0 0.0
      %3477 = vmatprep.subr.mxu0 0.0
      %3478 = vmatpush1.msra.mxu0 0.0
      %3479 = vmatprep.subr.mxu0 0.0
      %3480 = vmatpush1.msra.mxu0 0.0
      %3481 = vmatprep.subr.mxu0 0.0
      %3482 = vmatpush1.msra.mxu0 0.0
      %3483 = vmatprep.subr.mxu0 0.0
      %3484 = vmatpush1.msra.mxu0 0.0
      %3485 = vmatprep.subr.mxu0 0.0
      %3486 = vmatpush1.msra.mxu0 0.0
      %3487 = vmatprep.subr.mxu0 0.0
      %3488 = vmatpush1.msra.mxu0 0.0
      %3489 = vmatprep.subr.mxu0 0.0
      %3490 = vmatpush1.msra.mxu0 0.0
      %3491 = vmatprep.subr.mxu0 0.0
      %3492 = vmatpush1.msra.mxu0 0.0
      %3493 = vmatprep.subr.mxu0 0.0
      %3494 = vmatpush1.msra.mxu0 0.0
      %3495 = vmatprep.subr.mxu0 0.0
      %3496 = vmatpush1.msra.mxu0 0.0
      %3497 = vmatprep.subr.mxu0 0.0
      %3498 = vmatpush1.msra.mxu0 0.0
      %3499 = vmatprep.subr.mxu0 0.0
      %3500 = vmatpush1.msra.mxu0 0.0
      %3501 = vmatprep.subr.mxu0 0.0
      %3502 = vmatpush1.msra.mxu0 0.0
      %3503 = vmatprep.subr.mxu0 0.0
      %3504 = vmatpush1.msra.mxu0 0.0
      %3505 = vmatprep.subr.mxu0 0.0
      %3506 = vmatpush1.msra.mxu0 0.0
      %3507 = vmatprep.subr.mxu0 0.0
      %3508 = vmatpush1.msra.mxu0 0.0
      %3509 = vmatprep.subr.mxu0 0.0
      %3510 = vmatpush1.msra.mxu0 0.0
      %3511 = vmatprep.subr.mxu0 0.0
      %3512 = vmatpush1.msra.mxu0 0.0
      %3513 = vmatprep.subr.mxu0 0.0
      %3514 = vmatpush1.msra.mxu0 0.0
      %3515 = vmatprep.subr.mxu0 0.0
      %3516 = vmatpush1.msra.mxu0 0.0
      %3517 = vmatprep.subr.mxu0 0.0
      %3518 = vmatpush1.msra.mxu0 0.0
      %3519 = vmatprep.subr.mxu0 0.0
      %3520 = vmatpush1.msra.mxu0 0.0
      %3521 = vmatprep.subr.mxu0 0.0
      %3522 = vmatpush1.msra.mxu0 0.0
      %3523 = vmatprep.mubr.f32.mxu0 0.0
      %3524 = vmatmul.mubr.f32.gmra.mrb[0].mxu0 %v3457
      %v3525 = vpop.f32.mrb[0].mxu0
      %v3526 = vadd.f32 0.0, %v3525
      %v3527 = vpop.f32.mrb[0].mxu0
      %3528 = vdwg.mxu0
      %v3529 = vmul.f32 %v3526, 0.35355338
      %v3530 = vsel %vm1810, %v3529, -inf
      %3531 = vmax.xlane.f32.xlu0 %v3530
      %v3532 = vpop.xlane.xlu0 %3531
      %v3533 = vsub.f32 %v3529, %v3532
      %v3534 = vmul.f32 %v3533, 1.442695
      %v3535 = vpow.pop %v3534
      %v3536 = vsel %vm1810, %v3535, 0.0
      %3537 = vadd.xlane.f32.xlu0 %v3536
      %v3538 = vpop.xlane.xlu0 %3537
      %v3539 = vrcp.pop %v3538
      %v3540 = vmul.f32 %v3535, %v3539
      %v3542 = vsel %vm1810, %v3540, 0
      %v3545 = vsel %vm1810, %v2967, 0
      %3547 = vmatprep.subr.mxu0 0.0
      %3548 = vmatpush1.xpose.msra.mxu0 %v3545
      %3549 = vmatprep.subr.mxu0 0.0
      %3550 = vmatpush1.xpose.msra.mxu0 0.0
      %3551 = vmatprep.subr.mxu0 0.0
      %3552 = vmatpush1.xpose.msra.mxu0 0.0
      %3553 = vmatprep.subr.mxu0 0.0
      %3554 = vmatpush1.xpose.msra.mxu0 0.0
      %3555 = vmatprep.subr.mxu0 0.0
      %3556 = vmatpush1.xpose.msra.mxu0 0.0
      %3557 = vmatprep.subr.mxu0 0.0
      %3558 = vmatpush1.xpose.msra.mxu0 0.0
      %3559 = vmatprep.subr.mxu0 0.0
      %3560 = vmatpush1.xpose.msra.mxu0 0.0
      %3561 = vmatprep.subr.mxu0 0.0
      %3562 = vmatpush1.xpose.msra.mxu0 0.0
      %3563 = vmatprep.subr.mxu0 0.0
      %3564 = vmatpush1.xpose.msra.mxu0 0.0
      %3565 = vmatprep.subr.mxu0 0.0
      %3566 = vmatpush1.xpose.msra.mxu0 0.0
      %3567 = vmatprep.subr.mxu0 0.0
      %3568 = vmatpush1.xpose.msra.mxu0 0.0
      %3569 = vmatprep.subr.mxu0 0.0
      %3570 = vmatpush1.xpose.msra.mxu0 0.0
      %3571 = vmatprep.subr.mxu0 0.0
      %3572 = vmatpush1.xpose.msra.mxu0 0.0
      %3573 = vmatprep.subr.mxu0 0.0
      %3574 = vmatpush1.xpose.msra.mxu0 0.0
      %3575 = vmatprep.subr.mxu0 0.0
      %3576 = vmatpush1.xpose.msra.mxu0 0.0
      %3577 = vmatprep.subr.mxu0 0.0
      %3578 = vmatpush1.xpose.msra.mxu0 0.0
      %3579 = vmatprep.subr.mxu0 0.0
      %3580 = vmatpush1.xpose.msra.mxu0 0.0
      %3581 = vmatprep.subr.mxu0 0.0
      %3582 = vmatpush1.xpose.msra.mxu0 0.0
      %3583 = vmatprep.subr.mxu0 0.0
      %3584 = vmatpush1.xpose.msra.mxu0 0.0
      %3585 = vmatprep.subr.mxu0 0.0
      %3586 = vmatpush1.xpose.msra.mxu0 0.0
      %3587 = vmatprep.subr.mxu0 0.0
      %3588 = vmatpush1.xpose.msra.mxu0 0.0
      %3589 = vmatprep.subr.mxu0 0.0
      %3590 = vmatpush1.xpose.msra.mxu0 0.0
      %3591 = vmatprep.subr.mxu0 0.0
      %3592 = vmatpush1.xpose.msra.mxu0 0.0
      %3593 = vmatprep.subr.mxu0 0.0
      %3594 = vmatpush1.xpose.msra.mxu0 0.0
      %3595 = vmatprep.subr.mxu0 0.0
      %3596 = vmatpush1.xpose.msra.mxu0 0.0
      %3597 = vmatprep.subr.mxu0 0.0
      %3598 = vmatpush1.xpose.msra.mxu0 0.0
      %3599 = vmatprep.subr.mxu0 0.0
      %3600 = vmatpush1.xpose.msra.mxu0 0.0
      %3601 = vmatprep.subr.mxu0 0.0
      %3602 = vmatpush1.xpose.msra.mxu0 0.0
      %3603 = vmatprep.subr.mxu0 0.0
      %3604 = vmatpush1.xpose.msra.mxu0 0.0
      %3605 = vmatprep.subr.mxu0 0.0
      %3606 = vmatpush1.xpose.msra.mxu0 0.0
      %3607 = vmatprep.subr.mxu0 0.0
      %3608 = vmatpush1.xpose.msra.mxu0 0.0
      %3609 = vmatprep.subr.mxu0 0.0
      %3610 = vmatpush1.xpose.msra.mxu0 0.0
      %3611 = vmatprep.mubr.f32.mxu0 0.0
      %3612 = vmatmul.mubr.f32.gmra.mrb[0].mxu0 %v3542
      %v3613 = vpop.f32.mrb[0].mxu0
      %v3614 = vadd.f32 0.0, %v3613
      %v3615 = vpop.f32.mrb[0].mxu0
      %3616 = vdwg.mxu0
      %3618 = vrot.lane.b32.xlu0 %v3290, 8
      %v3619 = vpop.permute.xlu0 %3618
      %3622 = vrot.lane.b32.xlu0 %v3452, 16
      %v3623 = vpop.permute.xlu0 %3622
      %3626 = vrot.lane.b32.xlu0 %v3614, 24
      %v3627 = vpop.permute.xlu0 %3626
      %v3629 = vsel %vm1735, %v3128, %v3619
      %v3630 = vsel %vm1810, %v3629, %v3623
      %v3631 = vsel %vm2398, %v3630, %v3627
      %s3632 = scalar_lea.vmem %s7, 32
      %v3633 = vld [vmem:[%s3632] sm:$0xff]
      %v3634 = vld [vmem:[%s3632 + $0x8] sm:$0xff]
      %v3635 = vld [vmem:[%s3632 + $0x10] sm:$0xff]
      %v3636 = vld [vmem:[%s3632 + $0x18] sm:$0xff]
      %v3637 = vlaneseq
      %v3638 = vshrl.u32 %v3637, 7
      %v3639 = vsub.s32 1, %v3638
      %v3640 = vrot.slane %v2699, %v3639
      %v3642 = vsel %vm1476, %v3631, 0
      %3644 = vmatprep.subr.mxu0 0.0
      %3645 = vmatpush1.msra.mxu0 %v3633
      %3646 = vmatprep.subr.mxu0 0.0
      %3647 = vmatpush1.msra.mxu0 %v3634
      %3648 = vmatprep.subr.mxu0 0.0
      %3649 = vmatpush1.msra.mxu0 %v3635
      %3650 = vmatprep.subr.mxu0 0.0
      %3651 = vmatpush1.msra.mxu0 %v3636
      %3652 = vmatprep.subr.mxu0 0.0
      %3653 = vmatpush1.msra.mxu0 0.0
      %3654 = vmatprep.subr.mxu0 0.0
      %3655 = vmatpush1.msra.mxu0 0.0
      %3656 = vmatprep.subr.mxu0 0.0
      %3657 = vmatpush1.msra.mxu0 0.0
      %3658 = vmatprep.subr.mxu0 0.0
      %3659 = vmatpush1.msra.mxu0 0.0
      %3660 = vmatprep.subr.mxu0 0.0
      %3661 = vmatpush1.msra.mxu0 0.0
      %3662 = vmatprep.subr.mxu0 0.0
      %3663 = vmatpush1.msra.mxu0 0.0
      %3664 = vmatprep.subr.mxu0 0.0
      %3665 = vmatpush1.msra.mxu0 0.0
      %3666 = vmatprep.subr.mxu0 0.0
      %3667 = vmatpush1.msra.mxu0 0.0
      %3668 = vmatprep.subr.mxu0 0.0
      %3669 = vmatpush1.msra.mxu0 0.0
      %3670 = vmatprep.subr.mxu0 0.0
      %3671 = vmatpush1.msra.mxu0 0.0
      %3672 = vmatprep.subr.mxu0 0.0
      %3673 = vmatpush1.msra.mxu0 0.0
      %3674 = vmatprep.subr.mxu0 0.0
      %3675 = vmatpush1.msra.mxu0 0.0
      %3676 = vmatprep.subr.mxu0 0.0
      %3677 = vmatpush1.msra.mxu0 0.0
      %3678 = vmatprep.subr.mxu0 0.0
      %3679 = vmatpush1.msra.mxu0 0.0
      %3680 = vmatprep.subr.mxu0 0.0
      %3681 = vmatpush1.msra.mxu0 0.0
      %3682 = vmatprep.subr.mxu0 0.0
      %3683 = vmatpush1.msra.mxu0 0.0
      %3684 = vmatprep.subr.mxu0 0.0
      %3685 = vmatpush1.msra.mxu0 0.0
      %3686 = vmatprep.subr.mxu0 0.0
      %3687 = vmatpush1.msra.mxu0 0.0
      %3688 = vmatprep.subr.mxu0 0.0
      %3689 = vmatpush1.msra.mxu0 0.0
      %3690 = vmatprep.subr.mxu0 0.0
      %3691 = vmatpush1.msra.mxu0 0.0
      %3692 = vmatprep.subr.mxu0 0.0
      %3693 = vmatpush1.msra.mxu0 0.0
      %3694 = vmatprep.subr.mxu0 0.0
      %3695 = vmatpush1.msra.mxu0 0.0
      %3696 = vmatprep.subr.mxu0 0.0
      %3697 = vmatpush1.msra.mxu0 0.0
      %3698 = vmatprep.subr.mxu0 0.0
      %3699 = vmatpush1.msra.mxu0 0.0
      %3700 = vmatprep.subr.mxu0 0.0
      %3701 = vmatpush1.msra.mxu0 0.0
      %3702 = vmatprep.subr.mxu0 0.0
      %3703 = vmatpush1.msra.mxu0 0.0
      %3704 = vmatprep.subr.mxu0 0.0
      %3705 = vmatpush1.msra.mxu0 0.0
      %3706 = vmatprep.subr.mxu0 0.0
      %3707 = vmatpush1.msra.mxu0 0.0
      %3708 = vmatprep.mubr.f32.mxu0 0.0
      %3709 = vmatmul.mubr.f32.gmra.mrb[0].mxu0 %v3642
      %v3710 = vpop.f32.mrb[0].mxu0
      %v3711 = vadd.f32 %v3640, %v3710
      %v3712 = vpop.f32.mrb[0].mxu0
      %3713 = vdwg.mxu0
      %v3714 = vadd.f32 %v2697, %v3711
      %v3715 = vsel %vm1476, %v3714, 0.0
      %3716 = vadd.xlane.f32.xlu0 %v3715
      %v3717 = vpop.xlane.xlu0 %3716
      %v3718 = vmul.f32 %v3717, %v2485
      %v3719 = vsub.f32 %v3714, %v3718
      %v3720 = vmul.f32 %v3719, %v3719
      %v3721 = vsel %vm1476, %v3720, 0.0
      %3722 = vadd.xlane.f32.xlu0 %v3721
      %v3723 = vpop.xlane.xlu0 %3722
      %v3724 = vmul.f32 %v3723, %v2485
      %v3725 = vadd.f32 %v3724, 1e-05
      %v3726 = vrsqrt.pop %v3725
      %v3727 = vmul.f32 %v3719, %v3726
      %v3728 = vlaneseq
      %v3729 = vshrl.u32 %v3728, 7
      %v3730 = vsub.s32 4, %v3729
      %v3731 = vrot.slane %v2699, %v3730
      %v3732 = vmul.f32 %v3727, %v3731
      %v3733 = vlaneseq
      %v3734 = vshrl.u32 %v3733, 7
      %v3735 = vsub.s32 5, %v3734
      %v3736 = vrot.slane %v2699, %v3735
      %v3737 = vadd.f32 %v3732, %v3736
      %s3738 = scalar_lea.vmem %s8, 32
      %v3739 = vld [vmem:[%s3738] sm:$0xff]
      %v3740 = vld [vmem:[%s3738 + $0x8] sm:$0xff]
      %v3741 = vld [vmem:[%s3738 + $0x10] sm:$0xff]
      %v3742 = vld [vmem:[%s3738 + $0x18] sm:$0xff]
      %v3743 = vlaneseq
      %v3744 = vshrl.u32 %v3743, 7
      %v3745 = vsub.s32 2, %v3744
      %v3746 = vrot.slane %v2699, %v3745
      %v3748 = vsel %vm1476, %v3737, 0
      %3750 = vmatprep.subr.mxu0 0.0
      %3751 = vmatpush1.msra.mxu0 %v3739
      %3752 = vmatprep.subr.mxu0 0.0
      %3753 = vmatpush1.msra.mxu0 %v3740
      %3754 = vmatprep.subr.mxu0 0.0
      %3755 = vmatpush1.msra.mxu0 %v3741
      %3756 = vmatprep.subr.mxu0 0.0
      %3757 = vmatpush1.msra.mxu0 %v3742
      %3758 = vmatprep.subr.mxu0 0.0
      %3759 = vmatpush1.msra.mxu0 0.0
      %3760 = vmatprep.subr.mxu0 0.0
      %3761 = vmatpush1.msra.mxu0 0.0
      %3762 = vmatprep.subr.mxu0 0.0
      %3763 = vmatpush1.msra.mxu0 0.0
      %3764 = vmatprep.subr.mxu0 0.0
      %3765 = vmatpush1.msra.mxu0 0.0
      %3766 = vmatprep.subr.mxu0 0.0
      %3767 = vmatpush1.msra.mxu0 0.0
      %3768 = vmatprep.subr.mxu0 0.0
      %3769 = vmatpush1.msra.mxu0 0.0
      %3770 = vmatprep.subr.mxu0 0.0
      %3771 = vmatpush1.msra.mxu0 0.0
      %3772 = vmatprep.subr.mxu0 0.0
      %3773 = vmatpush1.msra.mxu0 0.0
      %3774 = vmatprep.subr.mxu0 0.0
      %3775 = vmatpush1.msra.mxu0 0.0
      %3776 = vmatprep.subr.mxu0 0.0
      %3777 = vmatpush1.msra.mxu0 0.0
      %3778 = vmatprep.subr.mxu0 0.0
      %3779 = vmatpush1.msra.mxu0 0.0
      %3780 = vmatprep.subr.mxu0 0.0
      %3781 = vmatpush1.msra.mxu0 0.0
      %3782 = vmatprep.subr.mxu0 0.0
      %3783 = vmatpush1.msra.mxu0 0.0
      %3784 = vmatprep.subr.mxu0 0.0
      %3785 = vmatpush1.msra.mxu0 0.0
      %3786 = vmatprep.subr.mxu0 0.0
      %3787 = vmatpush1.msra.mxu0 0.0
      %3788 = vmatprep.subr.mxu0 0.0
      %3789 = vmatpush1.msra.mxu0 0.0
      %3790 = vmatprep.subr.mxu0 0.0
      %3791 = vmatpush1.msra.mxu0 0.0
      %3792 = vmatprep.subr.mxu0 0.0
      %3793 = vmatpush1.msra.mxu0 0.0
      %3794 = vmatprep.subr.mxu0 0.0
      %3795 = vmatpush1.msra.mxu0 0.0
      %3796 = vmatprep.subr.mxu0 0.0
      %3797 = vmatpush1.msra.mxu0 0.0
      %3798 = vmatprep.subr.mxu0 0.0
      %3799 = vmatpush1.msra.mxu0 0.0
      %3800 = vmatprep.subr.mxu0 0.0
      %3801 = vmatpush1.msra.mxu0 0.0
      %3802 = vmatprep.subr.mxu0 0.0
      %3803 = vmatpush1.msra.mxu0 0.0
      %3804 = vmatprep.subr.mxu0 0.0
      %3805 = vmatpush1.msra.mxu0 0.0
      %3806 = vmatprep.subr.mxu0 0.0
      %3807 = vmatpush1.msra.mxu0 0.0
      %3808 = vmatprep.subr.mxu0 0.0
      %3809 = vmatpush1.msra.mxu0 0.0
      %3810 = vmatprep.subr.mxu0 0.0
      %3811 = vmatpush1.msra.mxu0 0.0
      %3812 = vmatprep.subr.mxu0 0.0
      %3813 = vmatpush1.msra.mxu0 0.0
      %3814 = vmatprep.mubr.f32.mxu0 0.0
      %3815 = vmatmul.mubr.f32.gmra.mrb[0].mxu0 %v3748
      %v3816 = vpop.f32.mrb[0].mxu0
      %v3817 = vadd.f32 %v3746, %v3816
      %v3818 = vpop.f32.mrb[0].mxu0
      %3819 = vdwg.mxu0
      %v3820 = vmax.f32 %v3817, 0.0
      %s3821 = scalar_lea.vmem %s9, 64
      %v3822 = vld [vmem:[%s3821] sm:$0xff]
      %v3823 = vld [vmem:[%s3821 + $0x8] sm:$0xff]
      %v3824 = vld [vmem:[%s3821 + $0x10] sm:$0xff]
      %v3825 = vld [vmem:[%s3821 + $0x18] sm:$0xff]
      %v3826 = vld [vmem:[%s3821 + $0x20] sm:$0xff]
      %v3827 = vld [vmem:[%s3821 + $0x28] sm:$0xff]
      %v3828 = vld [vmem:[%s3821 + $0x30] sm:$0xff]
      %v3829 = vld [vmem:[%s3821 + $0x38] sm:$0xff]
      %v3830 = vlaneseq
      %v3831 = vshrl.u32 %v3830, 7
      %v3832 = vsub.s32 3, %v3831
      %v3833 = vrot.slane %v2699, %v3832
      %v3835 = vsel %vm2600, %v3820, 0
      %3837 = vmatprep.subr.mxu0 0.0
      %3838 = vmatpush1.msra.mxu0 %v3822
      %3839 = vmatprep.subr.mxu0 0.0
      %3840 = vmatpush1.msra.mxu0 %v3823
      %3841 = vmatprep.subr.mxu0 0.0
      %3842 = vmatpush1.msra.mxu0 %v3824
      %3843 = vmatprep.subr.mxu0 0.0
      %3844 = vmatpush1.msra.mxu0 %v3825
      %3845 = vmatprep.subr.mxu0 0.0
      %3846 = vmatpush1.msra.mxu0 %v3826
      %3847 = vmatprep.subr.mxu0 0.0
      %3848 = vmatpush1.msra.mxu0 %v3827
      %3849 = vmatprep.subr.mxu0 0.0
      %3850 = vmatpush1.msra.mxu0 %v3828
      %3851 = vmatprep.subr.mxu0 0.0
      %3852 = vmatpush1.msra.mxu0 %v3829
      %3853 = vmatprep.subr.mxu0 0.0
      %3854 = vmatpush1.msra.mxu0 0.0
      %3855 = vmatprep.subr.mxu0 0.0
      %3856 = vmatpush1.msra.mxu0 0.0
      %3857 = vmatprep.subr.mxu0 0.0
      %3858 = vmatpush1.msra.mxu0 0.0
      %3859 = vmatprep.subr.mxu0 0.0
      %3860 = vmatpush1.msra.mxu0 0.0
      %3861 = vmatprep.subr.mxu0 0.0
      %3862 = vmatpush1.msra.mxu0 0.0
      %3863 = vmatprep.subr.mxu0 0.0
      %3864 = vmatpush1.msra.mxu0 0.0
      %3865 = vmatprep.subr.mxu0 0.0
      %3866 = vmatpush1.msra.mxu0 0.0
      %3867 = vmatprep.subr.mxu0 0.0
      %3868 = vmatpush1.msra.mxu0 0.0
      %3869 = vmatprep.subr.mxu0 0.0
      %3870 = vmatpush1.msra.mxu0 0.0
      %3871 = vmatprep.subr.mxu0 0.0
      %3872 = vmatpush1.msra.mxu0 0.0
      %3873 = vmatprep.subr.mxu0 0.0
      %3874 = vmatpush1.msra.mxu0 0.0
      %3875 = vmatprep.subr.mxu0 0.0
      %3876 = vmatpush1.msra.mxu0 0.0
      %3877 = vmatprep.subr.mxu0 0.0
      %3878 = vmatpush1.msra.mxu0 0.0
      %3879 = vmatprep.subr.mxu0 0.0
      %3880 = vmatpush1.msra.mxu0 0.0
      %3881 = vmatprep.subr.mxu0 0.0
      %3882 = vmatpush1.msra.mxu0 0.0
      %3883 = vmatprep.subr.mxu0 0.0
      %3884 = vmatpush1.msra.mxu0 0.0
      %3885 = vmatprep.subr.mxu0 0.0
      %3886 = vmatpush1.msra.mxu0 0.0
      %3887 = vmatprep.subr.mxu0 0.0
      %3888 = vmatpush1.msra.mxu0 0.0
      %3889 = vmatprep.subr.mxu0 0.0
      %3890 = vmatpush1.msra.mxu0 0.0
      %3891 = vmatprep.subr.mxu0 0.0
      %3892 = vmatpush1.msra.mxu0 0.0
      %3893 = vmatprep.subr.mxu0 0.0
      %3894 = vmatpush1.msra.mxu0 0.0
      %3895 = vmatprep.subr.mxu0 0.0
      %3896 = vmatpush1.msra.mxu0 0.0
      %3897 = vmatprep.subr.mxu0 0.0
      %3898 = vmatpush1.msra.mxu0 0.0
      %3899 = vmatprep.subr.mxu0 0.0
      %3900 = vmatpush1.msra.mxu0 0.0
      %3901 = vmatprep.mubr.f32.mxu0 0.0
      %3902 = vmatmul.mubr.f32.gmra.mrb[0].mxu0 %v3835
      %v3903 = vpop.f32.mrb[0].mxu0
      %v3904 = vadd.f32 %v3833, %v3903
      %v3905 = vpop.f32.mrb[0].mxu0
      %3906 = vdwg.mxu0
      %v3907 = vadd.f32 %v3737, %v3904
      %v3908 = vsel %vm1476, %v3907, 0.0
      %3909 = vadd.xlane.f32.xlu0 %v3908
      %v3910 = vpop.xlane.xlu0 %3909
      %v3911 = vmul.f32 %v3910, %v2485
      %v3912 = vsub.f32 %v3907, %v3911
      %v3913 = vmul.f32 %v3912, %v3912
      %v3914 = vsel %vm1476, %v3913, 0.0
      %3915 = vadd.xlane.f32.xlu0 %v3914
      %v3916 = vpop.xlane.xlu0 %3915
      %v3917 = vmul.f32 %v3916, %v2485
      %v3918 = vadd.f32 %v3917, 1e-05
      %v3919 = vrsqrt.pop %v3918
      %v3920 = vmul.f32 %v3912, %v3919
      %v3921 = vlaneseq
      %v3922 = vshrl.u32 %v3921, 7
      %v3923 = vsub.s32 6, %v3922
      %v3924 = vrot.slane %v2699, %v3923
      %v3925 = vmul.f32 %v3920, %v3924
      %v3926 = vlaneseq
      %v3927 = vshrl.u32 %v3926, 7
      %v3928 = vsub.s32 7, %v3927
      %v3929 = vrot.slane %v2699, %v3928
      %v3930 = vadd.f32 %v3925, %v3929
      %v3931 = vld [vmem:[%s11] sm:$0xff]
      %v3932 = vld [vmem:[%s11 + $0x8] sm:$0x3]
      %v3933 = vsel %vm1476, %v3930, 0.0
      %3934 = vadd.xlane.f32.xlu0 %v3933
      %v3935 = vpop.xlane.xlu0 %3934
      %v3936 = vmul.f32 %v3935, %v2485
      %v3937 = vsub.f32 %v3930, %v3936
      %v3938 = vmul.f32 %v3937, %v3937
      %v3939 = vsel %vm1476, %v3938, 0.0
      %3940 = vadd.xlane.f32.xlu0 %v3939
      %v3941 = vpop.xlane.xlu0 %3940
      %v3942 = vmul.f32 %v3941, %v2485
      %v3943 = vadd.f32 %v3942, 1e-05
      %v3944 = vrsqrt.pop %v3943
      %v3945 = vmul.f32 %v3937, %v3944
      %v3946 = vlaneseq
      %v3947 = vshrl.u32 %v3946, 7
      %v3948 = vsub.s32 0, %v3947
      %v3949 = vrot.slane %v3932, %v3948
      %v3950 = vmul.f32 %v3945, %v3949
      %v3951 = vlaneseq
      %v3952 = vshrl.u32 %v3951, 7
      %v3953 = vsub.s32 1, %v3952
      %v3954 = vrot.slane %v3932, %v3953
      %v3955 = vadd.f32 %v3950, %v3954
      %v3956 = vmul.f32 %v3955, %v3931
      %v3957 = vsel %vm1476, %v3956, 0.0
      %3958 = vadd.xlane.f32.xlu0 %v3957
      %v3959 = vpop.xlane.xlu0 %3958
      %v3960 = vld [vmem:[#allocation2] sm:$0x1]
      %v3962 = vlaneseq
      %v3963 = vshrl.u32 %v3962, 7
      %v3964 = vsub.s32 0, %v3963
      %v3965 = vrot.slane %v3960, %v3964
      %v3967 = vadd.f32 %v3959, %v3965
      %vm3968 = vcmask 7168
      %3969 = vst.msk [vmem:[%s440] sm:$0xff] %vm3968, %v3967
      %p3970 = scmp.lt.s32.totalorder %s26, 1
      %s3971 = scalar_select %p3970, %s26, 1
      %s3972 = smul.addr %s3971, 8
      %s3973 = scalar_lea.vmem %s13, %s3972
      // Predicated region
      $region73: #{trimodal_forward.1} parent=71 // pred_check
        %p3974 = pneg %p322
      $region74: #{trimodal_forward.1} parent=71 // pred_check_branch
        %3976 = sbr.rel (%p3974) target = $region76
      $region75: #{trimodal_forward.1} parent=71 // pred_region
        _
      $region76: #{trimodal_forward.1} parent=71 // pred_fallthru
        _
    $region72: #{trimodal_forward.1} parent=5 // pred_fallthru
      _
    %p3977 = scmp.le.s32.totalorder 2, %s21
    // Predicated region
    $region77: #{trimodal_forward.1} parent=5 // pred_check
      %p3978 = pneg %p3977
    $region78: #{trimodal_forward.1} parent=5 // pred_check_branch
      %3980 = sbr.rel (%p3978) target = $region80
    $region79: #{trimodal_forward.1} parent=5 // pred_region
      %s3981 = ssub.s32 %s21, 2
      // Predicated region
      $region81: #{trimodal_forward.1} parent=79 // pred_check
        %p3982 = pneg %p328
      $region82: #{trimodal_forward.1} parent=79 // pred_check_branch
        %3984 = sbr.rel (%p3982) target = $region84
      $region83: #{trimodal_forward.1} parent=79 // pred_region
        %p3985 = scmp.lt.s32.totalorder %s27, 1
        %s3986 = scalar_select %p3985, %s27, 1
        %s3987 = smul.addr %s3986, 8
        %s3988 = scalar_lea.vmem %s13, %s3987
      $region84: #{trimodal_forward.1} parent=79 // pred_fallthru
        _
    $region80: #{trimodal_forward.1} parent=5 // pred_fallthru
      _
  $region6: #{trimodal_forward.1} parent=0 // loop_footer
    %s25 = sadd.s32 1, %s21
  $region7: #{trimodal_forward.1} parent=0 // loop_footer_branch
    %20 = sbr.rel target = $region3
  $region8: #{trimodal_forward.1} parent=0 // loop_exit
    _

</llo_original>
